<compile_context>
chip_gen: v6e
topology: v6e:2x2x1
jax: 0.10.0
libtpu: 0.0.40
codegen_flags: <defaults>
</compile_context>

<pallas_src>
import jax
import jax.numpy as jnp
from jax.experimental import pallas as pl
from jax.experimental.pallas import tpu as pltpu

VMEM = pltpu.MemorySpace.VMEM
BN_EPS = 1e-5
# v7x has 64 MiB VMEM / TensorCore; leave headroom for I/O buffers + scratch.
_COMPILER_PARAMS = pltpu.CompilerParams(vmem_limit_bytes=48 * 1024 * 1024)


def _specs(n):
    return [pl.BlockSpec(memory_space=VMEM) for _ in range(n)]


# --------------------------------------------------------------- kernel 1 ----
# ConvTranspose2d(k=2, s=2) as ONE channel matmul over the batch-folded lanes:
#   out[(di,dj,co), n*P0 + p] = sum_ci W[ci, co, di, dj] * x[ci, n*P0 + p]
# The ConvTranspose bias is dead: g only feeds a 1x1 conv that goes straight
# into training-mode BatchNorm, whose mean subtraction cancels it exactly.
def _up_kernel(x_ref, w_ref, o_ref):
    o_ref[...] = jnp.dot(w_ref[...], x_ref[...],
                         preferred_element_type=jnp.float32).astype(o_ref.dtype)


def conv_transpose2x2(x_nchw, w_iokk):
    # PyTorch ConvTranspose2d weight layout: (Cin, Cout, 2, 2), stride=2, pad=0.
    N, Cin, H, W = x_nchw.shape
    Cout = w_iokk.shape[1]
    P0 = H * W
    w_r = (jnp.transpose(w_iokk, (2, 3, 1, 0))
           .reshape(4 * Cout, Cin).astype(jnp.bfloat16))
    x_r = (jnp.transpose(x_nchw.reshape(N, Cin, P0), (1, 0, 2))
           .reshape(Cin, N * P0).astype(jnp.bfloat16))
    y = pl.pallas_call(
        _up_kernel,
        out_shape=jax.ShapeDtypeStruct((4 * Cout, N * P0), jnp.bfloat16),
        in_specs=_specs(2),
        out_specs=pl.BlockSpec(memory_space=VMEM),
        compiler_params=_COMPILER_PARAMS,
    )(x_r, w_r)
    # (di, dj) -> spatial interleave, kept channel-major: (Cout, N, 2H, 2W).
    y = y.reshape(2, 2, Cout, N, H, W)
    y = jnp.transpose(y, (2, 3, 4, 0, 5, 1))       # (Cout, N, H, di, W, dj)
    return y.reshape(Cout, N, 2 * H, 2 * W)


# --------------------------------------------------------------- kernel 2 ----
def _make_fused_kernel(Wp, NP):
    TAPS = [(dh, dw) for dh in (-1, 0, 1) for dw in (-1, 0, 1)]

    def _bn(x):
        # training-mode BatchNorm2d: per-channel stats over (N, H, W) == lanes.
        inv_cnt = 1.0 / float(x.shape[1])
        mean = jnp.sum(x, axis=1, keepdims=True) * inv_cnt
        d = x - mean
        var = jnp.sum(d * d, axis=1, keepdims=True) * inv_cnt
        return d * jax.lax.rsqrt(var + BN_EPS)

    def kernel(g_ref, s_ref, temb_ref, wg_ref, wx_ref, wp_ref,
               w1a_ref, w1b_ref, w2_ref, m_ref, o_ref):
        masks = m_ref[...]                                   # (9, NP) f32

        def conv3x3(pairs):
            # 3x3 conv (padding=1) as 9 accumulating matmuls over lane-rolled
            # taps; no im2col / pad scratch.  Boundary and cross-image wraps
            # are multiplied by a zero mask, so semantics match zero padding.
            acc = None
            for x_f, w_taps in pairs:
                for t, (dh, dw) in enumerate(TAPS):
                    off = dh * Wp + dw
                    if off == 0:
                        tap = x_f                            # centre tap: mask==1
                    else:
                        tap = (pltpu.roll(x_f, (-off) % NP, axis=1)
                               * masks[t:t + 1, :])
                    c = jnp.dot(w_taps[t], tap.astype(jnp.bfloat16),
                                preferred_element_type=jnp.float32)
                    acc = c if acc is None else acc + c
            return acc                                       # (Cout, NP) f32

        skip = s_ref[...]                                    # (K, NP) f32

        # ---- attention gate: skip * sigmoid(BN(psi(relu(BN(Wg g)+BN(Wx s))))) ----
        g1 = jnp.dot(wg_ref[...], g_ref[...], preferred_element_type=jnp.float32)
        x1 = jnp.dot(wx_ref[...], skip.astype(jnp.bfloat16),
                     preferred_element_type=jnp.float32)
        a = jnp.maximum(_bn(g1) + _bn(x1), 0.0)              # (F_int, NP)
        # psi has a single output channel -> VPU multiply + sublane reduce.
        psi = jnp.sum(a * wp_ref[...], axis=0, keepdims=True)        # (1, NP)
        psi = pl.reciprocal(1.0 + jnp.exp(-_bn(psi)), approx=True)   # sigmoid
        att = skip * psi                                     # (K, NP) f32

        # ---- conv1 on concat([att, skip], C): weights split, no concat buffer ----
        y1 = jnp.maximum(_bn(conv3x3([(att, w1a_ref), (skip, w1b_ref)])), 0.0)
        y1 = y1 + temb_ref[...]                              # + time embedding

        # ---- conv2 -> BN -> ReLU ----
        o_ref[...] = jnp.maximum(_bn(conv3x3([(y1, w2_ref)])), 0.0)

    return kernel


def _fused_att_convblock(g_cnhw, skip_nchw, t, p):
    K, N, Hp, Wp = g_cnhw.shape                    # K == out_c
    P = Hp * Wp
    NP = N * P

    # Channel-major with the batch folded into the lane axis: (C, N*H*W).
    g = g_cnhw.reshape(K, NP)                                       # bf16
    skip_c = jnp.transpose(skip_nchw, (1, 0, 2, 3)).reshape(K, NP)  # f32

    # Time MLP hoisted to XLA (negligible FLOPs) and pre-broadcast to lanes.
    temb = t @ p["t_w"].T + p["t_b"]                                # (N, K)
    temb = jnp.broadcast_to(temb.T[:, :, None], (K, N, P)).reshape(K, NP)

    # 1x1 / 3x3 conv weights reshaped and pre-cast to bf16 (tiny XLA work).
    wg = p["att_wg"][:, :, 0, 0].astype(jnp.bfloat16)               # (F_int, K)
    wx = p["att_wx"][:, :, 0, 0].astype(jnp.bfloat16)               # (F_int, K)
    wpsi = p["att_wpsi"][0, :, 0, 0].reshape(-1, 1)                 # (F_int, 1)
    w1 = (jnp.transpose(p["c1_w"], (2, 3, 0, 1))
          .reshape(9, K, 2 * K).astype(jnp.bfloat16))               # tap-major
    w1a, w1b = w1[:, :, :K], w1[:, :, K:]                           # att / skip
    w2 = (jnp.transpose(p["c2_w"], (2, 3, 0, 1))
          .reshape(9, K, K).astype(jnp.bfloat16))
    # NOTE: att_bg / att_bx / att_bpsi / c1_b / c2_b / up_b feed straight into
    # training-mode BatchNorm; the per-channel mean subtraction cancels them
    # exactly, so they are deliberately not passed to the kernel (dead work).

    # Per-tap boundary masks over the flattened (n, h, w) lane index; zero
    # wherever a rolled tap would read outside its own image (including wraps
    # across neighbouring batch images on the folded lane axis).
    lidx = jnp.arange(P, dtype=jnp.int32)
    hh, ww = lidx // Wp, lidx % Wp
    rows = []
    for dh in (-1, 0, 1):
        for dw in (-1, 0, 1):
            rows.append((hh + dh >= 0) & (hh + dh < Hp) &
                        (ww + dw >= 0) & (ww + dw < Wp))
    masks = jnp.tile(jnp.stack(rows, 0).astype(jnp.float32), (1, N))  # (9, NP)

    kernel = _make_fused_kernel(Wp, NP)
    out = pl.pallas_call(
        kernel,
        out_shape=jax.ShapeDtypeStruct((K, NP), jnp.float32),
        in_specs=_specs(10),
        out_specs=pl.BlockSpec(memory_space=VMEM),
        compiler_params=_COMPILER_PARAMS,
    )(g, skip_c, temb, wg, wx, wpsi, w1a, w1b, w2, masks)
    return jnp.transpose(out.reshape(K, N, Hp, Wp), (1, 0, 2, 3))


def decoder_block(inputs_nchw, skip_nchw, t, p):
    g = conv_transpose2x2(inputs_nchw, p["up_w"])   # (out_c, N, 2H, 2W) bf16
    return _fused_att_convblock(g, skip_nchw, t, p)


# ------------------------------------------------------------------ params ----
def init_params(key, in_c, out_c, time_emb_dim):
    f_int = out_c // 2
    ks = jax.random.split(key, 14)
    s = 0.1
    n = lambda k, shape: s * jax.random.normal(k, shape, jnp.float32)
    return {
        # ConvTranspose2d(in_c, out_c, 2, stride=2)
        "up_w": n(ks[0], (in_c, out_c, 2, 2)),
        "up_b": n(ks[1], (out_c,)),          # cancelled by train-mode BN (unused)
        # AttentionBlock(F_g=out_c, F_l=out_c, F_int=out_c//2)
        "att_wg": n(ks[2], (f_int, out_c, 1, 1)),
        "att_bg": n(ks[3], (f_int,)),        # cancelled by train-mode BN (unused)
        "att_wx": n(ks[4], (f_int, out_c, 1, 1)),
        "att_bx": n(ks[5], (f_int,)),        # cancelled by train-mode BN (unused)
        "att_wpsi": n(ks[6], (1, f_int, 1, 1)),
        "att_bpsi": n(ks[7], (1,)),          # cancelled by train-mode BN (unused)
        # ConvBlock(2*out_c, out_c, time_emb_dim)
        "t_w": n(ks[8], (out_c, time_emb_dim)),
        "t_b": n(ks[9], (out_c,)),
        "c1_w": n(ks[10], (out_c, 2 * out_c, 3, 3)),
        "c1_b": n(ks[11], (out_c,)),         # cancelled by train-mode BN (unused)
        "c2_w": n(ks[12], (out_c, out_c, 3, 3)),
        "c2_b": n(ks[13], (out_c,)),         # cancelled by train-mode BN (unused)
    }


# -------------------------------------------------------------------- main ----
if __name__ == "__main__":
    in_c, out_c, temb_dim = 8, 4, 32
    N, H, W = 2, 8, 8

    key = jax.random.PRNGKey(0)
    k1, k2, k3, kp = jax.random.split(key, 4)
    inputs = jax.random.normal(k1, (N, in_c, H, W), jnp.float32)
    skip = jax.random.normal(k2, (N, out_c, 2 * H, 2 * W), jnp.float32)
    t = jax.random.normal(k3, (N, temb_dim), jnp.float32)
    params = init_params(kp, in_c, out_c, temb_dim)

    out = jax.jit(lambda a, b, c: decoder_block(a, b, c, params))(inputs, skip, t)
    jax.block_until_ready(out)

    assert out.shape == (N, out_c, 2 * H, 2 * W), out.shape
    assert out.dtype == jnp.float32
    assert bool(jnp.all(jnp.isfinite(out)))
    print("KERNEL_OK")
</pallas_src>

<mosaic_0001>
module attributes {stable_mosaic.version = 11 : i64} {
  func.func @_up_kernel(%arg0: memref<8x128xbf16, #tpu.memory_space<vmem>>, %arg1: memref<16x8xbf16, #tpu.memory_space<vmem>>, %arg2: memref<16x128xbf16, #tpu.memory_space<vmem>>) attributes {dimension_semantics = [], scalar_prefetch = 0 : i64, scratch_operands = 0 : i64, tpu.core_type = #tpu.core_type<tc>} {
    %c0 = arith.constant 0 : index
    %c0_0 = arith.constant 0 : index
    %0 = vector.load %arg1[%c0, %c0_0] : memref<16x8xbf16, #tpu.memory_space<vmem>>, vector<16x8xbf16>
    %c0_1 = arith.constant 0 : index
    %c0_2 = arith.constant 0 : index
    %1 = vector.load %arg0[%c0_1, %c0_2] : memref<8x128xbf16, #tpu.memory_space<vmem>>, vector<8x128xbf16>
    %cst = arith.constant dense<0.000000e+00> : vector<16x128xf32>
    %2 = tpu.matmul %0, %1, %cst {dimension_numbers = #tpu.dot_dimension_numbers<[1], [0], [0], [1], [0, 0, 1, 1], [], []>} : vector<16x8xbf16>, vector<8x128xbf16>, vector<16x128xf32> -> vector<16x128xf32>
    %3 = arith.truncf %2 : vector<16x128xf32> to vector<16x128xbf16>
    %c0_3 = arith.constant 0 : index
    %c0_4 = arith.constant 0 : index
    %4 = vector.load %arg2[%c0_3, %c0_4] : memref<16x128xbf16, #tpu.memory_space<vmem>>, vector<16x128xbf16>
    tpu.vector_store %arg2[%c0_3, %c0_4], %3 {strides = array<i32>} : memref<16x128xbf16, #tpu.memory_space<vmem>>, vector<16x128xbf16>,
    return
  }
}

module attributes {stable_mosaic.version = 11 : i64} {
  func.func @kernel(%arg0: memref<4x512xbf16, #tpu.memory_space<vmem>>, %arg1: memref<4x512xf32, #tpu.memory_space<vmem>>, %arg2: memref<4x512xf32, #tpu.memory_space<vmem>>, %arg3: memref<2x4xbf16, #tpu.memory_space<vmem>>, %arg4: memref<2x4xbf16, #tpu.memory_space<vmem>>, %arg5: memref<2x1xf32, #tpu.memory_space<vmem>>, %arg6: memref<9x4x4xbf16, #tpu.memory_space<vmem>>, %arg7: memref<9x4x4xbf16, #tpu.memory_space<vmem>>, %arg8: memref<9x4x4xbf16, #tpu.memory_space<vmem>>, %arg9: memref<9x512xf32, #tpu.memory_space<vmem>>, %arg10: memref<4x512xf32, #tpu.memory_space<vmem>>) attributes {dimension_semantics = [], scalar_prefetch = 0 : i64, scratch_operands = 0 : i64, tpu.core_type = #tpu.core_type<tc>} {
    %c0 = arith.constant 0 : index
    %c0_0 = arith.constant 0 : index
    %0 = vector.load %arg9[%c0, %c0_0] : memref<9x512xf32, #tpu.memory_space<vmem>>, vector<9x512xf32>
    %c0_1 = arith.constant 0 : index
    %c0_2 = arith.constant 0 : index
    %1 = vector.load %arg1[%c0_1, %c0_2] : memref<4x512xf32, #tpu.memory_space<vmem>>, vector<4x512xf32>
    %c0_3 = arith.constant 0 : index
    %c0_4 = arith.constant 0 : index
    %2 = vector.load %arg3[%c0_3, %c0_4] : memref<2x4xbf16, #tpu.memory_space<vmem>>, vector<2x4xbf16>
    %c0_5 = arith.constant 0 : index
    %c0_6 = arith.constant 0 : index
    %3 = vector.load %arg0[%c0_5, %c0_6] : memref<4x512xbf16, #tpu.memory_space<vmem>>, vector<4x512xbf16>
    %cst = arith.constant dense<0.000000e+00> : vector<2x512xf32>
    %4 = tpu.matmul %2, %3, %cst {dimension_numbers = #tpu.dot_dimension_numbers<[1], [0], [0], [1], [0, 0, 1, 1], [], []>} : vector<2x4xbf16>, vector<4x512xbf16>, vector<2x512xf32> -> vector<2x512xf32>
    %c0_7 = arith.constant 0 : index
    %c0_8 = arith.constant 0 : index
    %5 = vector.load %arg4[%c0_7, %c0_8] : memref<2x4xbf16, #tpu.memory_space<vmem>>, vector<2x4xbf16>
    %6 = arith.truncf %1 : vector<4x512xf32> to vector<4x512xbf16>
    %cst_9 = arith.constant dense<0.000000e+00> : vector<2x512xf32>
    %7 = tpu.matmul %5, %6, %cst_9 {dimension_numbers = #tpu.dot_dimension_numbers<[1], [0], [0], [1], [0, 0, 1, 1], [], []>} : vector<2x4xbf16>, vector<4x512xbf16>, vector<2x512xf32> -> vector<2x512xf32>
    %cst_10 = arith.constant dense<0.000000e+00> : vector<2xf32>
    %8 = vector.multi_reduction <add>, %4, %cst_10 [1] : vector<2x512xf32> to vector<2xf32>
    %9 = vector.shape_cast %8 : vector<2xf32> to vector<2x1xf32>
    %cst_11 = arith.constant 0.001953125 : f32
    %10 = vector.broadcast %cst_11 : f32 to vector<2x1xf32>
    %11 = arith.mulf %9, %10 : vector<2x1xf32>
    %12 = vector.broadcast %11 : vector<2x1xf32> to vector<2x512xf32>
    %13 = arith.subf %4, %12 : vector<2x512xf32>
    %14 = arith.mulf %13, %13 : vector<2x512xf32>
    %cst_12 = arith.constant dense<0.000000e+00> : vector<2xf32>
    %15 = vector.multi_reduction <add>, %14, %cst_12 [1] : vector<2x512xf32> to vector<2xf32>
    %16 = vector.shape_cast %15 : vector<2xf32> to vector<2x1xf32>
    %cst_13 = arith.constant 0.001953125 : f32
    %17 = vector.broadcast %cst_13 : f32 to vector<2x1xf32>
    %18 = arith.mulf %16, %17 : vector<2x1xf32>
    %cst_14 = arith.constant 9.99999974E-6 : f32
    %19 = vector.broadcast %cst_14 : f32 to vector<2x1xf32>
    %20 = arith.addf %18, %19 : vector<2x1xf32>
    %21 = math.rsqrt %20 : vector<2x1xf32>
    %22 = vector.broadcast %21 : vector<2x1xf32> to vector<2x512xf32>
    %23 = arith.mulf %13, %22 : vector<2x512xf32>
    %cst_15 = arith.constant dense<0.000000e+00> : vector<2xf32>
    %24 = vector.multi_reduction <add>, %7, %cst_15 [1] : vector<2x512xf32> to vector<2xf32>
    %25 = vector.shape_cast %24 : vector<2xf32> to vector<2x1xf32>
    %cst_16 = arith.constant 0.001953125 : f32
    %26 = vector.broadcast %cst_16 : f32 to vector<2x1xf32>
    %27 = arith.mulf %25, %26 : vector<2x1xf32>
    %28 = vector.broadcast %27 : vector<2x1xf32> to vector<2x512xf32>
    %29 = arith.subf %7, %28 : vector<2x512xf32>
    %30 = arith.mulf %29, %29 : vector<2x512xf32>
    %cst_17 = arith.constant dense<0.000000e+00> : vector<2xf32>
    %31 = vector.multi_reduction <add>, %30, %cst_17 [1] : vector<2x512xf32> to vector<2xf32>
    %32 = vector.shape_cast %31 : vector<2xf32> to vector<2x1xf32>
    %cst_18 = arith.constant 0.001953125 : f32
    %33 = vector.broadcast %cst_18 : f32 to vector<2x1xf32>
    %34 = arith.mulf %32, %33 : vector<2x1xf32>
    %cst_19 = arith.constant 9.99999974E-6 : f32
    %35 = vector.broadcast %cst_19 : f32 to vector<2x1xf32>
    %36 = arith.addf %34, %35 : vector<2x1xf32>
    %37 = math.rsqrt %36 : vector<2x1xf32>
    %38 = vector.broadcast %37 : vector<2x1xf32> to vector<2x512xf32>
    %39 = arith.mulf %29, %38 : vector<2x512xf32>
    %40 = arith.addf %23, %39 : vector<2x512xf32>
    %cst_20 = arith.constant 0.000000e+00 : f32
    %41 = vector.broadcast %cst_20 : f32 to vector<2x512xf32>
    %42 = arith.maximumf %40, %41 : vector<2x512xf32>
    %c0_21 = arith.constant 0 : index
    %c0_22 = arith.constant 0 : index
    %43 = vector.load %arg5[%c0_21, %c0_22] : memref<2x1xf32, #tpu.memory_space<vmem>>, vector<2x1xf32>
    %44 = vector.broadcast %43 : vector<2x1xf32> to vector<2x512xf32>
    %45 = arith.mulf %42, %44 : vector<2x512xf32>
    %cst_23 = arith.constant dense<0.000000e+00> : vector<512xf32>
    %46 = vector.multi_reduction <add>, %45, %cst_23 [0] : vector<2x512xf32> to vector<512xf32>
    %47 = vector.shape_cast %46 : vector<512xf32> to vector<1x512xf32>
    %cst_24 = arith.constant dense<0.000000e+00> : vector<1xf32>
    %48 = vector.multi_reduction <add>, %47, %cst_24 [1] : vector<1x512xf32> to vector<1xf32>
    %49 = vector.shape_cast %48 : vector<1xf32> to vector<1x1xf32>
    %cst_25 = arith.constant 0.001953125 : f32
    %50 = vector.broadcast %cst_25 : f32 to vector<1x1xf32>
    %51 = arith.mulf %49, %50 : vector<1x1xf32>
    %52 = vector.broadcast %51 : vector<1x1xf32> to vector<1x512xf32>
    %53 = arith.subf %47, %52 : vector<1x512xf32>
    %54 = arith.mulf %53, %53 : vector<1x512xf32>
    %cst_26 = arith.constant dense<0.000000e+00> : vector<1xf32>
    %55 = vector.multi_reduction <add>, %54, %cst_26 [1] : vector<1x512xf32> to vector<1xf32>
    %56 = vector.shape_cast %55 : vector<1xf32> to vector<1x1xf32>
    %cst_27 = arith.constant 0.001953125 : f32
    %57 = vector.broadcast %cst_27 : f32 to vector<1x1xf32>
    %58 = arith.mulf %56, %57 : vector<1x1xf32>
    %cst_28 = arith.constant 9.99999974E-6 : f32
    %59 = vector.broadcast %cst_28 : f32 to vector<1x1xf32>
    %60 = arith.addf %58, %59 : vector<1x1xf32>
    %61 = math.rsqrt %60 : vector<1x1xf32>
    %62 = vector.broadcast %61 : vector<1x1xf32> to vector<1x512xf32>
    %63 = arith.mulf %53, %62 : vector<1x512xf32>
    %cst_29 = arith.constant 0.000000e+00 : f32
    %64 = vector.broadcast %cst_29 : f32 to vector<1x512xf32>
    %65 = arith.subf %64, %63 : vector<1x512xf32>
    %66 = math.exp %65 : vector<1x512xf32>
    %cst_30 = arith.constant 1.000000e+00 : f32
    %67 = vector.broadcast %cst_30 : f32 to vector<1x512xf32>
    %68 = arith.addf %67, %66 : vector<1x512xf32>
    %69 = tpu.reciprocal %68 {approx = true} : vector<1x512xf32> -> vector<1x512xf32>
    %70 = vector.broadcast %69 : vector<1x512xf32> to vector<4x512xf32>
    %71 = arith.mulf %1, %70 : vector<4x512xf32>
    %c17_i32 = arith.constant 17 : i32
    %72 = tpu.dynamic_rotate %71 by %c17_i32 dim 1 : vector<4x512xf32>, i32 -> vector<4x512xf32>
    %73 = vector.extract_strided_slice %0 {offsets = [0, 0], sizes = [1, 512], strides = [1, 1]} : vector<9x512xf32> to vector<1x512xf32>
    %74 = vector.broadcast %73 : vector<1x512xf32> to vector<4x512xf32>
    %75 = arith.mulf %72, %74 : vector<4x512xf32>
    %c0_31 = arith.constant 0 : index
    %c0_32 = arith.constant 0 : index
    %c0_33 = arith.constant 0 : index
    %76 = vector.load %arg6[%c0_31, %c0_32, %c0_33] : memref<9x4x4xbf16, #tpu.memory_space<vmem>>, vector<1x4x4xbf16>
    %77 = vector.shape_cast %76 : vector<1x4x4xbf16> to vector<4x4xbf16>
    %78 = arith.truncf %75 : vector<4x512xf32> to vector<4x512xbf16>
    %cst_34 = arith.constant dense<0.000000e+00> : vector<4x512xf32>
    %79 = tpu.matmul %77, %78, %cst_34 {dimension_numbers = #tpu.dot_dimension_numbers<[1], [0], [0], [1], [0, 0, 1, 1], [], []>} : vector<4x4xbf16>, vector<4x512xbf16>, vector<4x512xf32> -> vector<4x512xf32>
    %c16_i32 = arith.constant 16 : i32
    %80 = tpu.dynamic_rotate %71 by %c16_i32 dim 1 : vector<4x512xf32>, i32 -> vector<4x512xf32>
    %81 = vector.extract_strided_slice %0 {offsets = [1, 0], sizes = [1, 512], strides = [1, 1]} : vector<9x512xf32> to vector<1x512xf32>
    %82 = vector.broadcast %81 : vector<1x512xf32> to vector<4x512xf32>
    %83 = arith.mulf %80, %82 : vector<4x512xf32>
    %c1 = arith.constant 1 : index
    %c0_35 = arith.constant 0 : index
    %c0_36 = arith.constant 0 : index
    %84 = vector.load %arg6[%c1, %c0_35, %c0_36] : memref<9x4x4xbf16, #tpu.memory_space<vmem>>, vector<1x4x4xbf16>
    %85 = vector.shape_cast %84 : vector<1x4x4xbf16> to vector<4x4xbf16>
    %86 = arith.truncf %83 : vector<4x512xf32> to vector<4x512xbf16>
    %cst_37 = arith.constant dense<0.000000e+00> : vector<4x512xf32>
    %87 = tpu.matmul %85, %86, %cst_37 {dimension_numbers = #tpu.dot_dimension_numbers<[1], [0], [0], [1], [0, 0, 1, 1], [], []>} : vector<4x4xbf16>, vector<4x512xbf16>, vector<4x512xf32> -> vector<4x512xf32>
    %88 = arith.addf %79, %87 : vector<4x512xf32>
    %c15_i32 = arith.constant 15 : i32
    %89 = tpu.dynamic_rotate %71 by %c15_i32 dim 1 : vector<4x512xf32>, i32 -> vector<4x512xf32>
    %90 = vector.extract_strided_slice %0 {offsets = [2, 0], sizes = [1, 512], strides = [1, 1]} : vector<9x512xf32> to vector<1x512xf32>
    %91 = vector.broadcast %90 : vector<1x512xf32> to vector<4x512xf32>
    %92 = arith.mulf %89, %91 : vector<4x512xf32>
    %c2 = arith.constant 2 : index
    %c0_38 = arith.constant 0 : index
    %c0_39 = arith.constant 0 : index
    %93 = vector.load %arg6[%c2, %c0_38, %c0_39] : memref<9x4x4xbf16, #tpu.memory_space<vmem>>, vector<1x4x4xbf16>
    %94 = vector.shape_cast %93 : vector<1x4x4xbf16> to vector<4x4xbf16>
    %95 = arith.truncf %92 : vector<4x512xf32> to vector<4x512xbf16>
    %cst_40 = arith.constant dense<0.000000e+00> : vector<4x512xf32>
    %96 = tpu.matmul %94, %95, %cst_40 {dimension_numbers = #tpu.dot_dimension_numbers<[1], [0], [0], [1], [0, 0, 1, 1], [], []>} : vector<4x4xbf16>, vector<4x512xbf16>, vector<4x512xf32> -> vector<4x512xf32>
    %97 = arith.addf %88, %96 : vector<4x512xf32>
    %c1_i32 = arith.constant 1 : i32
    %98 = tpu.dynamic_rotate %71 by %c1_i32 dim 1 : vector<4x512xf32>, i32 -> vector<4x512xf32>
    %99 = vector.extract_strided_slice %0 {offsets = [3, 0], sizes = [1, 512], strides = [1, 1]} : vector<9x512xf32> to vector<1x512xf32>
    %100 = vector.broadcast %99 : vector<1x512xf32> to vector<4x512xf32>
    %101 = arith.mulf %98, %100 : vector<4x512xf32>
    %c3 = arith.constant 3 : index
    %c0_41 = arith.constant 0 : index
    %c0_42 = arith.constant 0 : index
    %102 = vector.load %arg6[%c3, %c0_41, %c0_42] : memref<9x4x4xbf16, #tpu.memory_space<vmem>>, vector<1x4x4xbf16>
    %103 = vector.shape_cast %102 : vector<1x4x4xbf16> to vector<4x4xbf16>
    %104 = arith.truncf %101 : vector<4x512xf32> to vector<4x512xbf16>
    %cst_43 = arith.constant dense<0.000000e+00> : vector<4x512xf32>
    %105 = tpu.matmul %103, %104, %cst_43 {dimension_numbers = #tpu.dot_dimension_numbers<[1], [0], [0], [1], [0, 0, 1, 1], [], []>} : vector<4x4xbf16>, vector<4x512xbf16>, vector<4x512xf32> -> vector<4x512xf32>
    %106 = arith.addf %97, %105 : vector<4x512xf32>
    %c4 = arith.constant 4 : index
    %c0_44 = arith.constant 0 : index
    %c0_45 = arith.constant 0 : index
    %107 = vector.load %arg6[%c4, %c0_44, %c0_45] : memref<9x4x4xbf16, #tpu.memory_space<vmem>>, vector<1x4x4xbf16>
    %108 = vector.shape_cast %107 : vector<1x4x4xbf16> to vector<4x4xbf16>
    %109 = arith.truncf %71 : vector<4x512xf32> to vector<4x512xbf16>
    %cst_46 = arith.constant dense<0.000000e+00> : vector<4x512xf32>
    %110 = tpu.matmul %108, %109, %cst_46 {dimension_numbers = #tpu.dot_dimension_numbers<[1], [0], [0], [1], [0, 0, 1, 1], [], []>} : vector<4x4xbf16>, vector<4x512xbf16>, vector<4x512xf32> -> vector<4x512xf32>
    %111 = arith.addf %106, %110 : vector<4x512xf32>
    %c511_i32 = arith.constant 511 : i32
    %112 = tpu.dynamic_rotate %71 by %c511_i32 dim 1 : vector<4x512xf32>, i32 -> vector<4x512xf32>
    %113 = vector.extract_strided_slice %0 {offsets = [5, 0], sizes = [1, 512], strides = [1, 1]} : vector<9x512xf32> to vector<1x512xf32>
    %114 = vector.broadcast %113 : vector<1x512xf32> to vector<4x512xf32>
    %115 = arith.mulf %112, %114 : vector<4x512xf32>
    %c5 = arith.constant 5 : index
    %c0_47 = arith.constant 0 : index
    %c0_48 = arith.constant 0 : index
    %116 = vector.load %arg6[%c5, %c0_47, %c0_48] : memref<9x4x4xbf16, #tpu.memory_space<vmem>>, vector<1x4x4xbf16>
    %117 = vector.shape_cast %116 : vector<1x4x4xbf16> to vector<4x4xbf16>
    %118 = arith.truncf %115 : vector<4x512xf32> to vector<4x512xbf16>
    %cst_49 = arith.constant dense<0.000000e+00> : vector<4x512xf32>
    %119 = tpu.matmul %117, %118, %cst_49 {dimension_numbers = #tpu.dot_dimension_numbers<[1], [0], [0], [1], [0, 0, 1, 1], [], []>} : vector<4x4xbf16>, vector<4x512xbf16>, vector<4x512xf32> -> vector<4x512xf32>
    %120 = arith.addf %111, %119 : vector<4x512xf32>
    %c497_i32 = arith.constant 497 : i32
    %121 = tpu.dynamic_rotate %71 by %c497_i32 dim 1 : vector<4x512xf32>, i32 -> vector<4x512xf32>
    %122 = vector.extract_strided_slice %0 {offsets = [6, 0], sizes = [1, 512], strides = [1, 1]} : vector<9x512xf32> to vector<1x512xf32>
    %123 = vector.broadcast %122 : vector<1x512xf32> to vector<4x512xf32>
    %124 = arith.mulf %121, %123 : vector<4x512xf32>
    %c6 = arith.constant 6 : index
    %c0_50 = arith.constant 0 : index
    %c0_51 = arith.constant 0 : index
    %125 = vector.load %arg6[%c6, %c0_50, %c0_51] : memref<9x4x4xbf16, #tpu.memory_space<vmem>>, vector<1x4x4xbf16>
    %126 = vector.shape_cast %125 : vector<1x4x4xbf16> to vector<4x4xbf16>
    %127 = arith.truncf %124 : vector<4x512xf32> to vector<4x512xbf16>
    %cst_52 = arith.constant dense<0.000000e+00> : vector<4x512xf32>
    %128 = tpu.matmul %126, %127, %cst_52 {dimension_numbers = #tpu.dot_dimension_numbers<[1], [0], [0], [1], [0, 0, 1, 1], [], []>} : vector<4x4xbf16>, vector<4x512xbf16>, vector<4x512xf32> -> vector<4x512xf32>
    %129 = arith.addf %120, %128 : vector<4x512xf32>
    %c496_i32 = arith.constant 496 : i32
    %130 = tpu.dynamic_rotate %71 by %c496_i32 dim 1 : vector<4x512xf32>, i32 -> vector<4x512xf32>
    %131 = vector.extract_strided_slice %0 {offsets = [7, 0], sizes = [1, 512], strides = [1, 1]} : vector<9x512xf32> to vector<1x512xf32>
    %132 = vector.broadcast %131 : vector<1x512xf32> to vector<4x512xf32>
    %133 = arith.mulf %130, %132 : vector<4x512xf32>
    %c7 = arith.constant 7 : index
    %c0_53 = arith.constant 0 : index
    %c0_54 = arith.constant 0 : index
    %134 = vector.load %arg6[%c7, %c0_53, %c0_54] : memref<9x4x4xbf16, #tpu.memory_space<vmem>>, vector<1x4x4xbf16>
    %135 = vector.shape_cast %134 : vector<1x4x4xbf16> to vector<4x4xbf16>
    %136 = arith.truncf %133 : vector<4x512xf32> to vector<4x512xbf16>
    %cst_55 = arith.constant dense<0.000000e+00> : vector<4x512xf32>
    %137 = tpu.matmul %135, %136, %cst_55 {dimension_numbers = #tpu.dot_dimension_numbers<[1], [0], [0], [1], [0, 0, 1, 1], [], []>} : vector<4x4xbf16>, vector<4x512xbf16>, vector<4x512xf32> -> vector<4x512xf32>
    %138 = arith.addf %129, %137 : vector<4x512xf32>
    %c495_i32 = arith.constant 495 : i32
    %139 = tpu.dynamic_rotate %71 by %c495_i32 dim 1 : vector<4x512xf32>, i32 -> vector<4x512xf32>
    %140 = vector.extract_strided_slice %0 {offsets = [8, 0], sizes = [1, 512], strides = [1, 1]} : vector<9x512xf32> to vector<1x512xf32>
    %141 = vector.broadcast %140 : vector<1x512xf32> to vector<4x512xf32>
    %142 = arith.mulf %139, %141 : vector<4x512xf32>
    %c8 = arith.constant 8 : index
    %c0_56 = arith.constant 0 : index
    %c0_57 = arith.constant 0 : index
    %143 = vector.load %arg6[%c8, %c0_56, %c0_57] : memref<9x4x4xbf16, #tpu.memory_space<vmem>>, vector<1x4x4xbf16>
    %144 = vector.shape_cast %143 : vector<1x4x4xbf16> to vector<4x4xbf16>
    %145 = arith.truncf %142 : vector<4x512xf32> to vector<4x512xbf16>
    %cst_58 = arith.constant dense<0.000000e+00> : vector<4x512xf32>
    %146 = tpu.matmul %144, %145, %cst_58 {dimension_numbers = #tpu.dot_dimension_numbers<[1], [0], [0], [1], [0, 0, 1, 1], [], []>} : vector<4x4xbf16>, vector<4x512xbf16>, vector<4x512xf32> -> vector<4x512xf32>
    %147 = arith.addf %138, %146 : vector<4x512xf32>
    %c17_i32_59 = arith.constant 17 : i32
    %148 = tpu.dynamic_rotate %1 by %c17_i32_59 dim 1 : vector<4x512xf32>, i32 -> vector<4x512xf32>
    %149 = vector.extract_strided_slice %0 {offsets = [0, 0], sizes = [1, 512], strides = [1, 1]} : vector<9x512xf32> to vector<1x512xf32>
    %150 = vector.broadcast %149 : vector<1x512xf32> to vector<4x512xf32>
    %151 = arith.mulf %148, %150 : vector<4x512xf32>
    %c0_60 = arith.constant 0 : index
    %c0_61 = arith.constant 0 : index
    %c0_62 = arith.constant 0 : index
    %152 = vector.load %arg7[%c0_60, %c0_61, %c0_62] : memref<9x4x4xbf16, #tpu.memory_space<vmem>>, vector<1x4x4xbf16>
    %153 = vector.shape_cast %152 : vector<1x4x4xbf16> to vector<4x4xbf16>
    %154 = arith.truncf %151 : vector<4x512xf32> to vector<4x512xbf16>
    %cst_63 = arith.constant dense<0.000000e+00> : vector<4x512xf32>
    %155 = tpu.matmul %153, %154, %cst_63 {dimension_numbers = #tpu.dot_dimension_numbers<[1], [0], [0], [1], [0, 0, 1, 1], [], []>} : vector<4x4xbf16>, vector<4x512xbf16>, vector<4x512xf32> -> vector<4x512xf32>
    %156 = arith.addf %147, %155 : vector<4x512xf32>
    %c16_i32_64 = arith.constant 16 : i32
    %157 = tpu.dynamic_rotate %1 by %c16_i32_64 dim 1 : vector<4x512xf32>, i32 -> vector<4x512xf32>
    %158 = vector.extract_strided_slice %0 {offsets = [1, 0], sizes = [1, 512], strides = [1, 1]} : vector<9x512xf32> to vector<1x512xf32>
    %159 = vector.broadcast %158 : vector<1x512xf32> to vector<4x512xf32>
    %160 = arith.mulf %157, %159 : vector<4x512xf32>
    %c1_65 = arith.constant 1 : index
    %c0_66 = arith.constant 0 : index
    %c0_67 = arith.constant 0 : index
    %161 = vector.load %arg7[%c1_65, %c0_66, %c0_67] : memref<9x4x4xbf16, #tpu.memory_space<vmem>>, vector<1x4x4xbf16>
    %162 = vector.shape_cast %161 : vector<1x4x4xbf16> to vector<4x4xbf16>
    %163 = arith.truncf %160 : vector<4x512xf32> to vector<4x512xbf16>
    %cst_68 = arith.constant dense<0.000000e+00> : vector<4x512xf32>
    %164 = tpu.matmul %162, %163, %cst_68 {dimension_numbers = #tpu.dot_dimension_numbers<[1], [0], [0], [1], [0, 0, 1, 1], [], []>} : vector<4x4xbf16>, vector<4x512xbf16>, vector<4x512xf32> -> vector<4x512xf32>
    %165 = arith.addf %156, %164 : vector<4x512xf32>
    %c15_i32_69 = arith.constant 15 : i32
    %166 = tpu.dynamic_rotate %1 by %c15_i32_69 dim 1 : vector<4x512xf32>, i32 -> vector<4x512xf32>
    %167 = vector.extract_strided_slice %0 {offsets = [2, 0], sizes = [1, 512], strides = [1, 1]} : vector<9x512xf32> to vector<1x512xf32>
    %168 = vector.broadcast %167 : vector<1x512xf32> to vector<4x512xf32>
    %169 = arith.mulf %166, %168 : vector<4x512xf32>
    %c2_70 = arith.constant 2 : index
    %c0_71 = arith.constant 0 : index
    %c0_72 = arith.constant 0 : index
    %170 = vector.load %arg7[%c2_70, %c0_71, %c0_72] : memref<9x4x4xbf16, #tpu.memory_space<vmem>>, vector<1x4x4xbf16>
    %171 = vector.shape_cast %170 : vector<1x4x4xbf16> to vector<4x4xbf16>
    %172 = arith.truncf %169 : vector<4x512xf32> to vector<4x512xbf16>
    %cst_73 = arith.constant dense<0.000000e+00> : vector<4x512xf32>
    %173 = tpu.matmul %171, %172, %cst_73 {dimension_numbers = #tpu.dot_dimension_numbers<[1], [0], [0], [1], [0, 0, 1, 1], [], []>} : vector<4x4xbf16>, vector<4x512xbf16>, vector<4x512xf32> -> vector<4x512xf32>
    %174 = arith.addf %165, %173 : vector<4x512xf32>
    %c1_i32_74 = arith.constant 1 : i32
    %175 = tpu.dynamic_rotate %1 by %c1_i32_74 dim 1 : vector<4x512xf32>, i32 -> vector<4x512xf32>
    %176 = vector.extract_strided_slice %0 {offsets = [3, 0], sizes = [1, 512], strides = [1, 1]} : vector<9x512xf32> to vector<1x512xf32>
    %177 = vector.broadcast %176 : vector<1x512xf32> to vector<4x512xf32>
    %178 = arith.mulf %175, %177 : vector<4x512xf32>
    %c3_75 = arith.constant 3 : index
    %c0_76 = arith.constant 0 : index
    %c0_77 = arith.constant 0 : index
    %179 = vector.load %arg7[%c3_75, %c0_76, %c0_77] : memref<9x4x4xbf16, #tpu.memory_space<vmem>>, vector<1x4x4xbf16>
    %180 = vector.shape_cast %179 : vector<1x4x4xbf16> to vector<4x4xbf16>
    %181 = arith.truncf %178 : vector<4x512xf32> to vector<4x512xbf16>
    %cst_78 = arith.constant dense<0.000000e+00> : vector<4x512xf32>
    %182 = tpu.matmul %180, %181, %cst_78 {dimension_numbers = #tpu.dot_dimension_numbers<[1], [0], [0], [1], [0, 0, 1, 1], [], []>} : vector<4x4xbf16>, vector<4x512xbf16>, vector<4x512xf32> -> vector<4x512xf32>
    %183 = arith.addf %174, %182 : vector<4x512xf32>
    %c4_79 = arith.constant 4 : index
    %c0_80 = arith.constant 0 : index
    %c0_81 = arith.constant 0 : index
    %184 = vector.load %arg7[%c4_79, %c0_80, %c0_81] : memref<9x4x4xbf16, #tpu.memory_space<vmem>>, vector<1x4x4xbf16>
    %185 = vector.shape_cast %184 : vector<1x4x4xbf16> to vector<4x4xbf16>
    %186 = arith.truncf %1 : vector<4x512xf32> to vector<4x512xbf16>
    %cst_82 = arith.constant dense<0.000000e+00> : vector<4x512xf32>
    %187 = tpu.matmul %185, %186, %cst_82 {dimension_numbers = #tpu.dot_dimension_numbers<[1], [0], [0], [1], [0, 0, 1, 1], [], []>} : vector<4x4xbf16>, vector<4x512xbf16>, vector<4x512xf32> -> vector<4x512xf32>
    %188 = arith.addf %183, %187 : vector<4x512xf32>
    %c511_i32_83 = arith.constant 511 : i32
    %189 = tpu.dynamic_rotate %1 by %c511_i32_83 dim 1 : vector<4x512xf32>, i32 -> vector<4x512xf32>
    %190 = vector.extract_strided_slice %0 {offsets = [5, 0], sizes = [1, 512], strides = [1, 1]} : vector<9x512xf32> to vector<1x512xf32>
    %191 = vector.broadcast %190 : vector<1x512xf32> to vector<4x512xf32>
    %192 = arith.mulf %189, %191 : vector<4x512xf32>
    %c5_84 = arith.constant 5 : index
    %c0_85 = arith.constant 0 : index
    %c0_86 = arith.constant 0 : index
    %193 = vector.load %arg7[%c5_84, %c0_85, %c0_86] : memref<9x4x4xbf16, #tpu.memory_space<vmem>>, vector<1x4x4xbf16>
    %194 = vector.shape_cast %193 : vector<1x4x4xbf16> to vector<4x4xbf16>
    %195 = arith.truncf %192 : vector<4x512xf32> to vector<4x512xbf16>
    %cst_87 = arith.constant dense<0.000000e+00> : vector<4x512xf32>
    %196 = tpu.matmul %194, %195, %cst_87 {dimension_numbers = #tpu.dot_dimension_numbers<[1], [0], [0], [1], [0, 0, 1, 1], [], []>} : vector<4x4xbf16>, vector<4x512xbf16>, vector<4x512xf32> -> vector<4x512xf32>
    %197 = arith.addf %188, %196 : vector<4x512xf32>
    %c497_i32_88 = arith.constant 497 : i32
    %198 = tpu.dynamic_rotate %1 by %c497_i32_88 dim 1 : vector<4x512xf32>, i32 -> vector<4x512xf32>
    %199 = vector.extract_strided_slice %0 {offsets = [6, 0], sizes = [1, 512], strides = [1, 1]} : vector<9x512xf32> to vector<1x512xf32>
    %200 = vector.broadcast %199 : vector<1x512xf32> to vector<4x512xf32>
    %201 = arith.mulf %198, %200 : vector<4x512xf32>
    %c6_89 = arith.constant 6 : index
    %c0_90 = arith.constant 0 : index
    %c0_91 = arith.constant 0 : index
    %202 = vector.load %arg7[%c6_89, %c0_90, %c0_91] : memref<9x4x4xbf16, #tpu.memory_space<vmem>>, vector<1x4x4xbf16>
    %203 = vector.shape_cast %202 : vector<1x4x4xbf16> to vector<4x4xbf16>
    %204 = arith.truncf %201 : vector<4x512xf32> to vector<4x512xbf16>
    %cst_92 = arith.constant dense<0.000000e+00> : vector<4x512xf32>
    %205 = tpu.matmul %203, %204, %cst_92 {dimension_numbers = #tpu.dot_dimension_numbers<[1], [0], [0], [1], [0, 0, 1, 1], [], []>} : vector<4x4xbf16>, vector<4x512xbf16>, vector<4x512xf32> -> vector<4x512xf32>
    %206 = arith.addf %197, %205 : vector<4x512xf32>
    %c496_i32_93 = arith.constant 496 : i32
    %207 = tpu.dynamic_rotate %1 by %c496_i32_93 dim 1 : vector<4x512xf32>, i32 -> vector<4x512xf32>
    %208 = vector.extract_strided_slice %0 {offsets = [7, 0], sizes = [1, 512], strides = [1, 1]} : vector<9x512xf32> to vector<1x512xf32>
    %209 = vector.broadcast %208 : vector<1x512xf32> to vector<4x512xf32>
    %210 = arith.mulf %207, %209 : vector<4x512xf32>
    %c7_94 = arith.constant 7 : index
    %c0_95 = arith.constant 0 : index
    %c0_96 = arith.constant 0 : index
    %211 = vector.load %arg7[%c7_94, %c0_95, %c0_96] : memref<9x4x4xbf16, #tpu.memory_space<vmem>>, vector<1x4x4xbf16>
    %212 = vector.shape_cast %211 : vector<1x4x4xbf16> to vector<4x4xbf16>
    %213 = arith.truncf %210 : vector<4x512xf32> to vector<4x512xbf16>
    %cst_97 = arith.constant dense<0.000000e+00> : vector<4x512xf32>
    %214 = tpu.matmul %212, %213, %cst_97 {dimension_numbers = #tpu.dot_dimension_numbers<[1], [0], [0], [1], [0, 0, 1, 1], [], []>} : vector<4x4xbf16>, vector<4x512xbf16>, vector<4x512xf32> -> vector<4x512xf32>
    %215 = arith.addf %206, %214 : vector<4x512xf32>
    %c495_i32_98 = arith.constant 495 : i32
    %216 = tpu.dynamic_rotate %1 by %c495_i32_98 dim 1 : vector<4x512xf32>, i32 -> vector<4x512xf32>
    %217 = vector.extract_strided_slice %0 {offsets = [8, 0], sizes = [1, 512], strides = [1, 1]} : vector<9x512xf32> to vector<1x512xf32>
    %218 = vector.broadcast %217 : vector<1x512xf32> to vector<4x512xf32>
    %219 = arith.mulf %216, %218 : vector<4x512xf32>
    %c8_99 = arith.constant 8 : index
    %c0_100 = arith.constant 0 : index
    %c0_101 = arith.constant 0 : index
    %220 = vector.load %arg7[%c8_99, %c0_100, %c0_101] : memref<9x4x4xbf16, #tpu.memory_space<vmem>>, vector<1x4x4xbf16>
    %221 = vector.shape_cast %220 : vector<1x4x4xbf16> to vector<4x4xbf16>
    %222 = arith.truncf %219 : vector<4x512xf32> to vector<4x512xbf16>
    %cst_102 = arith.constant dense<0.000000e+00> : vector<4x512xf32>
    %223 = tpu.matmul %221, %222, %cst_102 {dimension_numbers = #tpu.dot_dimension_numbers<[1], [0], [0], [1], [0, 0, 1, 1], [], []>} : vector<4x4xbf16>, vector<4x512xbf16>, vector<4x512xf32> -> vector<4x512xf32>
    %224 = arith.addf %215, %223 : vector<4x512xf32>
    %cst_103 = arith.constant dense<0.000000e+00> : vector<4xf32>
    %225 = vector.multi_reduction <add>, %224, %cst_103 [1] : vector<4x512xf32> to vector<4xf32>
    %226 = vector.shape_cast %225 : vector<4xf32> to vector<4x1xf32>
    %cst_104 = arith.constant 0.001953125 : f32
    %227 = vector.broadcast %cst_104 : f32 to vector<4x1xf32>
    %228 = arith.mulf %226, %227 : vector<4x1xf32>
    %229 = vector.broadcast %228 : vector<4x1xf32> to vector<4x512xf32>
    %230 = arith.subf %224, %229 : vector<4x512xf32>
    %231 = arith.mulf %230, %230 : vector<4x512xf32>
    %cst_105 = arith.constant dense<0.000000e+00> : vector<4xf32>
    %232 = vector.multi_reduction <add>, %231, %cst_105 [1] : vector<4x512xf32> to vector<4xf32>
    %233 = vector.shape_cast %232 : vector<4xf32> to vector<4x1xf32>
    %cst_106 = arith.constant 0.001953125 : f32
    %234 = vector.broadcast %cst_106 : f32 to vector<4x1xf32>
    %235 = arith.mulf %233, %234 : vector<4x1xf32>
    %cst_107 = arith.constant 9.99999974E-6 : f32
    %236 = vector.broadcast %cst_107 : f32 to vector<4x1xf32>
    %237 = arith.addf %235, %236 : vector<4x1xf32>
    %238 = math.rsqrt %237 : vector<4x1xf32>
    %239 = vector.broadcast %238 : vector<4x1xf32> to vector<4x512xf32>
    %240 = arith.mulf %230, %239 : vector<4x512xf32>
    %cst_108 = arith.constant 0.000000e+00 : f32
    %241 = vector.broadcast %cst_108 : f32 to vector<4x512xf32>
    %242 = arith.maximumf %240, %241 : vector<4x512xf32>
    %c0_109 = arith.constant 0 : index
    %c0_110 = arith.constant 0 : index
    %243 = vector.load %arg2[%c0_109, %c0_110] : memref<4x512xf32, #tpu.memory_space<vmem>>, vector<4x512xf32>
    %244 = arith.addf %242, %243 : vector<4x512xf32>
    %c17_i32_111 = arith.constant 17 : i32
    %245 = tpu.dynamic_rotate %244 by %c17_i32_111 dim 1 : vector<4x512xf32>, i32 -> vector<4x512xf32>
    %246 = vector.extract_strided_slice %0 {offsets = [0, 0], sizes = [1, 512], strides = [1, 1]} : vector<9x512xf32> to vector<1x512xf32>
    %247 = vector.broadcast %246 : vector<1x512xf32> to vector<4x512xf32>
    %248 = arith.mulf %245, %247 : vector<4x512xf32>
    %c0_112 = arith.constant 0 : index
    %c0_113 = arith.constant 0 : index
    %c0_114 = arith.constant 0 : index
    %249 = vector.load %arg8[%c0_112, %c0_113, %c0_114] : memref<9x4x4xbf16, #tpu.memory_space<vmem>>, vector<1x4x4xbf16>
    %250 = vector.shape_cast %249 : vector<1x4x4xbf16> to vector<4x4xbf16>
    %251 = arith.truncf %248 : vector<4x512xf32> to vector<4x512xbf16>
    %cst_115 = arith.constant dense<0.000000e+00> : vector<4x512xf32>
    %252 = tpu.matmul %250, %251, %cst_115 {dimension_numbers = #tpu.dot_dimension_numbers<[1], [0], [0], [1], [0, 0, 1, 1], [], []>} : vector<4x4xbf16>, vector<4x512xbf16>, vector<4x512xf32> -> vector<4x512xf32>
    %c16_i32_116 = arith.constant 16 : i32
    %253 = tpu.dynamic_rotate %244 by %c16_i32_116 dim 1 : vector<4x512xf32>, i32 -> vector<4x512xf32>
    %254 = vector.extract_strided_slice %0 {offsets = [1, 0], sizes = [1, 512], strides = [1, 1]} : vector<9x512xf32> to vector<1x512xf32>
    %255 = vector.broadcast %254 : vector<1x512xf32> to vector<4x512xf32>
    %256 = arith.mulf %253, %255 : vector<4x512xf32>
    %c1_117 = arith.constant 1 : index
    %c0_118 = arith.constant 0 : index
    %c0_119 = arith.constant 0 : index
    %257 = vector.load %arg8[%c1_117, %c0_118, %c0_119] : memref<9x4x4xbf16, #tpu.memory_space<vmem>>, vector<1x4x4xbf16>
    %258 = vector.shape_cast %257 : vector<1x4x4xbf16> to vector<4x4xbf16>
    %259 = arith.truncf %256 : vector<4x512xf32> to vector<4x512xbf16>
    %cst_120 = arith.constant dense<0.000000e+00> : vector<4x512xf32>
    %260 = tpu.matmul %258, %259, %cst_120 {dimension_numbers = #tpu.dot_dimension_numbers<[1], [0], [0], [1], [0, 0, 1, 1], [], []>} : vector<4x4xbf16>, vector<4x512xbf16>, vector<4x512xf32> -> vector<4x512xf32>
    %261 = arith.addf %252, %260 : vector<4x512xf32>
    %c15_i32_121 = arith.constant 15 : i32
    %262 = tpu.dynamic_rotate %244 by %c15_i32_121 dim 1 : vector<4x512xf32>, i32 -> vector<4x512xf32>
    %263 = vector.extract_strided_slice %0 {offsets = [2, 0], sizes = [1, 512], strides = [1, 1]} : vector<9x512xf32> to vector<1x512xf32>
    %264 = vector.broadcast %263 : vector<1x512xf32> to vector<4x512xf32>
    %265 = arith.mulf %262, %264 : vector<4x512xf32>
    %c2_122 = arith.constant 2 : index
    %c0_123 = arith.constant 0 : index
    %c0_124 = arith.constant 0 : index
    %266 = vector.load %arg8[%c2_122, %c0_123, %c0_124] : memref<9x4x4xbf16, #tpu.memory_space<vmem>>, vector<1x4x4xbf16>
    %267 = vector.shape_cast %266 : vector<1x4x4xbf16> to vector<4x4xbf16>
    %268 = arith.truncf %265 : vector<4x512xf32> to vector<4x512xbf16>
    %cst_125 = arith.constant dense<0.000000e+00> : vector<4x512xf32>
    %269 = tpu.matmul %267, %268, %cst_125 {dimension_numbers = #tpu.dot_dimension_numbers<[1], [0], [0], [1], [0, 0, 1, 1], [], []>} : vector<4x4xbf16>, vector<4x512xbf16>, vector<4x512xf32> -> vector<4x512xf32>
    %270 = arith.addf %261, %269 : vector<4x512xf32>
    %c1_i32_126 = arith.constant 1 : i32
    %271 = tpu.dynamic_rotate %244 by %c1_i32_126 dim 1 : vector<4x512xf32>, i32 -> vector<4x512xf32>
    %272 = vector.extract_strided_slice %0 {offsets = [3, 0], sizes = [1, 512], strides = [1, 1]} : vector<9x512xf32> to vector<1x512xf32>
    %273 = vector.broadcast %272 : vector<1x512xf32> to vector<4x512xf32>
    %274 = arith.mulf %271, %273 : vector<4x512xf32>
    %c3_127 = arith.constant 3 : index
    %c0_128 = arith.constant 0 : index
    %c0_129 = arith.constant 0 : index
    %275 = vector.load %arg8[%c3_127, %c0_128, %c0_129] : memref<9x4x4xbf16, #tpu.memory_space<vmem>>, vector<1x4x4xbf16>
    %276 = vector.shape_cast %275 : vector<1x4x4xbf16> to vector<4x4xbf16>
    %277 = arith.truncf %274 : vector<4x512xf32> to vector<4x512xbf16>
    %cst_130 = arith.constant dense<0.000000e+00> : vector<4x512xf32>
    %278 = tpu.matmul %276, %277, %cst_130 {dimension_numbers = #tpu.dot_dimension_numbers<[1], [0], [0], [1], [0, 0, 1, 1], [], []>} : vector<4x4xbf16>, vector<4x512xbf16>, vector<4x512xf32> -> vector<4x512xf32>
    %279 = arith.addf %270, %278 : vector<4x512xf32>
    %c4_131 = arith.constant 4 : index
    %c0_132 = arith.constant 0 : index
    %c0_133 = arith.constant 0 : index
    %280 = vector.load %arg8[%c4_131, %c0_132, %c0_133] : memref<9x4x4xbf16, #tpu.memory_space<vmem>>, vector<1x4x4xbf16>
    %281 = vector.shape_cast %280 : vector<1x4x4xbf16> to vector<4x4xbf16>
    %282 = arith.truncf %244 : vector<4x512xf32> to vector<4x512xbf16>
    %cst_134 = arith.constant dense<0.000000e+00> : vector<4x512xf32>
    %283 = tpu.matmul %281, %282, %cst_134 {dimension_numbers = #tpu.dot_dimension_numbers<[1], [0], [0], [1], [0, 0, 1, 1], [], []>} : vector<4x4xbf16>, vector<4x512xbf16>, vector<4x512xf32> -> vector<4x512xf32>
    %284 = arith.addf %279, %283 : vector<4x512xf32>
    %c511_i32_135 = arith.constant 511 : i32
    %285 = tpu.dynamic_rotate %244 by %c511_i32_135 dim 1 : vector<4x512xf32>, i32 -> vector<4x512xf32>
    %286 = vector.extract_strided_slice %0 {offsets = [5, 0], sizes = [1, 512], strides = [1, 1]} : vector<9x512xf32> to vector<1x512xf32>
    %287 = vector.broadcast %286 : vector<1x512xf32> to vector<4x512xf32>
    %288 = arith.mulf %285, %287 : vector<4x512xf32>
    %c5_136 = arith.constant 5 : index
    %c0_137 = arith.constant 0 : index
    %c0_138 = arith.constant 0 : index
    %289 = vector.load %arg8[%c5_136, %c0_137, %c0_138] : memref<9x4x4xbf16, #tpu.memory_space<vmem>>, vector<1x4x4xbf16>
    %290 = vector.shape_cast %289 : vector<1x4x4xbf16> to vector<4x4xbf16>
    %291 = arith.truncf %288 : vector<4x512xf32> to vector<4x512xbf16>
    %cst_139 = arith.constant dense<0.000000e+00> : vector<4x512xf32>
    %292 = tpu.matmul %290, %291, %cst_139 {dimension_numbers = #tpu.dot_dimension_numbers<[1], [0], [0], [1], [0, 0, 1, 1], [], []>} : vector<4x4xbf16>, vector<4x512xbf16>, vector<4x512xf32> -> vector<4x512xf32>
    %293 = arith.addf %284, %292 : vector<4x512xf32>
    %c497_i32_140 = arith.constant 497 : i32
    %294 = tpu.dynamic_rotate %244 by %c497_i32_140 dim 1 : vector<4x512xf32>, i32 -> vector<4x512xf32>
    %295 = vector.extract_strided_slice %0 {offsets = [6, 0], sizes = [1, 512], strides = [1, 1]} : vector<9x512xf32> to vector<1x512xf32>
    %296 = vector.broadcast %295 : vector<1x512xf32> to vector<4x512xf32>
    %297 = arith.mulf %294, %296 : vector<4x512xf32>
    %c6_141 = arith.constant 6 : index
    %c0_142 = arith.constant 0 : index
    %c0_143 = arith.constant 0 : index
    %298 = vector.load %arg8[%c6_141, %c0_142, %c0_143] : memref<9x4x4xbf16, #tpu.memory_space<vmem>>, vector<1x4x4xbf16>
    %299 = vector.shape_cast %298 : vector<1x4x4xbf16> to vector<4x4xbf16>
    %300 = arith.truncf %297 : vector<4x512xf32> to vector<4x512xbf16>
    %cst_144 = arith.constant dense<0.000000e+00> : vector<4x512xf32>
    %301 = tpu.matmul %299, %300, %cst_144 {dimension_numbers = #tpu.dot_dimension_numbers<[1], [0], [0], [1], [0, 0, 1, 1], [], []>} : vector<4x4xbf16>, vector<4x512xbf16>, vector<4x512xf32> -> vector<4x512xf32>
    %302 = arith.addf %293, %301 : vector<4x512xf32>
    %c496_i32_145 = arith.constant 496 : i32
    %303 = tpu.dynamic_rotate %244 by %c496_i32_145 dim 1 : vector<4x512xf32>, i32 -> vector<4x512xf32>
    %304 = vector.extract_strided_slice %0 {offsets = [7, 0], sizes = [1, 512], strides = [1, 1]} : vector<9x512xf32> to vector<1x512xf32>
    %305 = vector.broadcast %304 : vector<1x512xf32> to vector<4x512xf32>
    %306 = arith.mulf %303, %305 : vector<4x512xf32>
    %c7_146 = arith.constant 7 : index
    %c0_147 = arith.constant 0 : index
    %c0_148 = arith.constant 0 : index
    %307 = vector.load %arg8[%c7_146, %c0_147, %c0_148] : memref<9x4x4xbf16, #tpu.memory_space<vmem>>, vector<1x4x4xbf16>
    %308 = vector.shape_cast %307 : vector<1x4x4xbf16> to vector<4x4xbf16>
    %309 = arith.truncf %306 : vector<4x512xf32> to vector<4x512xbf16>
    %cst_149 = arith.constant dense<0.000000e+00> : vector<4x512xf32>
    %310 = tpu.matmul %308, %309, %cst_149 {dimension_numbers = #tpu.dot_dimension_numbers<[1], [0], [0], [1], [0, 0, 1, 1], [], []>} : vector<4x4xbf16>, vector<4x512xbf16>, vector<4x512xf32> -> vector<4x512xf32>
    %311 = arith.addf %302, %310 : vector<4x512xf32>
    %c495_i32_150 = arith.constant 495 : i32
    %312 = tpu.dynamic_rotate %244 by %c495_i32_150 dim 1 : vector<4x512xf32>, i32 -> vector<4x512xf32>
    %313 = vector.extract_strided_slice %0 {offsets = [8, 0], sizes = [1, 512], strides = [1, 1]} : vector<9x512xf32> to vector<1x512xf32>
    %314 = vector.broadcast %313 : vector<1x512xf32> to vector<4x512xf32>
    %315 = arith.mulf %312, %314 : vector<4x512xf32>
    %c8_151 = arith.constant 8 : index
    %c0_152 = arith.constant 0 : index
    %c0_153 = arith.constant 0 : index
    %316 = vector.load %arg8[%c8_151, %c0_152, %c0_153] : memref<9x4x4xbf16, #tpu.memory_space<vmem>>, vector<1x4x4xbf16>
    %317 = vector.shape_cast %316 : vector<1x4x4xbf16> to vector<4x4xbf16>
    %318 = arith.truncf %315 : vector<4x512xf32> to vector<4x512xbf16>
    %cst_154 = arith.constant dense<0.000000e+00> : vector<4x512xf32>
    %319 = tpu.matmul %317, %318, %cst_154 {dimension_numbers = #tpu.dot_dimension_numbers<[1], [0], [0], [1], [0, 0, 1, 1], [], []>} : vector<4x4xbf16>, vector<4x512xbf16>, vector<4x512xf32> -> vector<4x512xf32>
    %320 = arith.addf %311, %319 : vector<4x512xf32>
    %cst_155 = arith.constant dense<0.000000e+00> : vector<4xf32>
    %321 = vector.multi_reduction <add>, %320, %cst_155 [1] : vector<4x512xf32> to vector<4xf32>
    %322 = vector.shape_cast %321 : vector<4xf32> to vector<4x1xf32>
    %cst_156 = arith.constant 0.001953125 : f32
    %323 = vector.broadcast %cst_156 : f32 to vector<4x1xf32>
    %324 = arith.mulf %322, %323 : vector<4x1xf32>
    %325 = vector.broadcast %324 : vector<4x1xf32> to vector<4x512xf32>
    %326 = arith.subf %320, %325 : vector<4x512xf32>
    %327 = arith.mulf %326, %326 : vector<4x512xf32>
    %cst_157 = arith.constant dense<0.000000e+00> : vector<4xf32>
    %328 = vector.multi_reduction <add>, %327, %cst_157 [1] : vector<4x512xf32> to vector<4xf32>
    %329 = vector.shape_cast %328 : vector<4xf32> to vector<4x1xf32>
    %cst_158 = arith.constant 0.001953125 : f32
    %330 = vector.broadcast %cst_158 : f32 to vector<4x1xf32>
    %331 = arith.mulf %329, %330 : vector<4x1xf32>
    %cst_159 = arith.constant 9.99999974E-6 : f32
    %332 = vector.broadcast %cst_159 : f32 to vector<4x1xf32>
    %333 = arith.addf %331, %332 : vector<4x1xf32>
    %334 = math.rsqrt %333 : vector<4x1xf32>
    %335 = vector.broadcast %334 : vector<4x1xf32> to vector<4x512xf32>
    %336 = arith.mulf %326, %335 : vector<4x512xf32>
    %cst_160 = arith.constant 0.000000e+00 : f32
    %337 = vector.broadcast %cst_160 : f32 to vector<4x512xf32>
    %338 = arith.maximumf %336, %337 : vector<4x512xf32>
    %c0_161 = arith.constant 0 : index
    %c0_162 = arith.constant 0 : index
    %339 = vector.load %arg10[%c0_161, %c0_162] : memref<4x512xf32, #tpu.memory_space<vmem>>, vector<4x512xf32>
    tpu.vector_store %arg10[%c0_161, %c0_162], %338 {strides = array<i32>} : memref<4x512xf32, #tpu.memory_space<vmem>>, vector<4x512xf32>,
    return
  }
}

</mosaic_0001>

<llo_original>
// kernel: _lambda_.2
$region0: #{_lambda_.2}
  #allocation0 [shape = 'u32[]', space=smem, size = 0x4, offset = 0x4, fixed_abs, tag = 'smem constant byte address 0x4 - core index']
  #allocation1 [shape = 'u32[144,128]{1,0:T(1,128)}', space=vmem, size = 0x12000, scoped, tag = 'internal scratch']
  %s0 = inlined_call_operand.vmem [shape: bf16[8,128], index: 0, kind: input, shape index: {}]
  %s1 = inlined_call_operand.vmem [shape: bf16[16,8], index: 1, kind: input, shape index: {}]
  %s2 = inlined_call_operand.vmem [shape: bf16[16,128], index: 2, kind: output, shape index: {}]
  %s3 = sld [smem:[#allocation0]]
  $region18: #{_lambda_.2} parent=0
    _
  %s5 = ssub.s32 1, %s3
  %s6 = scalar_select 0, %s5, %s3
  // Predicated region
  $region2: #{_lambda_.2} parent=0 // pred_check
    _
  $region3: #{_lambda_.2} parent=0 // pred_check_branch
    %8 = sbr.rel (0) target = $region5
  $region4: #{_lambda_.2} parent=0 // pred_region
    _
  $region5: #{_lambda_.2} parent=0 // pred_fallthru
    _
  // Predicated region
  $region6: #{_lambda_.2} parent=0 // pred_check
    _
  $region7: #{_lambda_.2} parent=0 // pred_check_branch
    %10 = sbr.rel (0) target = $region9
  $region8: #{_lambda_.2} parent=0 // pred_region
    _
  $region9: #{_lambda_.2} parent=0 // pred_fallthru
    _
  %v12 = vld [vmem:[%s1] sm:$0xf]
  %v13 = vld [vmem:[%s1 + $0x4] sm:$0xf]
  %v14 = vld [vmem:[%s0] sm:$0xf]
  %v17 = vunpack.c.l.b16 %v12
  %v18 = vunpack.c.l.b16 %v13
  %v19 = vpack.c.b16 %v18, %v17
  %vm20 = vcmask 64512
  %v22 = vsel %vm20, %v19, 0
  %vm24 = vcmask 1043456
  %v26 = vsel %vm24, %v14, 0
  %28 = vmatprep.subr.bf16.mxu0 0
  %29 = vmatpush1.bf16.msra.mxu0 0
  %30 = vmatprep.subr.bf16.mxu0 0
  %31 = vmatpush1.bf16.msra.mxu0 0
  %32 = vmatprep.subr.bf16.mxu0 0
  %33 = vmatpush1.bf16.msra.mxu0 0
  %34 = vmatprep.subr.bf16.mxu0 0
  %35 = vmatpush1.bf16.msra.mxu0 0
  %36 = vmatprep.subr.bf16.mxu0 0
  %37 = vmatpush1.bf16.msra.mxu0 0
  %38 = vmatprep.subr.bf16.mxu0 0
  %39 = vmatpush1.bf16.msra.mxu0 0
  %40 = vmatprep.subr.bf16.mxu0 0
  %41 = vmatpush1.bf16.msra.mxu0 0
  %42 = vmatprep.subr.bf16.mxu0 0
  %43 = vmatpush1.bf16.msra.mxu0 %v26
  %44 = vmatprep.subr.bf16.mxu0 0
  %45 = vmatpush2.bf16.msra.mxu0 0
  %46 = vmatprep.subr.bf16.mxu0 0
  %47 = vmatpush2.bf16.msra.mxu0 0
  %48 = vmatprep.subr.bf16.mxu0 0
  %49 = vmatpush2.bf16.msra.mxu0 0
  %50 = vmatprep.subr.bf16.mxu0 0
  %51 = vmatpush2.bf16.msra.mxu0 0
  %52 = vmatprep.subr.bf16.mxu0 0
  %53 = vmatpush2.bf16.msra.mxu0 0
  %54 = vmatprep.subr.bf16.mxu0 0
  %55 = vmatpush2.bf16.msra.mxu0 0
  %56 = vmatprep.subr.bf16.mxu0 0
  %57 = vmatpush2.bf16.msra.mxu0 0
  %58 = vmatprep.subr.bf16.mxu0 0
  %59 = vmatpush2.bf16.msra.mxu0 0
  %60 = vmatprep.mubr.bf16.mxu0 0
  %61 = vmatmul.mubr.bf16.gmra.mxu0 %v22
  %v62 = vpop.f32.mrf.mxu0
  %v63 = vadd.f32 0.0, %v62
  %v64 = vpop.f32.mrf.mxu0
  %v65 = vpop.f32.mrf.mxu0
  %v66 = vadd.f32 0.0, %v65
  %v67 = vpop.f32.mrf.mxu0
  %68 = vdwg.mxu0
  %v69 = vpack.c.bf16 %v66, %v63
  %v71 = vunpack.c.l.b16 %v69
  %v72 = vunpack.c.h.b16 %v69
  %v73 = vpack.c.b16 %v71, %v71
  %v74 = vpack.c.b16 %v72, %v72
  %77 = vst [vmem:[%s2] sm:$0xf] %v73
  %78 = vst [vmem:[%s2 + $0x4] sm:$0xf] %v74
  // Predicated region
  $region10: #{_lambda_.2} parent=0 // pred_check
    _
  $region11: #{_lambda_.2} parent=0 // pred_check_branch
    %80 = sbr.rel (0) target = $region13
  $region12: #{_lambda_.2} parent=0 // pred_region
    _
  $region13: #{_lambda_.2} parent=0 // pred_fallthru
    _
  // Predicated region
  $region14: #{_lambda_.2} parent=0 // pred_check
    _
  $region15: #{_lambda_.2} parent=0 // pred_check_branch
    %82 = sbr.rel (0) target = $region17
  $region16: #{_lambda_.2} parent=0 // pred_region
    _
  $region17: #{_lambda_.2} parent=0 // pred_fallthru
    _

// kernel: _lambda_.3
$region0: #{_lambda_.3}
  #allocation0 [shape = 'u32[]', space=smem, size = 0x4, offset = 0x4, fixed_abs, tag = 'smem constant byte address 0x4 - core index']
  #allocation1 [shape = 'u32[144,128]{1,0:T(1,128)}', space=vmem, size = 0x12000, scoped, tag = 'internal scratch']
  %s0 = inlined_call_operand.vmem [shape: bf16[4,512], index: 0, kind: input, shape index: {}]
  %s1 = inlined_call_operand.vmem [shape: f32[4,512], index: 1, kind: input, shape index: {}]
  %s2 = inlined_call_operand.vmem [shape: f32[4,512], index: 2, kind: input, shape index: {}]
  %s3 = inlined_call_operand.vmem [shape: bf16[2,4], index: 3, kind: input, shape index: {}]
  %s4 = inlined_call_operand.vmem [shape: bf16[2,4], index: 4, kind: input, shape index: {}]
  %s5 = inlined_call_operand.vmem [shape: f32[2,1], index: 5, kind: input, shape index: {}]
  %s6 = inlined_call_operand.vmem [shape: bf16[9,4,4], index: 6, kind: input, shape index: {}]
  %s7 = inlined_call_operand.vmem [shape: bf16[9,4,4], index: 7, kind: input, shape index: {}]
  %s8 = inlined_call_operand.vmem [shape: bf16[9,4,4], index: 8, kind: input, shape index: {}]
  %s9 = inlined_call_operand.vmem [shape: f32[9,512], index: 9, kind: input, shape index: {}]
  %s10 = inlined_call_operand.vmem [shape: f32[4,512], index: 10, kind: output, shape index: {}]
  %s11 = sld [smem:[#allocation0]]
  $region50: #{_lambda_.3} parent=0
    _
  %s13 = ssub.s32 1, %s11
  %s14 = scalar_select 0, %s13, %s11
  // Predicated region
  $region2: #{_lambda_.3} parent=0 // pred_check
    _
  $region3: #{_lambda_.3} parent=0 // pred_check_branch
    %16 = sbr.rel (0) target = $region5
  $region4: #{_lambda_.3} parent=0 // pred_region
    _
  $region5: #{_lambda_.3} parent=0 // pred_fallthru
    _
  // Predicated region
  $region6: #{_lambda_.3} parent=0 // pred_check
    _
  $region7: #{_lambda_.3} parent=0 // pred_check_branch
    %18 = sbr.rel (0) target = $region9
  $region8: #{_lambda_.3} parent=0 // pred_region
    _
  $region9: #{_lambda_.3} parent=0 // pred_fallthru
    _
  // Predicated region
  $region10: #{_lambda_.3} parent=0 // pred_check
    _
  $region11: #{_lambda_.3} parent=0 // pred_check_branch
    %20 = sbr.rel (0) target = $region13
  $region12: #{_lambda_.3} parent=0 // pred_region
    _
  $region13: #{_lambda_.3} parent=0 // pred_fallthru
    _
  // Predicated region
  $region14: #{_lambda_.3} parent=0 // pred_check
    _
  $region15: #{_lambda_.3} parent=0 // pred_check_branch
    %22 = sbr.rel (0) target = $region17
  $region16: #{_lambda_.3} parent=0 // pred_region
    _
  $region17: #{_lambda_.3} parent=0 // pred_fallthru
    _
  // Predicated region
  $region18: #{_lambda_.3} parent=0 // pred_check
    _
  $region19: #{_lambda_.3} parent=0 // pred_check_branch
    %24 = sbr.rel (0) target = $region21
  $region20: #{_lambda_.3} parent=0 // pred_region
    _
  $region21: #{_lambda_.3} parent=0 // pred_fallthru
    _
  // Predicated region
  $region22: #{_lambda_.3} parent=0 // pred_check
    _
  $region23: #{_lambda_.3} parent=0 // pred_check_branch
    %26 = sbr.rel (0) target = $region25
  $region24: #{_lambda_.3} parent=0 // pred_region
    _
  $region25: #{_lambda_.3} parent=0 // pred_fallthru
    _
  // Predicated region
  $region26: #{_lambda_.3} parent=0 // pred_check
    _
  $region27: #{_lambda_.3} parent=0 // pred_check_branch
    %28 = sbr.rel (0) target = $region29
  $region28: #{_lambda_.3} parent=0 // pred_region
    _
  $region29: #{_lambda_.3} parent=0 // pred_fallthru
    _
  // Predicated region
  $region30: #{_lambda_.3} parent=0 // pred_check
    _
  $region31: #{_lambda_.3} parent=0 // pred_check_branch
    %30 = sbr.rel (0) target = $region33
  $region32: #{_lambda_.3} parent=0 // pred_region
    _
  $region33: #{_lambda_.3} parent=0 // pred_fallthru
    _
  // Predicated region
  $region34: #{_lambda_.3} parent=0 // pred_check
    _
  $region35: #{_lambda_.3} parent=0 // pred_check_branch
    %32 = sbr.rel (0) target = $region37
  $region36: #{_lambda_.3} parent=0 // pred_region
    _
  $region37: #{_lambda_.3} parent=0 // pred_fallthru
    _
  // Predicated region
  $region38: #{_lambda_.3} parent=0 // pred_check
    _
  $region39: #{_lambda_.3} parent=0 // pred_check_branch
    %34 = sbr.rel (0) target = $region41
  $region40: #{_lambda_.3} parent=0 // pred_region
    _
  $region41: #{_lambda_.3} parent=0 // pred_fallthru
    _
  %v36 = vld [vmem:[%s9] sm:$0xff]
  %v37 = vld [vmem:[%s9 + $0x8] sm:$0xff]
  %v38 = vld [vmem:[%s9 + $0x10] sm:$0xff]
  %v39 = vld [vmem:[%s9 + $0x18] sm:$0xff]
  %v40 = vld [vmem:[%s9 + $0x20] sm:$0x1]
  %v41 = vld [vmem:[%s9 + $0x28] sm:$0x1]
  %v42 = vld [vmem:[%s9 + $0x30] sm:$0x1]
  %v43 = vld [vmem:[%s9 + $0x38] sm:$0x1]
  %v44 = vld [vmem:[%s1] sm:$0xff]
  %v45 = vld [vmem:[%s1 + $0x8] sm:$0xff]
  %v46 = vld [vmem:[%s3] sm:$0x1]
  %v47 = vld [vmem:[%s0] sm:$0xff]
  %v49 = vcombine.high %v47, %v47
  %v51 = vunpack.c.l.s4 1983009808
  %v52 = vunpack.c.0.s8 %v51
  %v53 = vlaneseq
  %v54 = vshrl.u32 %v53, 7
  %v55 = vsub.s32 %v52, %v54
  %v56 = vrot.slane %v47, %v55
  %v58 = vunpack.c.l.s4 1983009808
  %v59 = vunpack.c.0.s8 %v58
  %v60 = vlaneseq
  %v61 = vshrl.u32 %v60, 7
  %v62 = vsub.s32 %v59, %v61
  %v63 = vrot.slane %v49, %v62
  %v64 = vcombine.high %v56, %v56
  %v65 = vcombine.high %v63, %v63
  %vm66 = vcmask 31744
  %v68 = vsel %vm66, %v46, 0
  %vm70 = vcmask 1041408
  %v72 = vsel %vm70, %v56, 0
  %v75 = vsel %vm70, %v64, 0
  %v78 = vsel %vm70, %v63, 0
  %v81 = vsel %vm70, %v65, 0
  %83 = vmatprep.subr.bf16.mxu0 0
  %84 = vmatpush1.bf16.msra.mxu0 0
  %85 = vmatprep.subr.bf16.mxu0 0
  %86 = vmatpush1.bf16.msra.mxu0 0
  %87 = vmatprep.subr.bf16.mxu0 0
  %88 = vmatpush1.bf16.msra.mxu0 0
  %89 = vmatprep.subr.bf16.mxu0 0
  %90 = vmatpush1.bf16.msra.mxu0 0
  %91 = vmatprep.subr.bf16.mxu0 0
  %92 = vmatpush1.bf16.msra.mxu0 0
  %93 = vmatprep.subr.bf16.mxu0 0
  %94 = vmatpush1.bf16.msra.mxu0 0
  %95 = vmatprep.subr.bf16.mxu0 0
  %96 = vmatpush1.bf16.msra.mxu0 0
  %97 = vmatprep.subr.bf16.mxu0 %v75
  %98 = vmatpush1.bf16.msra.mxu0 %v72
  %99 = vmatprep.subr.bf16.mxu0 0
  %100 = vmatpush2.bf16.msra.mxu0 0
  %101 = vmatprep.subr.bf16.mxu0 0
  %102 = vmatpush2.bf16.msra.mxu0 0
  %103 = vmatprep.subr.bf16.mxu0 0
  %104 = vmatpush2.bf16.msra.mxu0 0
  %105 = vmatprep.subr.bf16.mxu0 0
  %106 = vmatpush2.bf16.msra.mxu0 0
  %107 = vmatprep.subr.bf16.mxu0 0
  %108 = vmatpush2.bf16.msra.mxu0 0
  %109 = vmatprep.subr.bf16.mxu0 0
  %110 = vmatpush2.bf16.msra.mxu0 0
  %111 = vmatprep.subr.bf16.mxu0 0
  %112 = vmatpush2.bf16.msra.mxu0 0
  %113 = vmatprep.subr.bf16.mxu0 0
  %114 = vmatpush2.bf16.msra.mxu0 0
  %115 = vmatprep.mubr.bf16.mxu0 0
  %116 = vmatmul.mubr.bf16.gmra.mxu0 %v68
  %v117 = vpop.f32.mrf.mxu0
  %v118 = vadd.f32 0.0, %v117
  %v119 = vpop.f32.mrf.mxu0
  %v120 = vadd.f32 0.0, %v119
  %v121 = vpop.f32.mrf.mxu0
  %v122 = vpop.f32.mrf.mxu0
  %123 = vdwg.mxu0
  %124 = vmatprep.subr.bf16.mxu0 0
  %125 = vmatpush1.bf16.msra.mxu0 0
  %126 = vmatprep.subr.bf16.mxu0 0
  %127 = vmatpush1.bf16.msra.mxu0 0
  %128 = vmatprep.subr.bf16.mxu0 0
  %129 = vmatpush1.bf16.msra.mxu0 0
  %130 = vmatprep.subr.bf16.mxu0 0
  %131 = vmatpush1.bf16.msra.mxu0 0
  %132 = vmatprep.subr.bf16.mxu0 0
  %133 = vmatpush1.bf16.msra.mxu0 0
  %134 = vmatprep.subr.bf16.mxu0 0
  %135 = vmatpush1.bf16.msra.mxu0 0
  %136 = vmatprep.subr.bf16.mxu0 0
  %137 = vmatpush1.bf16.msra.mxu0 0
  %138 = vmatprep.subr.bf16.mxu0 %v81
  %139 = vmatpush1.bf16.msra.mxu0 %v78
  %140 = vmatprep.subr.bf16.mxu0 0
  %141 = vmatpush2.bf16.msra.mxu0 0
  %142 = vmatprep.subr.bf16.mxu0 0
  %143 = vmatpush2.bf16.msra.mxu0 0
  %144 = vmatprep.subr.bf16.mxu0 0
  %145 = vmatpush2.bf16.msra.mxu0 0
  %146 = vmatprep.subr.bf16.mxu0 0
  %147 = vmatpush2.bf16.msra.mxu0 0
  %148 = vmatprep.subr.bf16.mxu0 0
  %149 = vmatpush2.bf16.msra.mxu0 0
  %150 = vmatprep.subr.bf16.mxu0 0
  %151 = vmatpush2.bf16.msra.mxu0 0
  %152 = vmatprep.subr.bf16.mxu0 0
  %153 = vmatpush2.bf16.msra.mxu0 0
  %154 = vmatprep.subr.bf16.mxu0 0
  %155 = vmatpush2.bf16.msra.mxu0 0
  %156 = vmatprep.mubr.bf16.mxu0 0
  %157 = vmatmul.mubr.bf16.gmra.mxu0 %v68
  %v158 = vpop.f32.mrf.mxu0
  %v159 = vadd.f32 0.0, %v158
  %v160 = vpop.f32.mrf.mxu0
  %v161 = vadd.f32 0.0, %v160
  %v162 = vpop.f32.mrf.mxu0
  %v163 = vpop.f32.mrf.mxu0
  %164 = vdwg.mxu0
  %v165 = vld [vmem:[%s4] sm:$0x1]
  %v168 = vcombine.high %v44, %v44
  %v169 = vcombine.high %v45, %v45
  %v172 = vpack.c.bf16 %v44, %v44
  %v173 = vpack.c.bf16 %v168, %v168
  %v174 = vpack.c.bf16 %v45, %v45
  %v175 = vpack.c.bf16 %v169, %v169
  %v177 = vsel %vm66, %v165, 0
  %v180 = vsel %vm70, %v172, 0
  %v183 = vsel %vm70, %v173, 0
  %v186 = vsel %vm70, %v174, 0
  %v189 = vsel %vm70, %v175, 0
  %191 = vmatprep.subr.bf16.mxu0 0
  %192 = vmatpush1.bf16.msra.mxu0 0
  %193 = vmatprep.subr.bf16.mxu0 0
  %194 = vmatpush1.bf16.msra.mxu0 0
  %195 = vmatprep.subr.bf16.mxu0 0
  %196 = vmatpush1.bf16.msra.mxu0 0
  %197 = vmatprep.subr.bf16.mxu0 0
  %198 = vmatpush1.bf16.msra.mxu0 0
  %199 = vmatprep.subr.bf16.mxu0 0
  %200 = vmatpush1.bf16.msra.mxu0 0
  %201 = vmatprep.subr.bf16.mxu0 0
  %202 = vmatpush1.bf16.msra.mxu0 0
  %203 = vmatprep.subr.bf16.mxu0 0
  %204 = vmatpush1.bf16.msra.mxu0 0
  %205 = vmatprep.subr.bf16.mxu0 %v183
  %206 = vmatpush1.bf16.msra.mxu0 %v180
  %207 = vmatprep.subr.bf16.mxu0 0
  %208 = vmatpush2.bf16.msra.mxu0 0
  %209 = vmatprep.subr.bf16.mxu0 0
  %210 = vmatpush2.bf16.msra.mxu0 0
  %211 = vmatprep.subr.bf16.mxu0 0
  %212 = vmatpush2.bf16.msra.mxu0 0
  %213 = vmatprep.subr.bf16.mxu0 0
  %214 = vmatpush2.bf16.msra.mxu0 0
  %215 = vmatprep.subr.bf16.mxu0 0
  %216 = vmatpush2.bf16.msra.mxu0 0
  %217 = vmatprep.subr.bf16.mxu0 0
  %218 = vmatpush2.bf16.msra.mxu0 0
  %219 = vmatprep.subr.bf16.mxu0 0
  %220 = vmatpush2.bf16.msra.mxu0 0
  %221 = vmatprep.subr.bf16.mxu0 0
  %222 = vmatpush2.bf16.msra.mxu0 0
  %223 = vmatprep.mubr.bf16.mxu0 0
  %224 = vmatmul.mubr.bf16.gmra.mxu0 %v177
  %v225 = vpop.f32.mrf.mxu0
  %v226 = vadd.f32 0.0, %v225
  %v227 = vpop.f32.mrf.mxu0
  %v228 = vadd.f32 0.0, %v227
  %v229 = vpop.f32.mrf.mxu0
  %v230 = vpop.f32.mrf.mxu0
  %231 = vdwg.mxu0
  %232 = vmatprep.subr.bf16.mxu0 0
  %233 = vmatpush1.bf16.msra.mxu0 0
  %234 = vmatprep.subr.bf16.mxu0 0
  %235 = vmatpush1.bf16.msra.mxu0 0
  %236 = vmatprep.subr.bf16.mxu0 0
  %237 = vmatpush1.bf16.msra.mxu0 0
  %238 = vmatprep.subr.bf16.mxu0 0
  %239 = vmatpush1.bf16.msra.mxu0 0
  %240 = vmatprep.subr.bf16.mxu0 0
  %241 = vmatpush1.bf16.msra.mxu0 0
  %242 = vmatprep.subr.bf16.mxu0 0
  %243 = vmatpush1.bf16.msra.mxu0 0
  %244 = vmatprep.subr.bf16.mxu0 0
  %245 = vmatpush1.bf16.msra.mxu0 0
  %246 = vmatprep.subr.bf16.mxu0 %v189
  %247 = vmatpush1.bf16.msra.mxu0 %v186
  %248 = vmatprep.subr.bf16.mxu0 0
  %249 = vmatpush2.bf16.msra.mxu0 0
  %250 = vmatprep.subr.bf16.mxu0 0
  %251 = vmatpush2.bf16.msra.mxu0 0
  %252 = vmatprep.subr.bf16.mxu0 0
  %253 = vmatpush2.bf16.msra.mxu0 0
  %254 = vmatprep.subr.bf16.mxu0 0
  %255 = vmatpush2.bf16.msra.mxu0 0
  %256 = vmatprep.subr.bf16.mxu0 0
  %257 = vmatpush2.bf16.msra.mxu0 0
  %258 = vmatprep.subr.bf16.mxu0 0
  %259 = vmatpush2.bf16.msra.mxu0 0
  %260 = vmatprep.subr.bf16.mxu0 0
  %261 = vmatpush2.bf16.msra.mxu0 0
  %262 = vmatprep.subr.bf16.mxu0 0
  %263 = vmatpush2.bf16.msra.mxu0 0
  %264 = vmatprep.mubr.bf16.mxu0 0
  %265 = vmatmul.mubr.bf16.gmra.mxu0 %v177
  %v266 = vpop.f32.mrf.mxu0
  %v267 = vadd.f32 0.0, %v266
  %v268 = vpop.f32.mrf.mxu0
  %v269 = vadd.f32 0.0, %v268
  %v270 = vpop.f32.mrf.mxu0
  %v271 = vpop.f32.mrf.mxu0
  %272 = vdwg.mxu0
  %v273 = vsel %vm70, %v118, 0.0
  %v274 = vsel %vm70, %v120, 0.0
  %v275 = vadd.f32 %v273, %v274
  %v276 = vsel %vm70, %v159, 0.0
  %v277 = vadd.f32 %v275, %v276
  %v278 = vsel %vm70, %v161, 0.0
  %v279 = vadd.f32 %v277, %v278
  %280 = vadd.xlane.f32.xlu0 %v279
  %v281 = vpop.xlane.xlu0 %280
  %v282 = vmul.f32 %v281, 0.001953125
  %v283 = vsub.f32 %v118, %v282
  %v284 = vsub.f32 %v120, %v282
  %v285 = vsub.f32 %v159, %v282
  %v286 = vsub.f32 %v161, %v282
  %v287 = vmul.f32 %v283, %v283
  %v288 = vmul.f32 %v284, %v284
  %v289 = vmul.f32 %v285, %v285
  %v290 = vmul.f32 %v286, %v286
  %v291 = vsel %vm70, %v287, 0.0
  %v292 = vsel %vm70, %v288, 0.0
  %v293 = vadd.f32 %v291, %v292
  %v294 = vsel %vm70, %v289, 0.0
  %v295 = vadd.f32 %v293, %v294
  %v296 = vsel %vm70, %v290, 0.0
  %v297 = vadd.f32 %v295, %v296
  %298 = vadd.xlane.f32.xlu0 %v297
  %v299 = vpop.xlane.xlu0 %298
  %v300 = vmul.f32 %v299, 0.001953125
  %v301 = vadd.f32 %v300, 1e-05
  %v302 = vrsqrt.pop %v301
  %v303 = vmul.f32 %v283, %v302
  %v304 = vmul.f32 %v284, %v302
  %v305 = vmul.f32 %v285, %v302
  %v306 = vmul.f32 %v286, %v302
  %v307 = vsel %vm70, %v226, 0.0
  %v308 = vsel %vm70, %v228, 0.0
  %v309 = vadd.f32 %v307, %v308
  %v310 = vsel %vm70, %v267, 0.0
  %v311 = vadd.f32 %v309, %v310
  %v312 = vsel %vm70, %v269, 0.0
  %v313 = vadd.f32 %v311, %v312
  %314 = vadd.xlane.f32.xlu0 %v313
  %v315 = vpop.xlane.xlu0 %314
  %v316 = vmul.f32 %v315, 0.001953125
  %v317 = vsub.f32 %v226, %v316
  %v318 = vsub.f32 %v228, %v316
  %v319 = vsub.f32 %v267, %v316
  %v320 = vsub.f32 %v269, %v316
  %v321 = vmul.f32 %v317, %v317
  %v322 = vmul.f32 %v318, %v318
  %v323 = vmul.f32 %v319, %v319
  %v324 = vmul.f32 %v320, %v320
  %v325 = vsel %vm70, %v321, 0.0
  %v326 = vsel %vm70, %v322, 0.0
  %v327 = vadd.f32 %v325, %v326
  %v328 = vsel %vm70, %v323, 0.0
  %v329 = vadd.f32 %v327, %v328
  %v330 = vsel %vm70, %v324, 0.0
  %v331 = vadd.f32 %v329, %v330
  %332 = vadd.xlane.f32.xlu0 %v331
  %v333 = vpop.xlane.xlu0 %332
  %v334 = vmul.f32 %v333, 0.001953125
  %v335 = vadd.f32 %v334, 1e-05
  %v336 = vrsqrt.pop %v335
  %v337 = vmul.f32 %v317, %v336
  %v338 = vmul.f32 %v318, %v336
  %v339 = vmul.f32 %v319, %v336
  %v340 = vmul.f32 %v320, %v336
  %v341 = vadd.f32 %v303, %v337
  %v342 = vadd.f32 %v304, %v338
  %v343 = vadd.f32 %v305, %v339
  %v344 = vadd.f32 %v306, %v340
  %v345 = vmax.f32 %v341, 0.0
  %v346 = vmax.f32 %v342, 0.0
  %v347 = vmax.f32 %v343, 0.0
  %v348 = vmax.f32 %v344, 0.0
  %v349 = vld [vmem:[%s5] sm:$0x3]
  %351 = vset.pattern.permute.xlu0 0
  %352 = vperm.xlu0 %351, %v349
  %v353 = vpop.permute.xlu0 %352
  %v355 = vmul.f32 %v345, %v353
  %v356 = vmul.f32 %v346, %v353
  %v357 = vmul.f32 %v347, %v353
  %v358 = vmul.f32 %v348, %v353
  %v359 = vsel %vm70, %v355, 0.0
  %v360 = vrot.slane %v359, 4
  %v361 = vadd.f32 %v359, %v360
  %v362 = vrot.slane %v361, 2
  %v363 = vadd.f32 %v361, %v362
  %v364 = vrot.slane %v363, 1
  %v365 = vadd.f32 %v363, %v364
  %v366 = vsel %vm70, %v356, 0.0
  %v367 = vrot.slane %v366, 4
  %v368 = vadd.f32 %v366, %v367
  %v369 = vrot.slane %v368, 2
  %v370 = vadd.f32 %v368, %v369
  %v371 = vrot.slane %v370, 1
  %v372 = vadd.f32 %v370, %v371
  %v373 = vsel %vm70, %v357, 0.0
  %v374 = vrot.slane %v373, 4
  %v375 = vadd.f32 %v373, %v374
  %v376 = vrot.slane %v375, 2
  %v377 = vadd.f32 %v375, %v376
  %v378 = vrot.slane %v377, 1
  %v379 = vadd.f32 %v377, %v378
  %v380 = vsel %vm70, %v358, 0.0
  %v381 = vrot.slane %v380, 4
  %v382 = vadd.f32 %v380, %v381
  %v383 = vrot.slane %v382, 2
  %v384 = vadd.f32 %v382, %v383
  %v385 = vrot.slane %v384, 1
  %v386 = vadd.f32 %v384, %v385
  %v387 = vadd.f32 %v365, %v372
  %v388 = vadd.f32 %v387, %v379
  %v389 = vadd.f32 %v388, %v386
  %390 = vadd.xlane.f32.xlu0 %v389
  %v391 = vpop.xlane.xlu0 %390
  %v392 = vmul.f32 %v391, 0.001953125
  %v393 = vsub.f32 %v365, %v392
  %v394 = vsub.f32 %v372, %v392
  %v395 = vsub.f32 %v379, %v392
  %v396 = vsub.f32 %v386, %v392
  %v397 = vmul.f32 %v393, %v393
  %v398 = vmul.f32 %v394, %v394
  %v399 = vmul.f32 %v395, %v395
  %v400 = vmul.f32 %v396, %v396
  %v401 = vadd.f32 %v397, %v398
  %v402 = vadd.f32 %v401, %v399
  %v403 = vadd.f32 %v402, %v400
  %404 = vadd.xlane.f32.xlu0 %v403
  %v405 = vpop.xlane.xlu0 %404
  %v406 = vmul.f32 %v405, 0.001953125
  %v407 = vadd.f32 %v406, 1e-05
  %v408 = vrsqrt.pop %v407
  %v409 = vmul.f32 %v393, %v408
  %v410 = vmul.f32 %v394, %v408
  %v411 = vmul.f32 %v395, %v408
  %v412 = vmul.f32 %v396, %v408
  %v413 = vsub.f32 0.0, %v409
  %v414 = vsub.f32 0.0, %v410
  %v415 = vsub.f32 0.0, %v411
  %v416 = vsub.f32 0.0, %v412
  %v417 = vmul.f32 %v413, 1.442695
  %v418 = vpow.pop %v417
  %v419 = vmul.f32 %v414, 1.442695
  %v420 = vpow.pop %v419
  %v421 = vmul.f32 %v415, 1.442695
  %v422 = vpow.pop %v421
  %v423 = vmul.f32 %v416, 1.442695
  %v424 = vpow.pop %v423
  %v425 = vadd.f32 %v418, 1.0
  %v426 = vadd.f32 %v420, 1.0
  %v427 = vadd.f32 %v422, 1.0
  %v428 = vadd.f32 %v424, 1.0
  %v429 = vrcp.pop %v425
  %v430 = vrcp.pop %v426
  %v431 = vrcp.pop %v427
  %v432 = vrcp.pop %v428
  %v437 = vcombine.low %v429, %v430
  %v438 = vcombine.low %v431, %v432
  %v441 = vmul.f32 %v44, %v437
  %v442 = vmul.f32 %v45, %v438
  %v445 = vcombine.high %v441, %v441
  %v446 = vcombine.high %v442, %v442
  %449 = vrot.lane.b32.xlu0 %v441, 17
  %v450 = vpop.permute.xlu0 %449
  %451 = vrot.lane.b32.xlu0 %v445, 17
  %v452 = vpop.permute.xlu0 %451
  %453 = vrot.lane.b32.xlu0 %v442, 17
  %v454 = vpop.permute.xlu0 %453
  %455 = vrot.lane.b32.xlu0 %v446, 17
  %v456 = vpop.permute.xlu0 %455
  %v457 = vlaneseq
  %v458 = vand.u32 %v457, 127
  %vm459 = vcmp.lt.s32.totalorder %v458, 17
  %v460 = vsel %vm459, %v454, %v456
  %v461 = vsel %vm459, %v452, %v454
  %v462 = vsel %vm459, %v450, %v452
  %v463 = vsel %vm459, %v456, %v450
  %v464 = vlaneseq
  %v465 = vshrl.u32 %v464, 7
  %v466 = vsub.s32 0, %v465
  %v467 = vrot.slane %v36, %v466
  %v468 = vlaneseq
  %v469 = vshrl.u32 %v468, 7
  %v470 = vsub.s32 0, %v469
  %v471 = vrot.slane %v37, %v470
  %v472 = vlaneseq
  %v473 = vshrl.u32 %v472, 7
  %v474 = vsub.s32 0, %v473
  %v475 = vrot.slane %v38, %v474
  %v476 = vlaneseq
  %v477 = vshrl.u32 %v476, 7
  %v478 = vsub.s32 0, %v477
  %v479 = vrot.slane %v39, %v478
  %v480 = vmul.f32 %v463, %v467
  %v481 = vmul.f32 %v462, %v471
  %v482 = vmul.f32 %v461, %v475
  %v483 = vmul.f32 %v460, %v479
  %v484 = vld [vmem:[%s6] sm:$0x3]
  %v485 = vpack.c.bf16 %v480, %v480
  %v486 = vpack.c.bf16 %v481, %v481
  %v487 = vpack.c.bf16 %v482, %v482
  %v488 = vpack.c.bf16 %v483, %v483
  %489 = vrot.lane.b32.xlu0 %v441, 16
  %v490 = vpop.permute.xlu0 %489
  %491 = vrot.lane.b32.xlu0 %v445, 16
  %v492 = vpop.permute.xlu0 %491
  %493 = vrot.lane.b32.xlu0 %v442, 16
  %v494 = vpop.permute.xlu0 %493
  %495 = vrot.lane.b32.xlu0 %v446, 16
  %v496 = vpop.permute.xlu0 %495
  %vm497 = vcmp.lt.s32.totalorder %v458, 16
  %v498 = vsel %vm497, %v494, %v496
  %v499 = vsel %vm497, %v492, %v494
  %v500 = vsel %vm497, %v490, %v492
  %v501 = vsel %vm497, %v496, %v490
  %v502 = vlaneseq
  %v503 = vshrl.u32 %v502, 7
  %v504 = vsub.s32 1, %v503
  %v505 = vrot.slane %v36, %v504
  %v506 = vlaneseq
  %v507 = vshrl.u32 %v506, 7
  %v508 = vsub.s32 1, %v507
  %v509 = vrot.slane %v37, %v508
  %v510 = vlaneseq
  %v511 = vshrl.u32 %v510, 7
  %v512 = vsub.s32 1, %v511
  %v513 = vrot.slane %v38, %v512
  %v514 = vlaneseq
  %v515 = vshrl.u32 %v514, 7
  %v516 = vsub.s32 1, %v515
  %v517 = vrot.slane %v39, %v516
  %v518 = vmul.f32 %v501, %v505
  %v519 = vmul.f32 %v500, %v509
  %v520 = vmul.f32 %v499, %v513
  %v521 = vmul.f32 %v498, %v517
  %s522 = scalar_lea.vmem %s6, 2
  %v523 = vld [vmem:[%s522] sm:$0x3]
  %v524 = vpack.c.bf16 %v518, %v518
  %v525 = vpack.c.bf16 %v519, %v519
  %v526 = vpack.c.bf16 %v520, %v520
  %v527 = vpack.c.bf16 %v521, %v521
  %v529 = vsel %vm66, %v523, 0
  %v532 = vsel %vm70, %v524, 0
  %v535 = vsel %vm70, %v525, 0
  %v538 = vsel %vm70, %v526, 0
  %v541 = vsel %vm70, %v527, 0
  %543 = vmatprep.subr.bf16.mxu0 0
  %544 = vmatpush1.bf16.msra.mxu0 0
  %545 = vmatprep.subr.bf16.mxu0 0
  %546 = vmatpush1.bf16.msra.mxu0 0
  %547 = vmatprep.subr.bf16.mxu0 0
  %548 = vmatpush1.bf16.msra.mxu0 0
  %549 = vmatprep.subr.bf16.mxu0 0
  %550 = vmatpush1.bf16.msra.mxu0 0
  %551 = vmatprep.subr.bf16.mxu0 0
  %552 = vmatpush1.bf16.msra.mxu0 0
  %553 = vmatprep.subr.bf16.mxu0 0
  %554 = vmatpush1.bf16.msra.mxu0 0
  %555 = vmatprep.subr.bf16.mxu0 0
  %556 = vmatpush1.bf16.msra.mxu0 0
  %557 = vmatprep.subr.bf16.mxu0 %v535
  %558 = vmatpush1.bf16.msra.mxu0 %v532
  %559 = vmatprep.subr.bf16.mxu0 0
  %560 = vmatpush2.bf16.msra.mxu0 0
  %561 = vmatprep.subr.bf16.mxu0 0
  %562 = vmatpush2.bf16.msra.mxu0 0
  %563 = vmatprep.subr.bf16.mxu0 0
  %564 = vmatpush2.bf16.msra.mxu0 0
  %565 = vmatprep.subr.bf16.mxu0 0
  %566 = vmatpush2.bf16.msra.mxu0 0
  %567 = vmatprep.subr.bf16.mxu0 0
  %568 = vmatpush2.bf16.msra.mxu0 0
  %569 = vmatprep.subr.bf16.mxu0 0
  %570 = vmatpush2.bf16.msra.mxu0 0
  %571 = vmatprep.subr.bf16.mxu0 0
  %572 = vmatpush2.bf16.msra.mxu0 0
  %573 = vmatprep.subr.bf16.mxu0 0
  %574 = vmatpush2.bf16.msra.mxu0 0
  %575 = vmatprep.mubr.bf16.mxu0 0
  %576 = vmatmul.mubr.bf16.gmra.mxu0 %v529
  %v577 = vpop.f32.mrf.mxu0
  %v578 = vadd.f32 0.0, %v577
  %v579 = vpop.f32.mrf.mxu0
  %v580 = vadd.f32 0.0, %v579
  %v581 = vpop.f32.mrf.mxu0
  %v582 = vpop.f32.mrf.mxu0
  %583 = vdwg.mxu0
  %584 = vmatprep.subr.bf16.mxu0 0
  %585 = vmatpush1.bf16.msra.mxu0 0
  %586 = vmatprep.subr.bf16.mxu0 0
  %587 = vmatpush1.bf16.msra.mxu0 0
  %588 = vmatprep.subr.bf16.mxu0 0
  %589 = vmatpush1.bf16.msra.mxu0 0
  %590 = vmatprep.subr.bf16.mxu0 0
  %591 = vmatpush1.bf16.msra.mxu0 0
  %592 = vmatprep.subr.bf16.mxu0 0
  %593 = vmatpush1.bf16.msra.mxu0 0
  %594 = vmatprep.subr.bf16.mxu0 0
  %595 = vmatpush1.bf16.msra.mxu0 0
  %596 = vmatprep.subr.bf16.mxu0 0
  %597 = vmatpush1.bf16.msra.mxu0 0
  %598 = vmatprep.subr.bf16.mxu0 %v541
  %599 = vmatpush1.bf16.msra.mxu0 %v538
  %600 = vmatprep.subr.bf16.mxu0 0
  %601 = vmatpush2.bf16.msra.mxu0 0
  %602 = vmatprep.subr.bf16.mxu0 0
  %603 = vmatpush2.bf16.msra.mxu0 0
  %604 = vmatprep.subr.bf16.mxu0 0
  %605 = vmatpush2.bf16.msra.mxu0 0
  %606 = vmatprep.subr.bf16.mxu0 0
  %607 = vmatpush2.bf16.msra.mxu0 0
  %608 = vmatprep.subr.bf16.mxu0 0
  %609 = vmatpush2.bf16.msra.mxu0 0
  %610 = vmatprep.subr.bf16.mxu0 0
  %611 = vmatpush2.bf16.msra.mxu0 0
  %612 = vmatprep.subr.bf16.mxu0 0
  %613 = vmatpush2.bf16.msra.mxu0 0
  %614 = vmatprep.subr.bf16.mxu0 0
  %615 = vmatpush2.bf16.msra.mxu0 0
  %616 = vmatprep.mubr.bf16.mxu0 0
  %617 = vmatmul.mubr.bf16.gmra.mxu0 %v529
  %v618 = vpop.f32.mrf.mxu0
  %v619 = vadd.f32 0.0, %v618
  %v620 = vpop.f32.mrf.mxu0
  %v621 = vadd.f32 0.0, %v620
  %v622 = vpop.f32.mrf.mxu0
  %v623 = vpop.f32.mrf.mxu0
  %624 = vdwg.mxu0
  %v626 = vsel %vm66, %v484, 0
  %v629 = vsel %vm70, %v485, 0
  %v632 = vsel %vm70, %v486, 0
  %v635 = vsel %vm70, %v487, 0
  %v638 = vsel %vm70, %v488, 0
  %640 = vmatprep.subr.bf16.mxu0 0
  %641 = vmatpush1.bf16.msra.mxu0 0
  %642 = vmatprep.subr.bf16.mxu0 0
  %643 = vmatpush1.bf16.msra.mxu0 0
  %644 = vmatprep.subr.bf16.mxu0 0
  %645 = vmatpush1.bf16.msra.mxu0 0
  %646 = vmatprep.subr.bf16.mxu0 0
  %647 = vmatpush1.bf16.msra.mxu0 0
  %648 = vmatprep.subr.bf16.mxu0 0
  %649 = vmatpush1.bf16.msra.mxu0 0
  %650 = vmatprep.subr.bf16.mxu0 0
  %651 = vmatpush1.bf16.msra.mxu0 0
  %652 = vmatprep.subr.bf16.mxu0 0
  %653 = vmatpush1.bf16.msra.mxu0 0
  %654 = vmatprep.subr.bf16.mxu0 %v632
  %655 = vmatpush1.bf16.msra.mxu0 %v629
  %656 = vmatprep.subr.bf16.mxu0 0
  %657 = vmatpush2.bf16.msra.mxu0 0
  %658 = vmatprep.subr.bf16.mxu0 0
  %659 = vmatpush2.bf16.msra.mxu0 0
  %660 = vmatprep.subr.bf16.mxu0 0
  %661 = vmatpush2.bf16.msra.mxu0 0
  %662 = vmatprep.subr.bf16.mxu0 0
  %663 = vmatpush2.bf16.msra.mxu0 0
  %664 = vmatprep.subr.bf16.mxu0 0
  %665 = vmatpush2.bf16.msra.mxu0 0
  %666 = vmatprep.subr.bf16.mxu0 0
  %667 = vmatpush2.bf16.msra.mxu0 0
  %668 = vmatprep.subr.bf16.mxu0 0
  %669 = vmatpush2.bf16.msra.mxu0 0
  %670 = vmatprep.subr.bf16.mxu0 0
  %671 = vmatpush2.bf16.msra.mxu0 0
  %672 = vmatprep.mubr.bf16.mxu0 0
  %673 = vmatmul.mubr.bf16.gmra.mxu0 %v626
  %v674 = vpop.f32.mrf.mxu0
  %v675 = vadd.f32 %v578, %v674
  %v676 = vpop.f32.mrf.mxu0
  %v677 = vadd.f32 %v580, %v676
  %v678 = vpop.f32.mrf.mxu0
  %v679 = vpop.f32.mrf.mxu0
  %680 = vdwg.mxu0
  %681 = vmatprep.subr.bf16.mxu0 0
  %682 = vmatpush1.bf16.msra.mxu0 0
  %683 = vmatprep.subr.bf16.mxu0 0
  %684 = vmatpush1.bf16.msra.mxu0 0
  %685 = vmatprep.subr.bf16.mxu0 0
  %686 = vmatpush1.bf16.msra.mxu0 0
  %687 = vmatprep.subr.bf16.mxu0 0
  %688 = vmatpush1.bf16.msra.mxu0 0
  %689 = vmatprep.subr.bf16.mxu0 0
  %690 = vmatpush1.bf16.msra.mxu0 0
  %691 = vmatprep.subr.bf16.mxu0 0
  %692 = vmatpush1.bf16.msra.mxu0 0
  %693 = vmatprep.subr.bf16.mxu0 0
  %694 = vmatpush1.bf16.msra.mxu0 0
  %695 = vmatprep.subr.bf16.mxu0 %v638
  %696 = vmatpush1.bf16.msra.mxu0 %v635
  %697 = vmatprep.subr.bf16.mxu0 0
  %698 = vmatpush2.bf16.msra.mxu0 0
  %699 = vmatprep.subr.bf16.mxu0 0
  %700 = vmatpush2.bf16.msra.mxu0 0
  %701 = vmatprep.subr.bf16.mxu0 0
  %702 = vmatpush2.bf16.msra.mxu0 0
  %703 = vmatprep.subr.bf16.mxu0 0
  %704 = vmatpush2.bf16.msra.mxu0 0
  %705 = vmatprep.subr.bf16.mxu0 0
  %706 = vmatpush2.bf16.msra.mxu0 0
  %707 = vmatprep.subr.bf16.mxu0 0
  %708 = vmatpush2.bf16.msra.mxu0 0
  %709 = vmatprep.subr.bf16.mxu0 0
  %710 = vmatpush2.bf16.msra.mxu0 0
  %711 = vmatprep.subr.bf16.mxu0 0
  %712 = vmatpush2.bf16.msra.mxu0 0
  %713 = vmatprep.mubr.bf16.mxu0 0
  %714 = vmatmul.mubr.bf16.gmra.mxu0 %v626
  %v715 = vpop.f32.mrf.mxu0
  %v716 = vadd.f32 %v619, %v715
  %v717 = vpop.f32.mrf.mxu0
  %v718 = vadd.f32 %v621, %v717
  %v719 = vpop.f32.mrf.mxu0
  %v720 = vpop.f32.mrf.mxu0
  %721 = vdwg.mxu0
  %722 = vrot.lane.b32.xlu0 %v441, 15
  %v723 = vpop.permute.xlu0 %722
  %724 = vrot.lane.b32.xlu0 %v445, 15
  %v725 = vpop.permute.xlu0 %724
  %726 = vrot.lane.b32.xlu0 %v442, 15
  %v727 = vpop.permute.xlu0 %726
  %728 = vrot.lane.b32.xlu0 %v446, 15
  %v729 = vpop.permute.xlu0 %728
  %vm730 = vcmp.lt.s32.totalorder %v458, 15
  %v731 = vsel %vm730, %v727, %v729
  %v732 = vsel %vm730, %v725, %v727
  %v733 = vsel %vm730, %v723, %v725
  %v734 = vsel %vm730, %v729, %v723
  %v735 = vlaneseq
  %v736 = vshrl.u32 %v735, 7
  %v737 = vsub.s32 2, %v736
  %v738 = vrot.slane %v36, %v737
  %v739 = vlaneseq
  %v740 = vshrl.u32 %v739, 7
  %v741 = vsub.s32 2, %v740
  %v742 = vrot.slane %v37, %v741
  %v743 = vlaneseq
  %v744 = vshrl.u32 %v743, 7
  %v745 = vsub.s32 2, %v744
  %v746 = vrot.slane %v38, %v745
  %v747 = vlaneseq
  %v748 = vshrl.u32 %v747, 7
  %v749 = vsub.s32 2, %v748
  %v750 = vrot.slane %v39, %v749
  %v751 = vmul.f32 %v734, %v738
  %v752 = vmul.f32 %v733, %v742
  %v753 = vmul.f32 %v732, %v746
  %v754 = vmul.f32 %v731, %v750
  %s755 = scalar_lea.vmem %s6, 4
  %v756 = vld [vmem:[%s755] sm:$0x3]
  %v757 = vpack.c.bf16 %v751, %v751
  %v758 = vpack.c.bf16 %v752, %v752
  %v759 = vpack.c.bf16 %v753, %v753
  %v760 = vpack.c.bf16 %v754, %v754
  %v762 = vsel %vm66, %v756, 0
  %v765 = vsel %vm70, %v757, 0
  %v768 = vsel %vm70, %v758, 0
  %v771 = vsel %vm70, %v759, 0
  %v774 = vsel %vm70, %v760, 0
  %776 = vmatprep.subr.bf16.mxu0 0
  %777 = vmatpush1.bf16.msra.mxu0 0
  %778 = vmatprep.subr.bf16.mxu0 0
  %779 = vmatpush1.bf16.msra.mxu0 0
  %780 = vmatprep.subr.bf16.mxu0 0
  %781 = vmatpush1.bf16.msra.mxu0 0
  %782 = vmatprep.subr.bf16.mxu0 0
  %783 = vmatpush1.bf16.msra.mxu0 0
  %784 = vmatprep.subr.bf16.mxu0 0
  %785 = vmatpush1.bf16.msra.mxu0 0
  %786 = vmatprep.subr.bf16.mxu0 0
  %787 = vmatpush1.bf16.msra.mxu0 0
  %788 = vmatprep.subr.bf16.mxu0 0
  %789 = vmatpush1.bf16.msra.mxu0 0
  %790 = vmatprep.subr.bf16.mxu0 %v768
  %791 = vmatpush1.bf16.msra.mxu0 %v765
  %792 = vmatprep.subr.bf16.mxu0 0
  %793 = vmatpush2.bf16.msra.mxu0 0
  %794 = vmatprep.subr.bf16.mxu0 0
  %795 = vmatpush2.bf16.msra.mxu0 0
  %796 = vmatprep.subr.bf16.mxu0 0
  %797 = vmatpush2.bf16.msra.mxu0 0
  %798 = vmatprep.subr.bf16.mxu0 0
  %799 = vmatpush2.bf16.msra.mxu0 0
  %800 = vmatprep.subr.bf16.mxu0 0
  %801 = vmatpush2.bf16.msra.mxu0 0
  %802 = vmatprep.subr.bf16.mxu0 0
  %803 = vmatpush2.bf16.msra.mxu0 0
  %804 = vmatprep.subr.bf16.mxu0 0
  %805 = vmatpush2.bf16.msra.mxu0 0
  %806 = vmatprep.subr.bf16.mxu0 0
  %807 = vmatpush2.bf16.msra.mxu0 0
  %808 = vmatprep.mubr.bf16.mxu0 0
  %809 = vmatmul.mubr.bf16.gmra.mxu0 %v762
  %v810 = vpop.f32.mrf.mxu0
  %v811 = vadd.f32 0.0, %v810
  %v812 = vpop.f32.mrf.mxu0
  %v813 = vadd.f32 0.0, %v812
  %v814 = vpop.f32.mrf.mxu0
  %v815 = vpop.f32.mrf.mxu0
  %816 = vdwg.mxu0
  %817 = vmatprep.subr.bf16.mxu0 0
  %818 = vmatpush1.bf16.msra.mxu0 0
  %819 = vmatprep.subr.bf16.mxu0 0
  %820 = vmatpush1.bf16.msra.mxu0 0
  %821 = vmatprep.subr.bf16.mxu0 0
  %822 = vmatpush1.bf16.msra.mxu0 0
  %823 = vmatprep.subr.bf16.mxu0 0
  %824 = vmatpush1.bf16.msra.mxu0 0
  %825 = vmatprep.subr.bf16.mxu0 0
  %826 = vmatpush1.bf16.msra.mxu0 0
  %827 = vmatprep.subr.bf16.mxu0 0
  %828 = vmatpush1.bf16.msra.mxu0 0
  %829 = vmatprep.subr.bf16.mxu0 0
  %830 = vmatpush1.bf16.msra.mxu0 0
  %831 = vmatprep.subr.bf16.mxu0 %v774
  %832 = vmatpush1.bf16.msra.mxu0 %v771
  %833 = vmatprep.subr.bf16.mxu0 0
  %834 = vmatpush2.bf16.msra.mxu0 0
  %835 = vmatprep.subr.bf16.mxu0 0
  %836 = vmatpush2.bf16.msra.mxu0 0
  %837 = vmatprep.subr.bf16.mxu0 0
  %838 = vmatpush2.bf16.msra.mxu0 0
  %839 = vmatprep.subr.bf16.mxu0 0
  %840 = vmatpush2.bf16.msra.mxu0 0
  %841 = vmatprep.subr.bf16.mxu0 0
  %842 = vmatpush2.bf16.msra.mxu0 0
  %843 = vmatprep.subr.bf16.mxu0 0
  %844 = vmatpush2.bf16.msra.mxu0 0
  %845 = vmatprep.subr.bf16.mxu0 0
  %846 = vmatpush2.bf16.msra.mxu0 0
  %847 = vmatprep.subr.bf16.mxu0 0
  %848 = vmatpush2.bf16.msra.mxu0 0
  %849 = vmatprep.mubr.bf16.mxu0 0
  %850 = vmatmul.mubr.bf16.gmra.mxu0 %v762
  %v851 = vpop.f32.mrf.mxu0
  %v852 = vadd.f32 0.0, %v851
  %v853 = vpop.f32.mrf.mxu0
  %v854 = vadd.f32 0.0, %v853
  %v855 = vpop.f32.mrf.mxu0
  %v856 = vpop.f32.mrf.mxu0
  %857 = vdwg.mxu0
  %v858 = vadd.f32 %v675, %v811
  %v859 = vadd.f32 %v677, %v813
  %v860 = vadd.f32 %v716, %v852
  %v861 = vadd.f32 %v718, %v854
  %862 = vrot.lane.b32.xlu0 %v441, 1
  %v863 = vpop.permute.xlu0 %862
  %864 = vrot.lane.b32.xlu0 %v445, 1
  %v865 = vpop.permute.xlu0 %864
  %866 = vrot.lane.b32.xlu0 %v442, 1
  %v867 = vpop.permute.xlu0 %866
  %868 = vrot.lane.b32.xlu0 %v446, 1
  %v869 = vpop.permute.xlu0 %868
  %vm870 = vcmp.lt.s32.totalorder %v458, 1
  %v871 = vsel %vm870, %v867, %v869
  %v872 = vsel %vm870, %v865, %v867
  %v873 = vsel %vm870, %v863, %v865
  %v874 = vsel %vm870, %v869, %v863
  %v875 = vlaneseq
  %v876 = vshrl.u32 %v875, 7
  %v877 = vsub.s32 3, %v876
  %v878 = vrot.slane %v36, %v877
  %v879 = vlaneseq
  %v880 = vshrl.u32 %v879, 7
  %v881 = vsub.s32 3, %v880
  %v882 = vrot.slane %v37, %v881
  %v883 = vlaneseq
  %v884 = vshrl.u32 %v883, 7
  %v885 = vsub.s32 3, %v884
  %v886 = vrot.slane %v38, %v885
  %v887 = vlaneseq
  %v888 = vshrl.u32 %v887, 7
  %v889 = vsub.s32 3, %v888
  %v890 = vrot.slane %v39, %v889
  %v891 = vmul.f32 %v874, %v878
  %v892 = vmul.f32 %v873, %v882
  %v893 = vmul.f32 %v872, %v886
  %v894 = vmul.f32 %v871, %v890
  %s895 = scalar_lea.vmem %s6, 6
  %v896 = vld [vmem:[%s895] sm:$0x3]
  %v897 = vpack.c.bf16 %v891, %v891
  %v898 = vpack.c.bf16 %v892, %v892
  %v899 = vpack.c.bf16 %v893, %v893
  %v900 = vpack.c.bf16 %v894, %v894
  %v902 = vsel %vm66, %v896, 0
  %v905 = vsel %vm70, %v897, 0
  %v908 = vsel %vm70, %v898, 0
  %v911 = vsel %vm70, %v899, 0
  %v914 = vsel %vm70, %v900, 0
  %916 = vmatprep.subr.bf16.mxu0 0
  %917 = vmatpush1.bf16.msra.mxu0 0
  %918 = vmatprep.subr.bf16.mxu0 0
  %919 = vmatpush1.bf16.msra.mxu0 0
  %920 = vmatprep.subr.bf16.mxu0 0
  %921 = vmatpush1.bf16.msra.mxu0 0
  %922 = vmatprep.subr.bf16.mxu0 0
  %923 = vmatpush1.bf16.msra.mxu0 0
  %924 = vmatprep.subr.bf16.mxu0 0
  %925 = vmatpush1.bf16.msra.mxu0 0
  %926 = vmatprep.subr.bf16.mxu0 0
  %927 = vmatpush1.bf16.msra.mxu0 0
  %928 = vmatprep.subr.bf16.mxu0 0
  %929 = vmatpush1.bf16.msra.mxu0 0
  %930 = vmatprep.subr.bf16.mxu0 %v908
  %931 = vmatpush1.bf16.msra.mxu0 %v905
  %932 = vmatprep.subr.bf16.mxu0 0
  %933 = vmatpush2.bf16.msra.mxu0 0
  %934 = vmatprep.subr.bf16.mxu0 0
  %935 = vmatpush2.bf16.msra.mxu0 0
  %936 = vmatprep.subr.bf16.mxu0 0
  %937 = vmatpush2.bf16.msra.mxu0 0
  %938 = vmatprep.subr.bf16.mxu0 0
  %939 = vmatpush2.bf16.msra.mxu0 0
  %940 = vmatprep.subr.bf16.mxu0 0
  %941 = vmatpush2.bf16.msra.mxu0 0
  %942 = vmatprep.subr.bf16.mxu0 0
  %943 = vmatpush2.bf16.msra.mxu0 0
  %944 = vmatprep.subr.bf16.mxu0 0
  %945 = vmatpush2.bf16.msra.mxu0 0
  %946 = vmatprep.subr.bf16.mxu0 0
  %947 = vmatpush2.bf16.msra.mxu0 0
  %948 = vmatprep.mubr.bf16.mxu0 0
  %949 = vmatmul.mubr.bf16.gmra.mxu0 %v902
  %v950 = vpop.f32.mrf.mxu0
  %v951 = vadd.f32 0.0, %v950
  %v952 = vpop.f32.mrf.mxu0
  %v953 = vadd.f32 0.0, %v952
  %v954 = vpop.f32.mrf.mxu0
  %v955 = vpop.f32.mrf.mxu0
  %956 = vdwg.mxu0
  %957 = vmatprep.subr.bf16.mxu0 0
  %958 = vmatpush1.bf16.msra.mxu0 0
  %959 = vmatprep.subr.bf16.mxu0 0
  %960 = vmatpush1.bf16.msra.mxu0 0
  %961 = vmatprep.subr.bf16.mxu0 0
  %962 = vmatpush1.bf16.msra.mxu0 0
  %963 = vmatprep.subr.bf16.mxu0 0
  %964 = vmatpush1.bf16.msra.mxu0 0
  %965 = vmatprep.subr.bf16.mxu0 0
  %966 = vmatpush1.bf16.msra.mxu0 0
  %967 = vmatprep.subr.bf16.mxu0 0
  %968 = vmatpush1.bf16.msra.mxu0 0
  %969 = vmatprep.subr.bf16.mxu0 0
  %970 = vmatpush1.bf16.msra.mxu0 0
  %971 = vmatprep.subr.bf16.mxu0 %v914
  %972 = vmatpush1.bf16.msra.mxu0 %v911
  %973 = vmatprep.subr.bf16.mxu0 0
  %974 = vmatpush2.bf16.msra.mxu0 0
  %975 = vmatprep.subr.bf16.mxu0 0
  %976 = vmatpush2.bf16.msra.mxu0 0
  %977 = vmatprep.subr.bf16.mxu0 0
  %978 = vmatpush2.bf16.msra.mxu0 0
  %979 = vmatprep.subr.bf16.mxu0 0
  %980 = vmatpush2.bf16.msra.mxu0 0
  %981 = vmatprep.subr.bf16.mxu0 0
  %982 = vmatpush2.bf16.msra.mxu0 0
  %983 = vmatprep.subr.bf16.mxu0 0
  %984 = vmatpush2.bf16.msra.mxu0 0
  %985 = vmatprep.subr.bf16.mxu0 0
  %986 = vmatpush2.bf16.msra.mxu0 0
  %987 = vmatprep.subr.bf16.mxu0 0
  %988 = vmatpush2.bf16.msra.mxu0 0
  %989 = vmatprep.mubr.bf16.mxu0 0
  %990 = vmatmul.mubr.bf16.gmra.mxu0 %v902
  %v991 = vpop.f32.mrf.mxu0
  %v992 = vadd.f32 0.0, %v991
  %v993 = vpop.f32.mrf.mxu0
  %v994 = vadd.f32 0.0, %v993
  %v995 = vpop.f32.mrf.mxu0
  %v996 = vpop.f32.mrf.mxu0
  %997 = vdwg.mxu0
  %v998 = vadd.f32 %v858, %v951
  %v999 = vadd.f32 %v859, %v953
  %v1000 = vadd.f32 %v860, %v992
  %v1001 = vadd.f32 %v861, %v994
  %s1002 = scalar_lea.vmem %s6, 8
  %v1003 = vld [vmem:[%s1002] sm:$0x3]
  %v1004 = vpack.c.bf16 %v441, %v441
  %v1005 = vpack.c.bf16 %v445, %v445
  %v1006 = vpack.c.bf16 %v442, %v442
  %v1007 = vpack.c.bf16 %v446, %v446
  %v1009 = vsel %vm66, %v1003, 0
  %v1012 = vsel %vm70, %v1004, 0
  %v1015 = vsel %vm70, %v1005, 0
  %v1018 = vsel %vm70, %v1006, 0
  %v1021 = vsel %vm70, %v1007, 0
  %1023 = vmatprep.subr.bf16.mxu0 0
  %1024 = vmatpush1.bf16.msra.mxu0 0
  %1025 = vmatprep.subr.bf16.mxu0 0
  %1026 = vmatpush1.bf16.msra.mxu0 0
  %1027 = vmatprep.subr.bf16.mxu0 0
  %1028 = vmatpush1.bf16.msra.mxu0 0
  %1029 = vmatprep.subr.bf16.mxu0 0
  %1030 = vmatpush1.bf16.msra.mxu0 0
  %1031 = vmatprep.subr.bf16.mxu0 0
  %1032 = vmatpush1.bf16.msra.mxu0 0
  %1033 = vmatprep.subr.bf16.mxu0 0
  %1034 = vmatpush1.bf16.msra.mxu0 0
  %1035 = vmatprep.subr.bf16.mxu0 0
  %1036 = vmatpush1.bf16.msra.mxu0 0
  %1037 = vmatprep.subr.bf16.mxu0 %v1015
  %1038 = vmatpush1.bf16.msra.mxu0 %v1012
  %1039 = vmatprep.subr.bf16.mxu0 0
  %1040 = vmatpush2.bf16.msra.mxu0 0
  %1041 = vmatprep.subr.bf16.mxu0 0
  %1042 = vmatpush2.bf16.msra.mxu0 0
  %1043 = vmatprep.subr.bf16.mxu0 0
  %1044 = vmatpush2.bf16.msra.mxu0 0
  %1045 = vmatprep.subr.bf16.mxu0 0
  %1046 = vmatpush2.bf16.msra.mxu0 0
  %1047 = vmatprep.subr.bf16.mxu0 0
  %1048 = vmatpush2.bf16.msra.mxu0 0
  %1049 = vmatprep.subr.bf16.mxu0 0
  %1050 = vmatpush2.bf16.msra.mxu0 0
  %1051 = vmatprep.subr.bf16.mxu0 0
  %1052 = vmatpush2.bf16.msra.mxu0 0
  %1053 = vmatprep.subr.bf16.mxu0 0
  %1054 = vmatpush2.bf16.msra.mxu0 0
  %1055 = vmatprep.mubr.bf16.mxu0 0
  %1056 = vmatmul.mubr.bf16.gmra.mxu0 %v1009
  %v1057 = vpop.f32.mrf.mxu0
  %v1058 = vadd.f32 0.0, %v1057
  %v1059 = vpop.f32.mrf.mxu0
  %v1060 = vadd.f32 0.0, %v1059
  %v1061 = vpop.f32.mrf.mxu0
  %v1062 = vpop.f32.mrf.mxu0
  %1063 = vdwg.mxu0
  %1064 = vmatprep.subr.bf16.mxu0 0
  %1065 = vmatpush1.bf16.msra.mxu0 0
  %1066 = vmatprep.subr.bf16.mxu0 0
  %1067 = vmatpush1.bf16.msra.mxu0 0
  %1068 = vmatprep.subr.bf16.mxu0 0
  %1069 = vmatpush1.bf16.msra.mxu0 0
  %1070 = vmatprep.subr.bf16.mxu0 0
  %1071 = vmatpush1.bf16.msra.mxu0 0
  %1072 = vmatprep.subr.bf16.mxu0 0
  %1073 = vmatpush1.bf16.msra.mxu0 0
  %1074 = vmatprep.subr.bf16.mxu0 0
  %1075 = vmatpush1.bf16.msra.mxu0 0
  %1076 = vmatprep.subr.bf16.mxu0 0
  %1077 = vmatpush1.bf16.msra.mxu0 0
  %1078 = vmatprep.subr.bf16.mxu0 %v1021
  %1079 = vmatpush1.bf16.msra.mxu0 %v1018
  %1080 = vmatprep.subr.bf16.mxu0 0
  %1081 = vmatpush2.bf16.msra.mxu0 0
  %1082 = vmatprep.subr.bf16.mxu0 0
  %1083 = vmatpush2.bf16.msra.mxu0 0
  %1084 = vmatprep.subr.bf16.mxu0 0
  %1085 = vmatpush2.bf16.msra.mxu0 0
  %1086 = vmatprep.subr.bf16.mxu0 0
  %1087 = vmatpush2.bf16.msra.mxu0 0
  %1088 = vmatprep.subr.bf16.mxu0 0
  %1089 = vmatpush2.bf16.msra.mxu0 0
  %1090 = vmatprep.subr.bf16.mxu0 0
  %1091 = vmatpush2.bf16.msra.mxu0 0
  %1092 = vmatprep.subr.bf16.mxu0 0
  %1093 = vmatpush2.bf16.msra.mxu0 0
  %1094 = vmatprep.subr.bf16.mxu0 0
  %1095 = vmatpush2.bf16.msra.mxu0 0
  %1096 = vmatprep.mubr.bf16.mxu0 0
  %1097 = vmatmul.mubr.bf16.gmra.mxu0 %v1009
  %v1098 = vpop.f32.mrf.mxu0
  %v1099 = vadd.f32 0.0, %v1098
  %v1100 = vpop.f32.mrf.mxu0
  %v1101 = vadd.f32 0.0, %v1100
  %v1102 = vpop.f32.mrf.mxu0
  %v1103 = vpop.f32.mrf.mxu0
  %1104 = vdwg.mxu0
  %v1105 = vadd.f32 %v998, %v1058
  %v1106 = vadd.f32 %v999, %v1060
  %v1107 = vadd.f32 %v1000, %v1099
  %v1108 = vadd.f32 %v1001, %v1101
  %1109 = vrot.lane.b32.xlu0 %v441, 127
  %v1110 = vpop.permute.xlu0 %1109
  %1111 = vrot.lane.b32.xlu0 %v445, 127
  %v1112 = vpop.permute.xlu0 %1111
  %1113 = vrot.lane.b32.xlu0 %v442, 127
  %v1114 = vpop.permute.xlu0 %1113
  %1115 = vrot.lane.b32.xlu0 %v446, 127
  %v1116 = vpop.permute.xlu0 %1115
  %vm1117 = vcmp.lt.s32.totalorder %v458, 127
  %v1118 = vsel %vm1117, %v1114, %v1116
  %v1119 = vsel %vm1117, %v1112, %v1114
  %v1120 = vsel %vm1117, %v1110, %v1112
  %v1121 = vsel %vm1117, %v1116, %v1110
  %v1122 = vlaneseq
  %v1123 = vshrl.u32 %v1122, 7
  %v1124 = vsub.s32 5, %v1123
  %v1125 = vrot.slane %v36, %v1124
  %v1126 = vlaneseq
  %v1127 = vshrl.u32 %v1126, 7
  %v1128 = vsub.s32 5, %v1127
  %v1129 = vrot.slane %v37, %v1128
  %v1130 = vlaneseq
  %v1131 = vshrl.u32 %v1130, 7
  %v1132 = vsub.s32 5, %v1131
  %v1133 = vrot.slane %v38, %v1132
  %v1134 = vlaneseq
  %v1135 = vshrl.u32 %v1134, 7
  %v1136 = vsub.s32 5, %v1135
  %v1137 = vrot.slane %v39, %v1136
  %v1138 = vmul.f32 %v1120, %v1125
  %v1139 = vmul.f32 %v1119, %v1129
  %v1140 = vmul.f32 %v1118, %v1133
  %v1141 = vmul.f32 %v1121, %v1137
  %s1142 = scalar_lea.vmem %s6, 10
  %v1143 = vld [vmem:[%s1142] sm:$0x3]
  %v1144 = vpack.c.bf16 %v1138, %v1138
  %v1145 = vpack.c.bf16 %v1139, %v1139
  %v1146 = vpack.c.bf16 %v1140, %v1140
  %v1147 = vpack.c.bf16 %v1141, %v1141
  %v1149 = vsel %vm66, %v1143, 0
  %v1152 = vsel %vm70, %v1144, 0
  %v1155 = vsel %vm70, %v1145, 0
  %v1158 = vsel %vm70, %v1146, 0
  %v1161 = vsel %vm70, %v1147, 0
  %1163 = vmatprep.subr.bf16.mxu0 0
  %1164 = vmatpush1.bf16.msra.mxu0 0
  %1165 = vmatprep.subr.bf16.mxu0 0
  %1166 = vmatpush1.bf16.msra.mxu0 0
  %1167 = vmatprep.subr.bf16.mxu0 0
  %1168 = vmatpush1.bf16.msra.mxu0 0
  %1169 = vmatprep.subr.bf16.mxu0 0
  %1170 = vmatpush1.bf16.msra.mxu0 0
  %1171 = vmatprep.subr.bf16.mxu0 0
  %1172 = vmatpush1.bf16.msra.mxu0 0
  %1173 = vmatprep.subr.bf16.mxu0 0
  %1174 = vmatpush1.bf16.msra.mxu0 0
  %1175 = vmatprep.subr.bf16.mxu0 0
  %1176 = vmatpush1.bf16.msra.mxu0 0
  %1177 = vmatprep.subr.bf16.mxu0 %v1155
  %1178 = vmatpush1.bf16.msra.mxu0 %v1152
  %1179 = vmatprep.subr.bf16.mxu0 0
  %1180 = vmatpush2.bf16.msra.mxu0 0
  %1181 = vmatprep.subr.bf16.mxu0 0
  %1182 = vmatpush2.bf16.msra.mxu0 0
  %1183 = vmatprep.subr.bf16.mxu0 0
  %1184 = vmatpush2.bf16.msra.mxu0 0
  %1185 = vmatprep.subr.bf16.mxu0 0
  %1186 = vmatpush2.bf16.msra.mxu0 0
  %1187 = vmatprep.subr.bf16.mxu0 0
  %1188 = vmatpush2.bf16.msra.mxu0 0
  %1189 = vmatprep.subr.bf16.mxu0 0
  %1190 = vmatpush2.bf16.msra.mxu0 0
  %1191 = vmatprep.subr.bf16.mxu0 0
  %1192 = vmatpush2.bf16.msra.mxu0 0
  %1193 = vmatprep.subr.bf16.mxu0 0
  %1194 = vmatpush2.bf16.msra.mxu0 0
  %1195 = vmatprep.mubr.bf16.mxu0 0
  %1196 = vmatmul.mubr.bf16.gmra.mxu0 %v1149
  %v1197 = vpop.f32.mrf.mxu0
  %v1198 = vadd.f32 0.0, %v1197
  %v1199 = vpop.f32.mrf.mxu0
  %v1200 = vadd.f32 0.0, %v1199
  %v1201 = vpop.f32.mrf.mxu0
  %v1202 = vpop.f32.mrf.mxu0
  %1203 = vdwg.mxu0
  %1204 = vmatprep.subr.bf16.mxu0 0
  %1205 = vmatpush1.bf16.msra.mxu0 0
  %1206 = vmatprep.subr.bf16.mxu0 0
  %1207 = vmatpush1.bf16.msra.mxu0 0
  %1208 = vmatprep.subr.bf16.mxu0 0
  %1209 = vmatpush1.bf16.msra.mxu0 0
  %1210 = vmatprep.subr.bf16.mxu0 0
  %1211 = vmatpush1.bf16.msra.mxu0 0
  %1212 = vmatprep.subr.bf16.mxu0 0
  %1213 = vmatpush1.bf16.msra.mxu0 0
  %1214 = vmatprep.subr.bf16.mxu0 0
  %1215 = vmatpush1.bf16.msra.mxu0 0
  %1216 = vmatprep.subr.bf16.mxu0 0
  %1217 = vmatpush1.bf16.msra.mxu0 0
  %1218 = vmatprep.subr.bf16.mxu0 %v1161
  %1219 = vmatpush1.bf16.msra.mxu0 %v1158
  %1220 = vmatprep.subr.bf16.mxu0 0
  %1221 = vmatpush2.bf16.msra.mxu0 0
  %1222 = vmatprep.subr.bf16.mxu0 0
  %1223 = vmatpush2.bf16.msra.mxu0 0
  %1224 = vmatprep.subr.bf16.mxu0 0
  %1225 = vmatpush2.bf16.msra.mxu0 0
  %1226 = vmatprep.subr.bf16.mxu0 0
  %1227 = vmatpush2.bf16.msra.mxu0 0
  %1228 = vmatprep.subr.bf16.mxu0 0
  %1229 = vmatpush2.bf16.msra.mxu0 0
  %1230 = vmatprep.subr.bf16.mxu0 0
  %1231 = vmatpush2.bf16.msra.mxu0 0
  %1232 = vmatprep.subr.bf16.mxu0 0
  %1233 = vmatpush2.bf16.msra.mxu0 0
  %1234 = vmatprep.subr.bf16.mxu0 0
  %1235 = vmatpush2.bf16.msra.mxu0 0
  %1236 = vmatprep.mubr.bf16.mxu0 0
  %1237 = vmatmul.mubr.bf16.gmra.mxu0 %v1149
  %v1238 = vpop.f32.mrf.mxu0
  %v1239 = vadd.f32 0.0, %v1238
  %v1240 = vpop.f32.mrf.mxu0
  %v1241 = vadd.f32 0.0, %v1240
  %v1242 = vpop.f32.mrf.mxu0
  %v1243 = vpop.f32.mrf.mxu0
  %1244 = vdwg.mxu0
  %v1245 = vadd.f32 %v1105, %v1198
  %v1246 = vadd.f32 %v1106, %v1200
  %v1247 = vadd.f32 %v1107, %v1239
  %v1248 = vadd.f32 %v1108, %v1241
  %1249 = vrot.lane.b32.xlu0 %v441, 113
  %v1250 = vpop.permute.xlu0 %1249
  %1251 = vrot.lane.b32.xlu0 %v445, 113
  %v1252 = vpop.permute.xlu0 %1251
  %1253 = vrot.lane.b32.xlu0 %v442, 113
  %v1254 = vpop.permute.xlu0 %1253
  %1255 = vrot.lane.b32.xlu0 %v446, 113
  %v1256 = vpop.permute.xlu0 %1255
  %vm1257 = vcmp.lt.s32.totalorder %v458, 113
  %v1258 = vsel %vm1257, %v1254, %v1256
  %v1259 = vsel %vm1257, %v1252, %v1254
  %v1260 = vsel %vm1257, %v1250, %v1252
  %v1261 = vsel %vm1257, %v1256, %v1250
  %v1262 = vlaneseq
  %v1263 = vshrl.u32 %v1262, 7
  %v1264 = vsub.s32 6, %v1263
  %v1265 = vrot.slane %v36, %v1264
  %v1266 = vlaneseq
  %v1267 = vshrl.u32 %v1266, 7
  %v1268 = vsub.s32 6, %v1267
  %v1269 = vrot.slane %v37, %v1268
  %v1270 = vlaneseq
  %v1271 = vshrl.u32 %v1270, 7
  %v1272 = vsub.s32 6, %v1271
  %v1273 = vrot.slane %v38, %v1272
  %v1274 = vlaneseq
  %v1275 = vshrl.u32 %v1274, 7
  %v1276 = vsub.s32 6, %v1275
  %v1277 = vrot.slane %v39, %v1276
  %v1278 = vmul.f32 %v1260, %v1265
  %v1279 = vmul.f32 %v1259, %v1269
  %v1280 = vmul.f32 %v1258, %v1273
  %v1281 = vmul.f32 %v1261, %v1277
  %s1282 = scalar_lea.vmem %s6, 12
  %v1283 = vld [vmem:[%s1282] sm:$0x3]
  %v1284 = vpack.c.bf16 %v1278, %v1278
  %v1285 = vpack.c.bf16 %v1279, %v1279
  %v1286 = vpack.c.bf16 %v1280, %v1280
  %v1287 = vpack.c.bf16 %v1281, %v1281
  %v1289 = vsel %vm66, %v1283, 0
  %v1292 = vsel %vm70, %v1284, 0
  %v1295 = vsel %vm70, %v1285, 0
  %v1298 = vsel %vm70, %v1286, 0
  %v1301 = vsel %vm70, %v1287, 0
  %1303 = vmatprep.subr.bf16.mxu0 0
  %1304 = vmatpush1.bf16.msra.mxu0 0
  %1305 = vmatprep.subr.bf16.mxu0 0
  %1306 = vmatpush1.bf16.msra.mxu0 0
  %1307 = vmatprep.subr.bf16.mxu0 0
  %1308 = vmatpush1.bf16.msra.mxu0 0
  %1309 = vmatprep.subr.bf16.mxu0 0
  %1310 = vmatpush1.bf16.msra.mxu0 0
  %1311 = vmatprep.subr.bf16.mxu0 0
  %1312 = vmatpush1.bf16.msra.mxu0 0
  %1313 = vmatprep.subr.bf16.mxu0 0
  %1314 = vmatpush1.bf16.msra.mxu0 0
  %1315 = vmatprep.subr.bf16.mxu0 0
  %1316 = vmatpush1.bf16.msra.mxu0 0
  %1317 = vmatprep.subr.bf16.mxu0 %v1295
  %1318 = vmatpush1.bf16.msra.mxu0 %v1292
  %1319 = vmatprep.subr.bf16.mxu0 0
  %1320 = vmatpush2.bf16.msra.mxu0 0
  %1321 = vmatprep.subr.bf16.mxu0 0
  %1322 = vmatpush2.bf16.msra.mxu0 0
  %1323 = vmatprep.subr.bf16.mxu0 0
  %1324 = vmatpush2.bf16.msra.mxu0 0
  %1325 = vmatprep.subr.bf16.mxu0 0
  %1326 = vmatpush2.bf16.msra.mxu0 0
  %1327 = vmatprep.subr.bf16.mxu0 0
  %1328 = vmatpush2.bf16.msra.mxu0 0
  %1329 = vmatprep.subr.bf16.mxu0 0
  %1330 = vmatpush2.bf16.msra.mxu0 0
  %1331 = vmatprep.subr.bf16.mxu0 0
  %1332 = vmatpush2.bf16.msra.mxu0 0
  %1333 = vmatprep.subr.bf16.mxu0 0
  %1334 = vmatpush2.bf16.msra.mxu0 0
  %1335 = vmatprep.mubr.bf16.mxu0 0
  %1336 = vmatmul.mubr.bf16.gmra.mxu0 %v1289
  %v1337 = vpop.f32.mrf.mxu0
  %v1338 = vadd.f32 0.0, %v1337
  %v1339 = vpop.f32.mrf.mxu0
  %v1340 = vadd.f32 0.0, %v1339
  %v1341 = vpop.f32.mrf.mxu0
  %v1342 = vpop.f32.mrf.mxu0
  %1343 = vdwg.mxu0
  %1344 = vmatprep.subr.bf16.mxu0 0
  %1345 = vmatpush1.bf16.msra.mxu0 0
  %1346 = vmatprep.subr.bf16.mxu0 0
  %1347 = vmatpush1.bf16.msra.mxu0 0
  %1348 = vmatprep.subr.bf16.mxu0 0
  %1349 = vmatpush1.bf16.msra.mxu0 0
  %1350 = vmatprep.subr.bf16.mxu0 0
  %1351 = vmatpush1.bf16.msra.mxu0 0
  %1352 = vmatprep.subr.bf16.mxu0 0
  %1353 = vmatpush1.bf16.msra.mxu0 0
  %1354 = vmatprep.subr.bf16.mxu0 0
  %1355 = vmatpush1.bf16.msra.mxu0 0
  %1356 = vmatprep.subr.bf16.mxu0 0
  %1357 = vmatpush1.bf16.msra.mxu0 0
  %1358 = vmatprep.subr.bf16.mxu0 %v1301
  %1359 = vmatpush1.bf16.msra.mxu0 %v1298
  %1360 = vmatprep.subr.bf16.mxu0 0
  %1361 = vmatpush2.bf16.msra.mxu0 0
  %1362 = vmatprep.subr.bf16.mxu0 0
  %1363 = vmatpush2.bf16.msra.mxu0 0
  %1364 = vmatprep.subr.bf16.mxu0 0
  %1365 = vmatpush2.bf16.msra.mxu0 0
  %1366 = vmatprep.subr.bf16.mxu0 0
  %1367 = vmatpush2.bf16.msra.mxu0 0
  %1368 = vmatprep.subr.bf16.mxu0 0
  %1369 = vmatpush2.bf16.msra.mxu0 0
  %1370 = vmatprep.subr.bf16.mxu0 0
  %1371 = vmatpush2.bf16.msra.mxu0 0
  %1372 = vmatprep.subr.bf16.mxu0 0
  %1373 = vmatpush2.bf16.msra.mxu0 0
  %1374 = vmatprep.subr.bf16.mxu0 0
  %1375 = vmatpush2.bf16.msra.mxu0 0
  %1376 = vmatprep.mubr.bf16.mxu0 0
  %1377 = vmatmul.mubr.bf16.gmra.mxu0 %v1289
  %v1378 = vpop.f32.mrf.mxu0
  %v1379 = vadd.f32 0.0, %v1378
  %v1380 = vpop.f32.mrf.mxu0
  %v1381 = vadd.f32 0.0, %v1380
  %v1382 = vpop.f32.mrf.mxu0
  %v1383 = vpop.f32.mrf.mxu0
  %1384 = vdwg.mxu0
  %v1385 = vadd.f32 %v1245, %v1338
  %v1386 = vadd.f32 %v1246, %v1340
  %v1387 = vadd.f32 %v1247, %v1379
  %v1388 = vadd.f32 %v1248, %v1381
  %1389 = vrot.lane.b32.xlu0 %v441, 112
  %v1390 = vpop.permute.xlu0 %1389
  %1391 = vrot.lane.b32.xlu0 %v445, 112
  %v1392 = vpop.permute.xlu0 %1391
  %1393 = vrot.lane.b32.xlu0 %v442, 112
  %v1394 = vpop.permute.xlu0 %1393
  %1395 = vrot.lane.b32.xlu0 %v446, 112
  %v1396 = vpop.permute.xlu0 %1395
  %vm1397 = vcmp.lt.s32.totalorder %v458, 112
  %v1398 = vsel %vm1397, %v1394, %v1396
  %v1399 = vsel %vm1397, %v1392, %v1394
  %v1400 = vsel %vm1397, %v1390, %v1392
  %v1401 = vsel %vm1397, %v1396, %v1390
  %v1402 = vlaneseq
  %v1403 = vshrl.u32 %v1402, 7
  %v1404 = vsub.s32 7, %v1403
  %v1405 = vrot.slane %v36, %v1404
  %v1406 = vlaneseq
  %v1407 = vshrl.u32 %v1406, 7
  %v1408 = vsub.s32 7, %v1407
  %v1409 = vrot.slane %v37, %v1408
  %v1410 = vlaneseq
  %v1411 = vshrl.u32 %v1410, 7
  %v1412 = vsub.s32 7, %v1411
  %v1413 = vrot.slane %v38, %v1412
  %v1414 = vlaneseq
  %v1415 = vshrl.u32 %v1414, 7
  %v1416 = vsub.s32 7, %v1415
  %v1417 = vrot.slane %v39, %v1416
  %v1418 = vmul.f32 %v1400, %v1405
  %v1419 = vmul.f32 %v1399, %v1409
  %v1420 = vmul.f32 %v1398, %v1413
  %v1421 = vmul.f32 %v1401, %v1417
  %s1422 = scalar_lea.vmem %s6, 14
  %v1423 = vld [vmem:[%s1422] sm:$0x3]
  %v1424 = vpack.c.bf16 %v1418, %v1418
  %v1425 = vpack.c.bf16 %v1419, %v1419
  %v1426 = vpack.c.bf16 %v1420, %v1420
  %v1427 = vpack.c.bf16 %v1421, %v1421
  %v1429 = vsel %vm66, %v1423, 0
  %v1432 = vsel %vm70, %v1424, 0
  %v1435 = vsel %vm70, %v1425, 0
  %v1438 = vsel %vm70, %v1426, 0
  %v1441 = vsel %vm70, %v1427, 0
  %1443 = vmatprep.subr.bf16.mxu0 0
  %1444 = vmatpush1.bf16.msra.mxu0 0
  %1445 = vmatprep.subr.bf16.mxu0 0
  %1446 = vmatpush1.bf16.msra.mxu0 0
  %1447 = vmatprep.subr.bf16.mxu0 0
  %1448 = vmatpush1.bf16.msra.mxu0 0
  %1449 = vmatprep.subr.bf16.mxu0 0
  %1450 = vmatpush1.bf16.msra.mxu0 0
  %1451 = vmatprep.subr.bf16.mxu0 0
  %1452 = vmatpush1.bf16.msra.mxu0 0
  %1453 = vmatprep.subr.bf16.mxu0 0
  %1454 = vmatpush1.bf16.msra.mxu0 0
  %1455 = vmatprep.subr.bf16.mxu0 0
  %1456 = vmatpush1.bf16.msra.mxu0 0
  %1457 = vmatprep.subr.bf16.mxu0 %v1435
  %1458 = vmatpush1.bf16.msra.mxu0 %v1432
  %1459 = vmatprep.subr.bf16.mxu0 0
  %1460 = vmatpush2.bf16.msra.mxu0 0
  %1461 = vmatprep.subr.bf16.mxu0 0
  %1462 = vmatpush2.bf16.msra.mxu0 0
  %1463 = vmatprep.subr.bf16.mxu0 0
  %1464 = vmatpush2.bf16.msra.mxu0 0
  %1465 = vmatprep.subr.bf16.mxu0 0
  %1466 = vmatpush2.bf16.msra.mxu0 0
  %1467 = vmatprep.subr.bf16.mxu0 0
  %1468 = vmatpush2.bf16.msra.mxu0 0
  %1469 = vmatprep.subr.bf16.mxu0 0
  %1470 = vmatpush2.bf16.msra.mxu0 0
  %1471 = vmatprep.subr.bf16.mxu0 0
  %1472 = vmatpush2.bf16.msra.mxu0 0
  %1473 = vmatprep.subr.bf16.mxu0 0
  %1474 = vmatpush2.bf16.msra.mxu0 0
  %1475 = vmatprep.mubr.bf16.mxu0 0
  %1476 = vmatmul.mubr.bf16.gmra.mxu0 %v1429
  %v1477 = vpop.f32.mrf.mxu0
  %v1478 = vadd.f32 0.0, %v1477
  %v1479 = vpop.f32.mrf.mxu0
  %v1480 = vadd.f32 0.0, %v1479
  %v1481 = vpop.f32.mrf.mxu0
  %v1482 = vpop.f32.mrf.mxu0
  %1483 = vdwg.mxu0
  %1484 = vmatprep.subr.bf16.mxu0 0
  %1485 = vmatpush1.bf16.msra.mxu0 0
  %1486 = vmatprep.subr.bf16.mxu0 0
  %1487 = vmatpush1.bf16.msra.mxu0 0
  %1488 = vmatprep.subr.bf16.mxu0 0
  %1489 = vmatpush1.bf16.msra.mxu0 0
  %1490 = vmatprep.subr.bf16.mxu0 0
  %1491 = vmatpush1.bf16.msra.mxu0 0
  %1492 = vmatprep.subr.bf16.mxu0 0
  %1493 = vmatpush1.bf16.msra.mxu0 0
  %1494 = vmatprep.subr.bf16.mxu0 0
  %1495 = vmatpush1.bf16.msra.mxu0 0
  %1496 = vmatprep.subr.bf16.mxu0 0
  %1497 = vmatpush1.bf16.msra.mxu0 0
  %1498 = vmatprep.subr.bf16.mxu0 %v1441
  %1499 = vmatpush1.bf16.msra.mxu0 %v1438
  %1500 = vmatprep.subr.bf16.mxu0 0
  %1501 = vmatpush2.bf16.msra.mxu0 0
  %1502 = vmatprep.subr.bf16.mxu0 0
  %1503 = vmatpush2.bf16.msra.mxu0 0
  %1504 = vmatprep.subr.bf16.mxu0 0
  %1505 = vmatpush2.bf16.msra.mxu0 0
  %1506 = vmatprep.subr.bf16.mxu0 0
  %1507 = vmatpush2.bf16.msra.mxu0 0
  %1508 = vmatprep.subr.bf16.mxu0 0
  %1509 = vmatpush2.bf16.msra.mxu0 0
  %1510 = vmatprep.subr.bf16.mxu0 0
  %1511 = vmatpush2.bf16.msra.mxu0 0
  %1512 = vmatprep.subr.bf16.mxu0 0
  %1513 = vmatpush2.bf16.msra.mxu0 0
  %1514 = vmatprep.subr.bf16.mxu0 0
  %1515 = vmatpush2.bf16.msra.mxu0 0
  %1516 = vmatprep.mubr.bf16.mxu0 0
  %1517 = vmatmul.mubr.bf16.gmra.mxu0 %v1429
  %v1518 = vpop.f32.mrf.mxu0
  %v1519 = vadd.f32 0.0, %v1518
  %v1520 = vpop.f32.mrf.mxu0
  %v1521 = vadd.f32 0.0, %v1520
  %v1522 = vpop.f32.mrf.mxu0
  %v1523 = vpop.f32.mrf.mxu0
  %1524 = vdwg.mxu0
  %v1525 = vadd.f32 %v1385, %v1478
  %v1526 = vadd.f32 %v1386, %v1480
  %v1527 = vadd.f32 %v1387, %v1519
  %v1528 = vadd.f32 %v1388, %v1521
  %1529 = vrot.lane.b32.xlu0 %v441, 111
  %v1530 = vpop.permute.xlu0 %1529
  %1531 = vrot.lane.b32.xlu0 %v445, 111
  %v1532 = vpop.permute.xlu0 %1531
  %1533 = vrot.lane.b32.xlu0 %v442, 111
  %v1534 = vpop.permute.xlu0 %1533
  %1535 = vrot.lane.b32.xlu0 %v446, 111
  %v1536 = vpop.permute.xlu0 %1535
  %vm1537 = vcmp.lt.s32.totalorder %v458, 111
  %v1538 = vsel %vm1537, %v1534, %v1536
  %v1539 = vsel %vm1537, %v1532, %v1534
  %v1540 = vsel %vm1537, %v1530, %v1532
  %v1541 = vsel %vm1537, %v1536, %v1530
  %v1542 = vlaneseq
  %v1543 = vshrl.u32 %v1542, 7
  %v1544 = vsub.s32 0, %v1543
  %v1545 = vrot.slane %v40, %v1544
  %v1546 = vlaneseq
  %v1547 = vshrl.u32 %v1546, 7
  %v1548 = vsub.s32 0, %v1547
  %v1549 = vrot.slane %v41, %v1548
  %v1550 = vlaneseq
  %v1551 = vshrl.u32 %v1550, 7
  %v1552 = vsub.s32 0, %v1551
  %v1553 = vrot.slane %v42, %v1552
  %v1554 = vlaneseq
  %v1555 = vshrl.u32 %v1554, 7
  %v1556 = vsub.s32 0, %v1555
  %v1557 = vrot.slane %v43, %v1556
  %v1558 = vmul.f32 %v1540, %v1545
  %v1559 = vmul.f32 %v1539, %v1549
  %v1560 = vmul.f32 %v1538, %v1553
  %v1561 = vmul.f32 %v1541, %v1557
  %s1562 = scalar_lea.vmem %s6, 16
  %v1563 = vld [vmem:[%s1562] sm:$0x3]
  %v1564 = vpack.c.bf16 %v1558, %v1558
  %v1565 = vpack.c.bf16 %v1559, %v1559
  %v1566 = vpack.c.bf16 %v1560, %v1560
  %v1567 = vpack.c.bf16 %v1561, %v1561
  %v1569 = vsel %vm66, %v1563, 0
  %v1572 = vsel %vm70, %v1564, 0
  %v1575 = vsel %vm70, %v1565, 0
  %v1578 = vsel %vm70, %v1566, 0
  %v1581 = vsel %vm70, %v1567, 0
  %1583 = vmatprep.subr.bf16.mxu0 0
  %1584 = vmatpush1.bf16.msra.mxu0 0
  %1585 = vmatprep.subr.bf16.mxu0 0
  %1586 = vmatpush1.bf16.msra.mxu0 0
  %1587 = vmatprep.subr.bf16.mxu0 0
  %1588 = vmatpush1.bf16.msra.mxu0 0
  %1589 = vmatprep.subr.bf16.mxu0 0
  %1590 = vmatpush1.bf16.msra.mxu0 0
  %1591 = vmatprep.subr.bf16.mxu0 0
  %1592 = vmatpush1.bf16.msra.mxu0 0
  %1593 = vmatprep.subr.bf16.mxu0 0
  %1594 = vmatpush1.bf16.msra.mxu0 0
  %1595 = vmatprep.subr.bf16.mxu0 0
  %1596 = vmatpush1.bf16.msra.mxu0 0
  %1597 = vmatprep.subr.bf16.mxu0 %v1575
  %1598 = vmatpush1.bf16.msra.mxu0 %v1572
  %1599 = vmatprep.subr.bf16.mxu0 0
  %1600 = vmatpush2.bf16.msra.mxu0 0
  %1601 = vmatprep.subr.bf16.mxu0 0
  %1602 = vmatpush2.bf16.msra.mxu0 0
  %1603 = vmatprep.subr.bf16.mxu0 0
  %1604 = vmatpush2.bf16.msra.mxu0 0
  %1605 = vmatprep.subr.bf16.mxu0 0
  %1606 = vmatpush2.bf16.msra.mxu0 0
  %1607 = vmatprep.subr.bf16.mxu0 0
  %1608 = vmatpush2.bf16.msra.mxu0 0
  %1609 = vmatprep.subr.bf16.mxu0 0
  %1610 = vmatpush2.bf16.msra.mxu0 0
  %1611 = vmatprep.subr.bf16.mxu0 0
  %1612 = vmatpush2.bf16.msra.mxu0 0
  %1613 = vmatprep.subr.bf16.mxu0 0
  %1614 = vmatpush2.bf16.msra.mxu0 0
  %1615 = vmatprep.mubr.bf16.mxu0 0
  %1616 = vmatmul.mubr.bf16.gmra.mxu0 %v1569
  %v1617 = vpop.f32.mrf.mxu0
  %v1618 = vadd.f32 0.0, %v1617
  %v1619 = vpop.f32.mrf.mxu0
  %v1620 = vadd.f32 0.0, %v1619
  %v1621 = vpop.f32.mrf.mxu0
  %v1622 = vpop.f32.mrf.mxu0
  %1623 = vdwg.mxu0
  %1624 = vmatprep.subr.bf16.mxu0 0
  %1625 = vmatpush1.bf16.msra.mxu0 0
  %1626 = vmatprep.subr.bf16.mxu0 0
  %1627 = vmatpush1.bf16.msra.mxu0 0
  %1628 = vmatprep.subr.bf16.mxu0 0
  %1629 = vmatpush1.bf16.msra.mxu0 0
  %1630 = vmatprep.subr.bf16.mxu0 0
  %1631 = vmatpush1.bf16.msra.mxu0 0
  %1632 = vmatprep.subr.bf16.mxu0 0
  %1633 = vmatpush1.bf16.msra.mxu0 0
  %1634 = vmatprep.subr.bf16.mxu0 0
  %1635 = vmatpush1.bf16.msra.mxu0 0
  %1636 = vmatprep.subr.bf16.mxu0 0
  %1637 = vmatpush1.bf16.msra.mxu0 0
  %1638 = vmatprep.subr.bf16.mxu0 %v1581
  %1639 = vmatpush1.bf16.msra.mxu0 %v1578
  %1640 = vmatprep.subr.bf16.mxu0 0
  %1641 = vmatpush2.bf16.msra.mxu0 0
  %1642 = vmatprep.subr.bf16.mxu0 0
  %1643 = vmatpush2.bf16.msra.mxu0 0
  %1644 = vmatprep.subr.bf16.mxu0 0
  %1645 = vmatpush2.bf16.msra.mxu0 0
  %1646 = vmatprep.subr.bf16.mxu0 0
  %1647 = vmatpush2.bf16.msra.mxu0 0
  %1648 = vmatprep.subr.bf16.mxu0 0
  %1649 = vmatpush2.bf16.msra.mxu0 0
  %1650 = vmatprep.subr.bf16.mxu0 0
  %1651 = vmatpush2.bf16.msra.mxu0 0
  %1652 = vmatprep.subr.bf16.mxu0 0
  %1653 = vmatpush2.bf16.msra.mxu0 0
  %1654 = vmatprep.subr.bf16.mxu0 0
  %1655 = vmatpush2.bf16.msra.mxu0 0
  %1656 = vmatprep.mubr.bf16.mxu0 0
  %1657 = vmatmul.mubr.bf16.gmra.mxu0 %v1569
  %v1658 = vpop.f32.mrf.mxu0
  %v1659 = vadd.f32 0.0, %v1658
  %v1660 = vpop.f32.mrf.mxu0
  %v1661 = vadd.f32 0.0, %v1660
  %v1662 = vpop.f32.mrf.mxu0
  %v1663 = vpop.f32.mrf.mxu0
  %1664 = vdwg.mxu0
  %v1665 = vadd.f32 %v1525, %v1618
  %v1666 = vadd.f32 %v1526, %v1620
  %v1667 = vadd.f32 %v1527, %v1659
  %v1668 = vadd.f32 %v1528, %v1661
  %1669 = vrot.lane.b32.xlu0 %v44, 17
  %v1670 = vpop.permute.xlu0 %1669
  %1671 = vrot.lane.b32.xlu0 %v168, 17
  %v1672 = vpop.permute.xlu0 %1671
  %1673 = vrot.lane.b32.xlu0 %v45, 17
  %v1674 = vpop.permute.xlu0 %1673
  %1675 = vrot.lane.b32.xlu0 %v169, 17
  %v1676 = vpop.permute.xlu0 %1675
  %v1677 = vsel %vm459, %v1674, %v1676
  %v1678 = vsel %vm459, %v1672, %v1674
  %v1679 = vsel %vm459, %v1670, %v1672
  %v1680 = vsel %vm459, %v1676, %v1670
  %v1681 = vmul.f32 %v1680, %v467
  %v1682 = vmul.f32 %v1679, %v471
  %v1683 = vmul.f32 %v1678, %v475
  %v1684 = vmul.f32 %v1677, %v479
  %v1685 = vld [vmem:[%s7] sm:$0x3]
  %v1686 = vpack.c.bf16 %v1681, %v1681
  %v1687 = vpack.c.bf16 %v1682, %v1682
  %v1688 = vpack.c.bf16 %v1683, %v1683
  %v1689 = vpack.c.bf16 %v1684, %v1684
  %v1691 = vsel %vm66, %v1685, 0
  %v1694 = vsel %vm70, %v1686, 0
  %v1697 = vsel %vm70, %v1687, 0
  %v1700 = vsel %vm70, %v1688, 0
  %v1703 = vsel %vm70, %v1689, 0
  %1705 = vmatprep.subr.bf16.mxu0 0
  %1706 = vmatpush1.bf16.msra.mxu0 0
  %1707 = vmatprep.subr.bf16.mxu0 0
  %1708 = vmatpush1.bf16.msra.mxu0 0
  %1709 = vmatprep.subr.bf16.mxu0 0
  %1710 = vmatpush1.bf16.msra.mxu0 0
  %1711 = vmatprep.subr.bf16.mxu0 0
  %1712 = vmatpush1.bf16.msra.mxu0 0
  %1713 = vmatprep.subr.bf16.mxu0 0
  %1714 = vmatpush1.bf16.msra.mxu0 0
  %1715 = vmatprep.subr.bf16.mxu0 0
  %1716 = vmatpush1.bf16.msra.mxu0 0
  %1717 = vmatprep.subr.bf16.mxu0 0
  %1718 = vmatpush1.bf16.msra.mxu0 0
  %1719 = vmatprep.subr.bf16.mxu0 %v1697
  %1720 = vmatpush1.bf16.msra.mxu0 %v1694
  %1721 = vmatprep.subr.bf16.mxu0 0
  %1722 = vmatpush2.bf16.msra.mxu0 0
  %1723 = vmatprep.subr.bf16.mxu0 0
  %1724 = vmatpush2.bf16.msra.mxu0 0
  %1725 = vmatprep.subr.bf16.mxu0 0
  %1726 = vmatpush2.bf16.msra.mxu0 0
  %1727 = vmatprep.subr.bf16.mxu0 0
  %1728 = vmatpush2.bf16.msra.mxu0 0
  %1729 = vmatprep.subr.bf16.mxu0 0
  %1730 = vmatpush2.bf16.msra.mxu0 0
  %1731 = vmatprep.subr.bf16.mxu0 0
  %1732 = vmatpush2.bf16.msra.mxu0 0
  %1733 = vmatprep.subr.bf16.mxu0 0
  %1734 = vmatpush2.bf16.msra.mxu0 0
  %1735 = vmatprep.subr.bf16.mxu0 0
  %1736 = vmatpush2.bf16.msra.mxu0 0
  %1737 = vmatprep.mubr.bf16.mxu0 0
  %1738 = vmatmul.mubr.bf16.gmra.mxu0 %v1691
  %v1739 = vpop.f32.mrf.mxu0
  %v1740 = vadd.f32 0.0, %v1739
  %v1741 = vpop.f32.mrf.mxu0
  %v1742 = vadd.f32 0.0, %v1741
  %v1743 = vpop.f32.mrf.mxu0
  %v1744 = vpop.f32.mrf.mxu0
  %1745 = vdwg.mxu0
  %1746 = vmatprep.subr.bf16.mxu0 0
  %1747 = vmatpush1.bf16.msra.mxu0 0
  %1748 = vmatprep.subr.bf16.mxu0 0
  %1749 = vmatpush1.bf16.msra.mxu0 0
  %1750 = vmatprep.subr.bf16.mxu0 0
  %1751 = vmatpush1.bf16.msra.mxu0 0
  %1752 = vmatprep.subr.bf16.mxu0 0
  %1753 = vmatpush1.bf16.msra.mxu0 0
  %1754 = vmatprep.subr.bf16.mxu0 0
  %1755 = vmatpush1.bf16.msra.mxu0 0
  %1756 = vmatprep.subr.bf16.mxu0 0
  %1757 = vmatpush1.bf16.msra.mxu0 0
  %1758 = vmatprep.subr.bf16.mxu0 0
  %1759 = vmatpush1.bf16.msra.mxu0 0
  %1760 = vmatprep.subr.bf16.mxu0 %v1703
  %1761 = vmatpush1.bf16.msra.mxu0 %v1700
  %1762 = vmatprep.subr.bf16.mxu0 0
  %1763 = vmatpush2.bf16.msra.mxu0 0
  %1764 = vmatprep.subr.bf16.mxu0 0
  %1765 = vmatpush2.bf16.msra.mxu0 0
  %1766 = vmatprep.subr.bf16.mxu0 0
  %1767 = vmatpush2.bf16.msra.mxu0 0
  %1768 = vmatprep.subr.bf16.mxu0 0
  %1769 = vmatpush2.bf16.msra.mxu0 0
  %1770 = vmatprep.subr.bf16.mxu0 0
  %1771 = vmatpush2.bf16.msra.mxu0 0
  %1772 = vmatprep.subr.bf16.mxu0 0
  %1773 = vmatpush2.bf16.msra.mxu0 0
  %1774 = vmatprep.subr.bf16.mxu0 0
  %1775 = vmatpush2.bf16.msra.mxu0 0
  %1776 = vmatprep.subr.bf16.mxu0 0
  %1777 = vmatpush2.bf16.msra.mxu0 0
  %1778 = vmatprep.mubr.bf16.mxu0 0
  %1779 = vmatmul.mubr.bf16.gmra.mxu0 %v1691
  %v1780 = vpop.f32.mrf.mxu0
  %v1781 = vadd.f32 0.0, %v1780
  %v1782 = vpop.f32.mrf.mxu0
  %v1783 = vadd.f32 0.0, %v1782
  %v1784 = vpop.f32.mrf.mxu0
  %v1785 = vpop.f32.mrf.mxu0
  %1786 = vdwg.mxu0
  %v1787 = vadd.f32 %v1665, %v1740
  %v1788 = vadd.f32 %v1666, %v1742
  %v1789 = vadd.f32 %v1667, %v1781
  %v1790 = vadd.f32 %v1668, %v1783
  %1791 = vrot.lane.b32.xlu0 %v44, 16
  %v1792 = vpop.permute.xlu0 %1791
  %1793 = vrot.lane.b32.xlu0 %v168, 16
  %v1794 = vpop.permute.xlu0 %1793
  %1795 = vrot.lane.b32.xlu0 %v45, 16
  %v1796 = vpop.permute.xlu0 %1795
  %1797 = vrot.lane.b32.xlu0 %v169, 16
  %v1798 = vpop.permute.xlu0 %1797
  %v1799 = vsel %vm497, %v1796, %v1798
  %v1800 = vsel %vm497, %v1794, %v1796
  %v1801 = vsel %vm497, %v1792, %v1794
  %v1802 = vsel %vm497, %v1798, %v1792
  %v1803 = vmul.f32 %v1802, %v505
  %v1804 = vmul.f32 %v1801, %v509
  %v1805 = vmul.f32 %v1800, %v513
  %v1806 = vmul.f32 %v1799, %v517
  %s1807 = scalar_lea.vmem %s7, 2
  %v1808 = vld [vmem:[%s1807] sm:$0x3]
  %v1809 = vpack.c.bf16 %v1803, %v1803
  %v1810 = vpack.c.bf16 %v1804, %v1804
  %v1811 = vpack.c.bf16 %v1805, %v1805
  %v1812 = vpack.c.bf16 %v1806, %v1806
  %v1814 = vsel %vm66, %v1808, 0
  %v1817 = vsel %vm70, %v1809, 0
  %v1820 = vsel %vm70, %v1810, 0
  %v1823 = vsel %vm70, %v1811, 0
  %v1826 = vsel %vm70, %v1812, 0
  %1828 = vmatprep.subr.bf16.mxu0 0
  %1829 = vmatpush1.bf16.msra.mxu0 0
  %1830 = vmatprep.subr.bf16.mxu0 0
  %1831 = vmatpush1.bf16.msra.mxu0 0
  %1832 = vmatprep.subr.bf16.mxu0 0
  %1833 = vmatpush1.bf16.msra.mxu0 0
  %1834 = vmatprep.subr.bf16.mxu0 0
  %1835 = vmatpush1.bf16.msra.mxu0 0
  %1836 = vmatprep.subr.bf16.mxu0 0
  %1837 = vmatpush1.bf16.msra.mxu0 0
  %1838 = vmatprep.subr.bf16.mxu0 0
  %1839 = vmatpush1.bf16.msra.mxu0 0
  %1840 = vmatprep.subr.bf16.mxu0 0
  %1841 = vmatpush1.bf16.msra.mxu0 0
  %1842 = vmatprep.subr.bf16.mxu0 %v1820
  %1843 = vmatpush1.bf16.msra.mxu0 %v1817
  %1844 = vmatprep.subr.bf16.mxu0 0
  %1845 = vmatpush2.bf16.msra.mxu0 0
  %1846 = vmatprep.subr.bf16.mxu0 0
  %1847 = vmatpush2.bf16.msra.mxu0 0
  %1848 = vmatprep.subr.bf16.mxu0 0
  %1849 = vmatpush2.bf16.msra.mxu0 0
  %1850 = vmatprep.subr.bf16.mxu0 0
  %1851 = vmatpush2.bf16.msra.mxu0 0
  %1852 = vmatprep.subr.bf16.mxu0 0
  %1853 = vmatpush2.bf16.msra.mxu0 0
  %1854 = vmatprep.subr.bf16.mxu0 0
  %1855 = vmatpush2.bf16.msra.mxu0 0
  %1856 = vmatprep.subr.bf16.mxu0 0
  %1857 = vmatpush2.bf16.msra.mxu0 0
  %1858 = vmatprep.subr.bf16.mxu0 0
  %1859 = vmatpush2.bf16.msra.mxu0 0
  %1860 = vmatprep.mubr.bf16.mxu0 0
  %1861 = vmatmul.mubr.bf16.gmra.mxu0 %v1814
  %v1862 = vpop.f32.mrf.mxu0
  %v1863 = vadd.f32 0.0, %v1862
  %v1864 = vpop.f32.mrf.mxu0
  %v1865 = vadd.f32 0.0, %v1864
  %v1866 = vpop.f32.mrf.mxu0
  %v1867 = vpop.f32.mrf.mxu0
  %1868 = vdwg.mxu0
  %1869 = vmatprep.subr.bf16.mxu0 0
  %1870 = vmatpush1.bf16.msra.mxu0 0
  %1871 = vmatprep.subr.bf16.mxu0 0
  %1872 = vmatpush1.bf16.msra.mxu0 0
  %1873 = vmatprep.subr.bf16.mxu0 0
  %1874 = vmatpush1.bf16.msra.mxu0 0
  %1875 = vmatprep.subr.bf16.mxu0 0
  %1876 = vmatpush1.bf16.msra.mxu0 0
  %1877 = vmatprep.subr.bf16.mxu0 0
  %1878 = vmatpush1.bf16.msra.mxu0 0
  %1879 = vmatprep.subr.bf16.mxu0 0
  %1880 = vmatpush1.bf16.msra.mxu0 0
  %1881 = vmatprep.subr.bf16.mxu0 0
  %1882 = vmatpush1.bf16.msra.mxu0 0
  %1883 = vmatprep.subr.bf16.mxu0 %v1826
  %1884 = vmatpush1.bf16.msra.mxu0 %v1823
  %1885 = vmatprep.subr.bf16.mxu0 0
  %1886 = vmatpush2.bf16.msra.mxu0 0
  %1887 = vmatprep.subr.bf16.mxu0 0
  %1888 = vmatpush2.bf16.msra.mxu0 0
  %1889 = vmatprep.subr.bf16.mxu0 0
  %1890 = vmatpush2.bf16.msra.mxu0 0
  %1891 = vmatprep.subr.bf16.mxu0 0
  %1892 = vmatpush2.bf16.msra.mxu0 0
  %1893 = vmatprep.subr.bf16.mxu0 0
  %1894 = vmatpush2.bf16.msra.mxu0 0
  %1895 = vmatprep.subr.bf16.mxu0 0
  %1896 = vmatpush2.bf16.msra.mxu0 0
  %1897 = vmatprep.subr.bf16.mxu0 0
  %1898 = vmatpush2.bf16.msra.mxu0 0
  %1899 = vmatprep.subr.bf16.mxu0 0
  %1900 = vmatpush2.bf16.msra.mxu0 0
  %1901 = vmatprep.mubr.bf16.mxu0 0
  %1902 = vmatmul.mubr.bf16.gmra.mxu0 %v1814
  %v1903 = vpop.f32.mrf.mxu0
  %v1904 = vadd.f32 0.0, %v1903
  %v1905 = vpop.f32.mrf.mxu0
  %v1906 = vadd.f32 0.0, %v1905
  %v1907 = vpop.f32.mrf.mxu0
  %v1908 = vpop.f32.mrf.mxu0
  %1909 = vdwg.mxu0
  %v1910 = vadd.f32 %v1787, %v1863
  %v1911 = vadd.f32 %v1788, %v1865
  %v1912 = vadd.f32 %v1789, %v1904
  %v1913 = vadd.f32 %v1790, %v1906
  %1914 = vrot.lane.b32.xlu0 %v44, 15
  %v1915 = vpop.permute.xlu0 %1914
  %1916 = vrot.lane.b32.xlu0 %v168, 15
  %v1917 = vpop.permute.xlu0 %1916
  %1918 = vrot.lane.b32.xlu0 %v45, 15
  %v1919 = vpop.permute.xlu0 %1918
  %1920 = vrot.lane.b32.xlu0 %v169, 15
  %v1921 = vpop.permute.xlu0 %1920
  %v1922 = vsel %vm730, %v1919, %v1921
  %v1923 = vsel %vm730, %v1917, %v1919
  %v1924 = vsel %vm730, %v1915, %v1917
  %v1925 = vsel %vm730, %v1921, %v1915
  %v1926 = vmul.f32 %v1925, %v738
  %v1927 = vmul.f32 %v1924, %v742
  %v1928 = vmul.f32 %v1923, %v746
  %v1929 = vmul.f32 %v1922, %v750
  %s1930 = scalar_lea.vmem %s7, 4
  %v1931 = vld [vmem:[%s1930] sm:$0x3]
  %v1932 = vpack.c.bf16 %v1926, %v1926
  %v1933 = vpack.c.bf16 %v1927, %v1927
  %v1934 = vpack.c.bf16 %v1928, %v1928
  %v1935 = vpack.c.bf16 %v1929, %v1929
  %v1937 = vsel %vm66, %v1931, 0
  %v1940 = vsel %vm70, %v1932, 0
  %v1943 = vsel %vm70, %v1933, 0
  %v1946 = vsel %vm70, %v1934, 0
  %v1949 = vsel %vm70, %v1935, 0
  %1951 = vmatprep.subr.bf16.mxu0 0
  %1952 = vmatpush1.bf16.msra.mxu0 0
  %1953 = vmatprep.subr.bf16.mxu0 0
  %1954 = vmatpush1.bf16.msra.mxu0 0
  %1955 = vmatprep.subr.bf16.mxu0 0
  %1956 = vmatpush1.bf16.msra.mxu0 0
  %1957 = vmatprep.subr.bf16.mxu0 0
  %1958 = vmatpush1.bf16.msra.mxu0 0
  %1959 = vmatprep.subr.bf16.mxu0 0
  %1960 = vmatpush1.bf16.msra.mxu0 0
  %1961 = vmatprep.subr.bf16.mxu0 0
  %1962 = vmatpush1.bf16.msra.mxu0 0
  %1963 = vmatprep.subr.bf16.mxu0 0
  %1964 = vmatpush1.bf16.msra.mxu0 0
  %1965 = vmatprep.subr.bf16.mxu0 %v1943
  %1966 = vmatpush1.bf16.msra.mxu0 %v1940
  %1967 = vmatprep.subr.bf16.mxu0 0
  %1968 = vmatpush2.bf16.msra.mxu0 0
  %1969 = vmatprep.subr.bf16.mxu0 0
  %1970 = vmatpush2.bf16.msra.mxu0 0
  %1971 = vmatprep.subr.bf16.mxu0 0
  %1972 = vmatpush2.bf16.msra.mxu0 0
  %1973 = vmatprep.subr.bf16.mxu0 0
  %1974 = vmatpush2.bf16.msra.mxu0 0
  %1975 = vmatprep.subr.bf16.mxu0 0
  %1976 = vmatpush2.bf16.msra.mxu0 0
  %1977 = vmatprep.subr.bf16.mxu0 0
  %1978 = vmatpush2.bf16.msra.mxu0 0
  %1979 = vmatprep.subr.bf16.mxu0 0
  %1980 = vmatpush2.bf16.msra.mxu0 0
  %1981 = vmatprep.subr.bf16.mxu0 0
  %1982 = vmatpush2.bf16.msra.mxu0 0
  %1983 = vmatprep.mubr.bf16.mxu0 0
  %1984 = vmatmul.mubr.bf16.gmra.mxu0 %v1937
  %v1985 = vpop.f32.mrf.mxu0
  %v1986 = vadd.f32 0.0, %v1985
  %v1987 = vpop.f32.mrf.mxu0
  %v1988 = vadd.f32 0.0, %v1987
  %v1989 = vpop.f32.mrf.mxu0
  %v1990 = vpop.f32.mrf.mxu0
  %1991 = vdwg.mxu0
  %1992 = vmatprep.subr.bf16.mxu0 0
  %1993 = vmatpush1.bf16.msra.mxu0 0
  %1994 = vmatprep.subr.bf16.mxu0 0
  %1995 = vmatpush1.bf16.msra.mxu0 0
  %1996 = vmatprep.subr.bf16.mxu0 0
  %1997 = vmatpush1.bf16.msra.mxu0 0
  %1998 = vmatprep.subr.bf16.mxu0 0
  %1999 = vmatpush1.bf16.msra.mxu0 0
  %2000 = vmatprep.subr.bf16.mxu0 0
  %2001 = vmatpush1.bf16.msra.mxu0 0
  %2002 = vmatprep.subr.bf16.mxu0 0
  %2003 = vmatpush1.bf16.msra.mxu0 0
  %2004 = vmatprep.subr.bf16.mxu0 0
  %2005 = vmatpush1.bf16.msra.mxu0 0
  %2006 = vmatprep.subr.bf16.mxu0 %v1949
  %2007 = vmatpush1.bf16.msra.mxu0 %v1946
  %2008 = vmatprep.subr.bf16.mxu0 0
  %2009 = vmatpush2.bf16.msra.mxu0 0
  %2010 = vmatprep.subr.bf16.mxu0 0
  %2011 = vmatpush2.bf16.msra.mxu0 0
  %2012 = vmatprep.subr.bf16.mxu0 0
  %2013 = vmatpush2.bf16.msra.mxu0 0
  %2014 = vmatprep.subr.bf16.mxu0 0
  %2015 = vmatpush2.bf16.msra.mxu0 0
  %2016 = vmatprep.subr.bf16.mxu0 0
  %2017 = vmatpush2.bf16.msra.mxu0 0
  %2018 = vmatprep.subr.bf16.mxu0 0
  %2019 = vmatpush2.bf16.msra.mxu0 0
  %2020 = vmatprep.subr.bf16.mxu0 0
  %2021 = vmatpush2.bf16.msra.mxu0 0
  %2022 = vmatprep.subr.bf16.mxu0 0
  %2023 = vmatpush2.bf16.msra.mxu0 0
  %2024 = vmatprep.mubr.bf16.mxu0 0
  %2025 = vmatmul.mubr.bf16.gmra.mxu0 %v1937
  %v2026 = vpop.f32.mrf.mxu0
  %v2027 = vadd.f32 0.0, %v2026
  %v2028 = vpop.f32.mrf.mxu0
  %v2029 = vadd.f32 0.0, %v2028
  %v2030 = vpop.f32.mrf.mxu0
  %v2031 = vpop.f32.mrf.mxu0
  %2032 = vdwg.mxu0
  %v2033 = vadd.f32 %v1910, %v1986
  %v2034 = vadd.f32 %v1911, %v1988
  %v2035 = vadd.f32 %v1912, %v2027
  %v2036 = vadd.f32 %v1913, %v2029
  %2037 = vrot.lane.b32.xlu0 %v44, 1
  %v2038 = vpop.permute.xlu0 %2037
  %2039 = vrot.lane.b32.xlu0 %v168, 1
  %v2040 = vpop.permute.xlu0 %2039
  %2041 = vrot.lane.b32.xlu0 %v45, 1
  %v2042 = vpop.permute.xlu0 %2041
  %2043 = vrot.lane.b32.xlu0 %v169, 1
  %v2044 = vpop.permute.xlu0 %2043
  %v2045 = vsel %vm870, %v2042, %v2044
  %v2046 = vsel %vm870, %v2040, %v2042
  %v2047 = vsel %vm870, %v2038, %v2040
  %v2048 = vsel %vm870, %v2044, %v2038
  %v2049 = vmul.f32 %v2048, %v878
  %v2050 = vmul.f32 %v2047, %v882
  %v2051 = vmul.f32 %v2046, %v886
  %v2052 = vmul.f32 %v2045, %v890
  %s2053 = scalar_lea.vmem %s7, 6
  %v2054 = vld [vmem:[%s2053] sm:$0x3]
  %v2055 = vpack.c.bf16 %v2049, %v2049
  %v2056 = vpack.c.bf16 %v2050, %v2050
  %v2057 = vpack.c.bf16 %v2051, %v2051
  %v2058 = vpack.c.bf16 %v2052, %v2052
  %v2060 = vsel %vm66, %v2054, 0
  %v2063 = vsel %vm70, %v2055, 0
  %v2066 = vsel %vm70, %v2056, 0
  %v2069 = vsel %vm70, %v2057, 0
  %v2072 = vsel %vm70, %v2058, 0
  %2074 = vmatprep.subr.bf16.mxu0 0
  %2075 = vmatpush1.bf16.msra.mxu0 0
  %2076 = vmatprep.subr.bf16.mxu0 0
  %2077 = vmatpush1.bf16.msra.mxu0 0
  %2078 = vmatprep.subr.bf16.mxu0 0
  %2079 = vmatpush1.bf16.msra.mxu0 0
  %2080 = vmatprep.subr.bf16.mxu0 0
  %2081 = vmatpush1.bf16.msra.mxu0 0
  %2082 = vmatprep.subr.bf16.mxu0 0
  %2083 = vmatpush1.bf16.msra.mxu0 0
  %2084 = vmatprep.subr.bf16.mxu0 0
  %2085 = vmatpush1.bf16.msra.mxu0 0
  %2086 = vmatprep.subr.bf16.mxu0 0
  %2087 = vmatpush1.bf16.msra.mxu0 0
  %2088 = vmatprep.subr.bf16.mxu0 %v2066
  %2089 = vmatpush1.bf16.msra.mxu0 %v2063
  %2090 = vmatprep.subr.bf16.mxu0 0
  %2091 = vmatpush2.bf16.msra.mxu0 0
  %2092 = vmatprep.subr.bf16.mxu0 0
  %2093 = vmatpush2.bf16.msra.mxu0 0
  %2094 = vmatprep.subr.bf16.mxu0 0
  %2095 = vmatpush2.bf16.msra.mxu0 0
  %2096 = vmatprep.subr.bf16.mxu0 0
  %2097 = vmatpush2.bf16.msra.mxu0 0
  %2098 = vmatprep.subr.bf16.mxu0 0
  %2099 = vmatpush2.bf16.msra.mxu0 0
  %2100 = vmatprep.subr.bf16.mxu0 0
  %2101 = vmatpush2.bf16.msra.mxu0 0
  %2102 = vmatprep.subr.bf16.mxu0 0
  %2103 = vmatpush2.bf16.msra.mxu0 0
  %2104 = vmatprep.subr.bf16.mxu0 0
  %2105 = vmatpush2.bf16.msra.mxu0 0
  %2106 = vmatprep.mubr.bf16.mxu0 0
  %2107 = vmatmul.mubr.bf16.gmra.mxu0 %v2060
  %v2108 = vpop.f32.mrf.mxu0
  %v2109 = vadd.f32 0.0, %v2108
  %v2110 = vpop.f32.mrf.mxu0
  %v2111 = vadd.f32 0.0, %v2110
  %v2112 = vpop.f32.mrf.mxu0
  %v2113 = vpop.f32.mrf.mxu0
  %2114 = vdwg.mxu0
  %2115 = vmatprep.subr.bf16.mxu0 0
  %2116 = vmatpush1.bf16.msra.mxu0 0
  %2117 = vmatprep.subr.bf16.mxu0 0
  %2118 = vmatpush1.bf16.msra.mxu0 0
  %2119 = vmatprep.subr.bf16.mxu0 0
  %2120 = vmatpush1.bf16.msra.mxu0 0
  %2121 = vmatprep.subr.bf16.mxu0 0
  %2122 = vmatpush1.bf16.msra.mxu0 0
  %2123 = vmatprep.subr.bf16.mxu0 0
  %2124 = vmatpush1.bf16.msra.mxu0 0
  %2125 = vmatprep.subr.bf16.mxu0 0
  %2126 = vmatpush1.bf16.msra.mxu0 0
  %2127 = vmatprep.subr.bf16.mxu0 0
  %2128 = vmatpush1.bf16.msra.mxu0 0
  %2129 = vmatprep.subr.bf16.mxu0 %v2072
  %2130 = vmatpush1.bf16.msra.mxu0 %v2069
  %2131 = vmatprep.subr.bf16.mxu0 0
  %2132 = vmatpush2.bf16.msra.mxu0 0
  %2133 = vmatprep.subr.bf16.mxu0 0
  %2134 = vmatpush2.bf16.msra.mxu0 0
  %2135 = vmatprep.subr.bf16.mxu0 0
  %2136 = vmatpush2.bf16.msra.mxu0 0
  %2137 = vmatprep.subr.bf16.mxu0 0
  %2138 = vmatpush2.bf16.msra.mxu0 0
  %2139 = vmatprep.subr.bf16.mxu0 0
  %2140 = vmatpush2.bf16.msra.mxu0 0
  %2141 = vmatprep.subr.bf16.mxu0 0
  %2142 = vmatpush2.bf16.msra.mxu0 0
  %2143 = vmatprep.subr.bf16.mxu0 0
  %2144 = vmatpush2.bf16.msra.mxu0 0
  %2145 = vmatprep.subr.bf16.mxu0 0
  %2146 = vmatpush2.bf16.msra.mxu0 0
  %2147 = vmatprep.mubr.bf16.mxu0 0
  %2148 = vmatmul.mubr.bf16.gmra.mxu0 %v2060
  %v2149 = vpop.f32.mrf.mxu0
  %v2150 = vadd.f32 0.0, %v2149
  %v2151 = vpop.f32.mrf.mxu0
  %v2152 = vadd.f32 0.0, %v2151
  %v2153 = vpop.f32.mrf.mxu0
  %v2154 = vpop.f32.mrf.mxu0
  %2155 = vdwg.mxu0
  %v2156 = vadd.f32 %v2033, %v2109
  %v2157 = vadd.f32 %v2034, %v2111
  %v2158 = vadd.f32 %v2035, %v2150
  %v2159 = vadd.f32 %v2036, %v2152
  %s2160 = scalar_lea.vmem %s7, 8
  %v2161 = vld [vmem:[%s2160] sm:$0x3]
  %v2163 = vsel %vm66, %v2161, 0
  %2165 = vmatprep.subr.bf16.mxu0 0
  %2166 = vmatpush1.bf16.msra.mxu0 0
  %2167 = vmatprep.subr.bf16.mxu0 0
  %2168 = vmatpush1.bf16.msra.mxu0 0
  %2169 = vmatprep.subr.bf16.mxu0 0
  %2170 = vmatpush1.bf16.msra.mxu0 0
  %2171 = vmatprep.subr.bf16.mxu0 0
  %2172 = vmatpush1.bf16.msra.mxu0 0
  %2173 = vmatprep.subr.bf16.mxu0 0
  %2174 = vmatpush1.bf16.msra.mxu0 0
  %2175 = vmatprep.subr.bf16.mxu0 0
  %2176 = vmatpush1.bf16.msra.mxu0 0
  %2177 = vmatprep.subr.bf16.mxu0 0
  %2178 = vmatpush1.bf16.msra.mxu0 0
  %2179 = vmatprep.subr.bf16.mxu0 %v183
  %2180 = vmatpush1.bf16.msra.mxu0 %v180
  %2181 = vmatprep.subr.bf16.mxu0 0
  %2182 = vmatpush2.bf16.msra.mxu0 0
  %2183 = vmatprep.subr.bf16.mxu0 0
  %2184 = vmatpush2.bf16.msra.mxu0 0
  %2185 = vmatprep.subr.bf16.mxu0 0
  %2186 = vmatpush2.bf16.msra.mxu0 0
  %2187 = vmatprep.subr.bf16.mxu0 0
  %2188 = vmatpush2.bf16.msra.mxu0 0
  %2189 = vmatprep.subr.bf16.mxu0 0
  %2190 = vmatpush2.bf16.msra.mxu0 0
  %2191 = vmatprep.subr.bf16.mxu0 0
  %2192 = vmatpush2.bf16.msra.mxu0 0
  %2193 = vmatprep.subr.bf16.mxu0 0
  %2194 = vmatpush2.bf16.msra.mxu0 0
  %2195 = vmatprep.subr.bf16.mxu0 0
  %2196 = vmatpush2.bf16.msra.mxu0 0
  %2197 = vmatprep.mubr.bf16.mxu0 0
  %2198 = vmatmul.mubr.bf16.gmra.mxu0 %v2163
  %v2199 = vpop.f32.mrf.mxu0
  %v2200 = vadd.f32 0.0, %v2199
  %v2201 = vpop.f32.mrf.mxu0
  %v2202 = vadd.f32 0.0, %v2201
  %v2203 = vpop.f32.mrf.mxu0
  %v2204 = vpop.f32.mrf.mxu0
  %2205 = vdwg.mxu0
  %2206 = vmatprep.subr.bf16.mxu0 0
  %2207 = vmatpush1.bf16.msra.mxu0 0
  %2208 = vmatprep.subr.bf16.mxu0 0
  %2209 = vmatpush1.bf16.msra.mxu0 0
  %2210 = vmatprep.subr.bf16.mxu0 0
  %2211 = vmatpush1.bf16.msra.mxu0 0
  %2212 = vmatprep.subr.bf16.mxu0 0
  %2213 = vmatpush1.bf16.msra.mxu0 0
  %2214 = vmatprep.subr.bf16.mxu0 0
  %2215 = vmatpush1.bf16.msra.mxu0 0
  %2216 = vmatprep.subr.bf16.mxu0 0
  %2217 = vmatpush1.bf16.msra.mxu0 0
  %2218 = vmatprep.subr.bf16.mxu0 0
  %2219 = vmatpush1.bf16.msra.mxu0 0
  %2220 = vmatprep.subr.bf16.mxu0 %v189
  %2221 = vmatpush1.bf16.msra.mxu0 %v186
  %2222 = vmatprep.subr.bf16.mxu0 0
  %2223 = vmatpush2.bf16.msra.mxu0 0
  %2224 = vmatprep.subr.bf16.mxu0 0
  %2225 = vmatpush2.bf16.msra.mxu0 0
  %2226 = vmatprep.subr.bf16.mxu0 0
  %2227 = vmatpush2.bf16.msra.mxu0 0
  %2228 = vmatprep.subr.bf16.mxu0 0
  %2229 = vmatpush2.bf16.msra.mxu0 0
  %2230 = vmatprep.subr.bf16.mxu0 0
  %2231 = vmatpush2.bf16.msra.mxu0 0
  %2232 = vmatprep.subr.bf16.mxu0 0
  %2233 = vmatpush2.bf16.msra.mxu0 0
  %2234 = vmatprep.subr.bf16.mxu0 0
  %2235 = vmatpush2.bf16.msra.mxu0 0
  %2236 = vmatprep.subr.bf16.mxu0 0
  %2237 = vmatpush2.bf16.msra.mxu0 0
  %2238 = vmatprep.mubr.bf16.mxu0 0
  %2239 = vmatmul.mubr.bf16.gmra.mxu0 %v2163
  %v2240 = vpop.f32.mrf.mxu0
  %v2241 = vadd.f32 0.0, %v2240
  %v2242 = vpop.f32.mrf.mxu0
  %v2243 = vadd.f32 0.0, %v2242
  %v2244 = vpop.f32.mrf.mxu0
  %v2245 = vpop.f32.mrf.mxu0
  %2246 = vdwg.mxu0
  %v2247 = vadd.f32 %v2156, %v2200
  %v2248 = vadd.f32 %v2157, %v2202
  %v2249 = vadd.f32 %v2158, %v2241
  %v2250 = vadd.f32 %v2159, %v2243
  %2251 = vrot.lane.b32.xlu0 %v44, 127
  %v2252 = vpop.permute.xlu0 %2251
  %2253 = vrot.lane.b32.xlu0 %v168, 127
  %v2254 = vpop.permute.xlu0 %2253
  %2255 = vrot.lane.b32.xlu0 %v45, 127
  %v2256 = vpop.permute.xlu0 %2255
  %2257 = vrot.lane.b32.xlu0 %v169, 127
  %v2258 = vpop.permute.xlu0 %2257
  %v2259 = vsel %vm1117, %v2256, %v2258
  %v2260 = vsel %vm1117, %v2254, %v2256
  %v2261 = vsel %vm1117, %v2252, %v2254
  %v2262 = vsel %vm1117, %v2258, %v2252
  %v2263 = vmul.f32 %v2261, %v1125
  %v2264 = vmul.f32 %v2260, %v1129
  %v2265 = vmul.f32 %v2259, %v1133
  %v2266 = vmul.f32 %v2262, %v1137
  %s2267 = scalar_lea.vmem %s7, 10
  %v2268 = vld [vmem:[%s2267] sm:$0x3]
  %v2269 = vpack.c.bf16 %v2263, %v2263
  %v2270 = vpack.c.bf16 %v2264, %v2264
  %v2271 = vpack.c.bf16 %v2265, %v2265
  %v2272 = vpack.c.bf16 %v2266, %v2266
  %v2274 = vsel %vm66, %v2268, 0
  %v2277 = vsel %vm70, %v2269, 0
  %v2280 = vsel %vm70, %v2270, 0
  %v2283 = vsel %vm70, %v2271, 0
  %v2286 = vsel %vm70, %v2272, 0
  %2288 = vmatprep.subr.bf16.mxu0 0
  %2289 = vmatpush1.bf16.msra.mxu0 0
  %2290 = vmatprep.subr.bf16.mxu0 0
  %2291 = vmatpush1.bf16.msra.mxu0 0
  %2292 = vmatprep.subr.bf16.mxu0 0
  %2293 = vmatpush1.bf16.msra.mxu0 0
  %2294 = vmatprep.subr.bf16.mxu0 0
  %2295 = vmatpush1.bf16.msra.mxu0 0
  %2296 = vmatprep.subr.bf16.mxu0 0
  %2297 = vmatpush1.bf16.msra.mxu0 0
  %2298 = vmatprep.subr.bf16.mxu0 0
  %2299 = vmatpush1.bf16.msra.mxu0 0
  %2300 = vmatprep.subr.bf16.mxu0 0
  %2301 = vmatpush1.bf16.msra.mxu0 0
  %2302 = vmatprep.subr.bf16.mxu0 %v2280
  %2303 = vmatpush1.bf16.msra.mxu0 %v2277
  %2304 = vmatprep.subr.bf16.mxu0 0
  %2305 = vmatpush2.bf16.msra.mxu0 0
  %2306 = vmatprep.subr.bf16.mxu0 0
  %2307 = vmatpush2.bf16.msra.mxu0 0
  %2308 = vmatprep.subr.bf16.mxu0 0
  %2309 = vmatpush2.bf16.msra.mxu0 0
  %2310 = vmatprep.subr.bf16.mxu0 0
  %2311 = vmatpush2.bf16.msra.mxu0 0
  %2312 = vmatprep.subr.bf16.mxu0 0
  %2313 = vmatpush2.bf16.msra.mxu0 0
  %2314 = vmatprep.subr.bf16.mxu0 0
  %2315 = vmatpush2.bf16.msra.mxu0 0
  %2316 = vmatprep.subr.bf16.mxu0 0
  %2317 = vmatpush2.bf16.msra.mxu0 0
  %2318 = vmatprep.subr.bf16.mxu0 0
  %2319 = vmatpush2.bf16.msra.mxu0 0
  %2320 = vmatprep.mubr.bf16.mxu0 0
  %2321 = vmatmul.mubr.bf16.gmra.mxu0 %v2274
  %v2322 = vpop.f32.mrf.mxu0
  %v2323 = vadd.f32 0.0, %v2322
  %v2324 = vpop.f32.mrf.mxu0
  %v2325 = vadd.f32 0.0, %v2324
  %v2326 = vpop.f32.mrf.mxu0
  %v2327 = vpop.f32.mrf.mxu0
  %2328 = vdwg.mxu0
  %2329 = vmatprep.subr.bf16.mxu0 0
  %2330 = vmatpush1.bf16.msra.mxu0 0
  %2331 = vmatprep.subr.bf16.mxu0 0
  %2332 = vmatpush1.bf16.msra.mxu0 0
  %2333 = vmatprep.subr.bf16.mxu0 0
  %2334 = vmatpush1.bf16.msra.mxu0 0
  %2335 = vmatprep.subr.bf16.mxu0 0
  %2336 = vmatpush1.bf16.msra.mxu0 0
  %2337 = vmatprep.subr.bf16.mxu0 0
  %2338 = vmatpush1.bf16.msra.mxu0 0
  %2339 = vmatprep.subr.bf16.mxu0 0
  %2340 = vmatpush1.bf16.msra.mxu0 0
  %2341 = vmatprep.subr.bf16.mxu0 0
  %2342 = vmatpush1.bf16.msra.mxu0 0
  %2343 = vmatprep.subr.bf16.mxu0 %v2286
  %2344 = vmatpush1.bf16.msra.mxu0 %v2283
  %2345 = vmatprep.subr.bf16.mxu0 0
  %2346 = vmatpush2.bf16.msra.mxu0 0
  %2347 = vmatprep.subr.bf16.mxu0 0
  %2348 = vmatpush2.bf16.msra.mxu0 0
  %2349 = vmatprep.subr.bf16.mxu0 0
  %2350 = vmatpush2.bf16.msra.mxu0 0
  %2351 = vmatprep.subr.bf16.mxu0 0
  %2352 = vmatpush2.bf16.msra.mxu0 0
  %2353 = vmatprep.subr.bf16.mxu0 0
  %2354 = vmatpush2.bf16.msra.mxu0 0
  %2355 = vmatprep.subr.bf16.mxu0 0
  %2356 = vmatpush2.bf16.msra.mxu0 0
  %2357 = vmatprep.subr.bf16.mxu0 0
  %2358 = vmatpush2.bf16.msra.mxu0 0
  %2359 = vmatprep.subr.bf16.mxu0 0
  %2360 = vmatpush2.bf16.msra.mxu0 0
  %2361 = vmatprep.mubr.bf16.mxu0 0
  %2362 = vmatmul.mubr.bf16.gmra.mxu0 %v2274
  %v2363 = vpop.f32.mrf.mxu0
  %v2364 = vadd.f32 0.0, %v2363
  %v2365 = vpop.f32.mrf.mxu0
  %v2366 = vadd.f32 0.0, %v2365
  %v2367 = vpop.f32.mrf.mxu0
  %v2368 = vpop.f32.mrf.mxu0
  %2369 = vdwg.mxu0
  %v2370 = vadd.f32 %v2247, %v2323
  %v2371 = vadd.f32 %v2248, %v2325
  %v2372 = vadd.f32 %v2249, %v2364
  %v2373 = vadd.f32 %v2250, %v2366
  %2374 = vrot.lane.b32.xlu0 %v44, 113
  %v2375 = vpop.permute.xlu0 %2374
  %2376 = vrot.lane.b32.xlu0 %v168, 113
  %v2377 = vpop.permute.xlu0 %2376
  %2378 = vrot.lane.b32.xlu0 %v45, 113
  %v2379 = vpop.permute.xlu0 %2378
  %2380 = vrot.lane.b32.xlu0 %v169, 113
  %v2381 = vpop.permute.xlu0 %2380
  %v2382 = vsel %vm1257, %v2379, %v2381
  %v2383 = vsel %vm1257, %v2377, %v2379
  %v2384 = vsel %vm1257, %v2375, %v2377
  %v2385 = vsel %vm1257, %v2381, %v2375
  %v2386 = vmul.f32 %v2384, %v1265
  %v2387 = vmul.f32 %v2383, %v1269
  %v2388 = vmul.f32 %v2382, %v1273
  %v2389 = vmul.f32 %v2385, %v1277
  %s2390 = scalar_lea.vmem %s7, 12
  %v2391 = vld [vmem:[%s2390] sm:$0x3]
  %v2392 = vpack.c.bf16 %v2386, %v2386
  %v2393 = vpack.c.bf16 %v2387, %v2387
  %v2394 = vpack.c.bf16 %v2388, %v2388
  %v2395 = vpack.c.bf16 %v2389, %v2389
  %v2397 = vsel %vm66, %v2391, 0
  %v2400 = vsel %vm70, %v2392, 0
  %v2403 = vsel %vm70, %v2393, 0
  %v2406 = vsel %vm70, %v2394, 0
  %v2409 = vsel %vm70, %v2395, 0
  %2411 = vmatprep.subr.bf16.mxu0 0
  %2412 = vmatpush1.bf16.msra.mxu0 0
  %2413 = vmatprep.subr.bf16.mxu0 0
  %2414 = vmatpush1.bf16.msra.mxu0 0
  %2415 = vmatprep.subr.bf16.mxu0 0
  %2416 = vmatpush1.bf16.msra.mxu0 0
  %2417 = vmatprep.subr.bf16.mxu0 0
  %2418 = vmatpush1.bf16.msra.mxu0 0
  %2419 = vmatprep.subr.bf16.mxu0 0
  %2420 = vmatpush1.bf16.msra.mxu0 0
  %2421 = vmatprep.subr.bf16.mxu0 0
  %2422 = vmatpush1.bf16.msra.mxu0 0
  %2423 = vmatprep.subr.bf16.mxu0 0
  %2424 = vmatpush1.bf16.msra.mxu0 0
  %2425 = vmatprep.subr.bf16.mxu0 %v2403
  %2426 = vmatpush1.bf16.msra.mxu0 %v2400
  %2427 = vmatprep.subr.bf16.mxu0 0
  %2428 = vmatpush2.bf16.msra.mxu0 0
  %2429 = vmatprep.subr.bf16.mxu0 0
  %2430 = vmatpush2.bf16.msra.mxu0 0
  %2431 = vmatprep.subr.bf16.mxu0 0
  %2432 = vmatpush2.bf16.msra.mxu0 0
  %2433 = vmatprep.subr.bf16.mxu0 0
  %2434 = vmatpush2.bf16.msra.mxu0 0
  %2435 = vmatprep.subr.bf16.mxu0 0
  %2436 = vmatpush2.bf16.msra.mxu0 0
  %2437 = vmatprep.subr.bf16.mxu0 0
  %2438 = vmatpush2.bf16.msra.mxu0 0
  %2439 = vmatprep.subr.bf16.mxu0 0
  %2440 = vmatpush2.bf16.msra.mxu0 0
  %2441 = vmatprep.subr.bf16.mxu0 0
  %2442 = vmatpush2.bf16.msra.mxu0 0
  %2443 = vmatprep.mubr.bf16.mxu0 0
  %2444 = vmatmul.mubr.bf16.gmra.mxu0 %v2397
  %v2445 = vpop.f32.mrf.mxu0
  %v2446 = vadd.f32 0.0, %v2445
  %v2447 = vpop.f32.mrf.mxu0
  %v2448 = vadd.f32 0.0, %v2447
  %v2449 = vpop.f32.mrf.mxu0
  %v2450 = vpop.f32.mrf.mxu0
  %2451 = vdwg.mxu0
  %2452 = vmatprep.subr.bf16.mxu0 0
  %2453 = vmatpush1.bf16.msra.mxu0 0
  %2454 = vmatprep.subr.bf16.mxu0 0
  %2455 = vmatpush1.bf16.msra.mxu0 0
  %2456 = vmatprep.subr.bf16.mxu0 0
  %2457 = vmatpush1.bf16.msra.mxu0 0
  %2458 = vmatprep.subr.bf16.mxu0 0
  %2459 = vmatpush1.bf16.msra.mxu0 0
  %2460 = vmatprep.subr.bf16.mxu0 0
  %2461 = vmatpush1.bf16.msra.mxu0 0
  %2462 = vmatprep.subr.bf16.mxu0 0
  %2463 = vmatpush1.bf16.msra.mxu0 0
  %2464 = vmatprep.subr.bf16.mxu0 0
  %2465 = vmatpush1.bf16.msra.mxu0 0
  %2466 = vmatprep.subr.bf16.mxu0 %v2409
  %2467 = vmatpush1.bf16.msra.mxu0 %v2406
  %2468 = vmatprep.subr.bf16.mxu0 0
  %2469 = vmatpush2.bf16.msra.mxu0 0
  %2470 = vmatprep.subr.bf16.mxu0 0
  %2471 = vmatpush2.bf16.msra.mxu0 0
  %2472 = vmatprep.subr.bf16.mxu0 0
  %2473 = vmatpush2.bf16.msra.mxu0 0
  %2474 = vmatprep.subr.bf16.mxu0 0
  %2475 = vmatpush2.bf16.msra.mxu0 0
  %2476 = vmatprep.subr.bf16.mxu0 0
  %2477 = vmatpush2.bf16.msra.mxu0 0
  %2478 = vmatprep.subr.bf16.mxu0 0
  %2479 = vmatpush2.bf16.msra.mxu0 0
  %2480 = vmatprep.subr.bf16.mxu0 0
  %2481 = vmatpush2.bf16.msra.mxu0 0
  %2482 = vmatprep.subr.bf16.mxu0 0
  %2483 = vmatpush2.bf16.msra.mxu0 0
  %2484 = vmatprep.mubr.bf16.mxu0 0
  %2485 = vmatmul.mubr.bf16.gmra.mxu0 %v2397
  %v2486 = vpop.f32.mrf.mxu0
  %v2487 = vadd.f32 0.0, %v2486
  %v2488 = vpop.f32.mrf.mxu0
  %v2489 = vadd.f32 0.0, %v2488
  %v2490 = vpop.f32.mrf.mxu0
  %v2491 = vpop.f32.mrf.mxu0
  %2492 = vdwg.mxu0
  %v2493 = vadd.f32 %v2370, %v2446
  %v2494 = vadd.f32 %v2371, %v2448
  %v2495 = vadd.f32 %v2372, %v2487
  %v2496 = vadd.f32 %v2373, %v2489
  %2497 = vrot.lane.b32.xlu0 %v44, 112
  %v2498 = vpop.permute.xlu0 %2497
  %2499 = vrot.lane.b32.xlu0 %v168, 112
  %v2500 = vpop.permute.xlu0 %2499
  %2501 = vrot.lane.b32.xlu0 %v45, 112
  %v2502 = vpop.permute.xlu0 %2501
  %2503 = vrot.lane.b32.xlu0 %v169, 112
  %v2504 = vpop.permute.xlu0 %2503
  %v2505 = vsel %vm1397, %v2502, %v2504
  %v2506 = vsel %vm1397, %v2500, %v2502
  %v2507 = vsel %vm1397, %v2498, %v2500
  %v2508 = vsel %vm1397, %v2504, %v2498
  %v2509 = vmul.f32 %v2507, %v1405
  %v2510 = vmul.f32 %v2506, %v1409
  %v2511 = vmul.f32 %v2505, %v1413
  %v2512 = vmul.f32 %v2508, %v1417
  %s2513 = scalar_lea.vmem %s7, 14
  %v2514 = vld [vmem:[%s2513] sm:$0x3]
  %v2515 = vpack.c.bf16 %v2509, %v2509
  %v2516 = vpack.c.bf16 %v2510, %v2510
  %v2517 = vpack.c.bf16 %v2511, %v2511
  %v2518 = vpack.c.bf16 %v2512, %v2512
  %v2520 = vsel %vm66, %v2514, 0
  %v2523 = vsel %vm70, %v2515, 0
  %v2526 = vsel %vm70, %v2516, 0
  %v2529 = vsel %vm70, %v2517, 0
  %v2532 = vsel %vm70, %v2518, 0
  %2534 = vmatprep.subr.bf16.mxu0 0
  %2535 = vmatpush1.bf16.msra.mxu0 0
  %2536 = vmatprep.subr.bf16.mxu0 0
  %2537 = vmatpush1.bf16.msra.mxu0 0
  %2538 = vmatprep.subr.bf16.mxu0 0
  %2539 = vmatpush1.bf16.msra.mxu0 0
  %2540 = vmatprep.subr.bf16.mxu0 0
  %2541 = vmatpush1.bf16.msra.mxu0 0
  %2542 = vmatprep.subr.bf16.mxu0 0
  %2543 = vmatpush1.bf16.msra.mxu0 0
  %2544 = vmatprep.subr.bf16.mxu0 0
  %2545 = vmatpush1.bf16.msra.mxu0 0
  %2546 = vmatprep.subr.bf16.mxu0 0
  %2547 = vmatpush1.bf16.msra.mxu0 0
  %2548 = vmatprep.subr.bf16.mxu0 %v2526
  %2549 = vmatpush1.bf16.msra.mxu0 %v2523
  %2550 = vmatprep.subr.bf16.mxu0 0
  %2551 = vmatpush2.bf16.msra.mxu0 0
  %2552 = vmatprep.subr.bf16.mxu0 0
  %2553 = vmatpush2.bf16.msra.mxu0 0
  %2554 = vmatprep.subr.bf16.mxu0 0
  %2555 = vmatpush2.bf16.msra.mxu0 0
  %2556 = vmatprep.subr.bf16.mxu0 0
  %2557 = vmatpush2.bf16.msra.mxu0 0
  %2558 = vmatprep.subr.bf16.mxu0 0
  %2559 = vmatpush2.bf16.msra.mxu0 0
  %2560 = vmatprep.subr.bf16.mxu0 0
  %2561 = vmatpush2.bf16.msra.mxu0 0
  %2562 = vmatprep.subr.bf16.mxu0 0
  %2563 = vmatpush2.bf16.msra.mxu0 0
  %2564 = vmatprep.subr.bf16.mxu0 0
  %2565 = vmatpush2.bf16.msra.mxu0 0
  %2566 = vmatprep.mubr.bf16.mxu0 0
  %2567 = vmatmul.mubr.bf16.gmra.mxu0 %v2520
  %v2568 = vpop.f32.mrf.mxu0
  %v2569 = vadd.f32 0.0, %v2568
  %v2570 = vpop.f32.mrf.mxu0
  %v2571 = vadd.f32 0.0, %v2570
  %v2572 = vpop.f32.mrf.mxu0
  %v2573 = vpop.f32.mrf.mxu0
  %2574 = vdwg.mxu0
  %2575 = vmatprep.subr.bf16.mxu0 0
  %2576 = vmatpush1.bf16.msra.mxu0 0
  %2577 = vmatprep.subr.bf16.mxu0 0
  %2578 = vmatpush1.bf16.msra.mxu0 0
  %2579 = vmatprep.subr.bf16.mxu0 0
  %2580 = vmatpush1.bf16.msra.mxu0 0
  %2581 = vmatprep.subr.bf16.mxu0 0
  %2582 = vmatpush1.bf16.msra.mxu0 0
  %2583 = vmatprep.subr.bf16.mxu0 0
  %2584 = vmatpush1.bf16.msra.mxu0 0
  %2585 = vmatprep.subr.bf16.mxu0 0
  %2586 = vmatpush1.bf16.msra.mxu0 0
  %2587 = vmatprep.subr.bf16.mxu0 0
  %2588 = vmatpush1.bf16.msra.mxu0 0
  %2589 = vmatprep.subr.bf16.mxu0 %v2532
  %2590 = vmatpush1.bf16.msra.mxu0 %v2529
  %2591 = vmatprep.subr.bf16.mxu0 0
  %2592 = vmatpush2.bf16.msra.mxu0 0
  %2593 = vmatprep.subr.bf16.mxu0 0
  %2594 = vmatpush2.bf16.msra.mxu0 0
  %2595 = vmatprep.subr.bf16.mxu0 0
  %2596 = vmatpush2.bf16.msra.mxu0 0
  %2597 = vmatprep.subr.bf16.mxu0 0
  %2598 = vmatpush2.bf16.msra.mxu0 0
  %2599 = vmatprep.subr.bf16.mxu0 0
  %2600 = vmatpush2.bf16.msra.mxu0 0
  %2601 = vmatprep.subr.bf16.mxu0 0
  %2602 = vmatpush2.bf16.msra.mxu0 0
  %2603 = vmatprep.subr.bf16.mxu0 0
  %2604 = vmatpush2.bf16.msra.mxu0 0
  %2605 = vmatprep.subr.bf16.mxu0 0
  %2606 = vmatpush2.bf16.msra.mxu0 0
  %2607 = vmatprep.mubr.bf16.mxu0 0
  %2608 = vmatmul.mubr.bf16.gmra.mxu0 %v2520
  %v2609 = vpop.f32.mrf.mxu0
  %v2610 = vadd.f32 0.0, %v2609
  %v2611 = vpop.f32.mrf.mxu0
  %v2612 = vadd.f32 0.0, %v2611
  %v2613 = vpop.f32.mrf.mxu0
  %v2614 = vpop.f32.mrf.mxu0
  %2615 = vdwg.mxu0
  %v2616 = vadd.f32 %v2493, %v2569
  %v2617 = vadd.f32 %v2494, %v2571
  %v2618 = vadd.f32 %v2495, %v2610
  %v2619 = vadd.f32 %v2496, %v2612
  %2620 = vrot.lane.b32.xlu0 %v44, 111
  %v2621 = vpop.permute.xlu0 %2620
  %2622 = vrot.lane.b32.xlu0 %v168, 111
  %v2623 = vpop.permute.xlu0 %2622
  %2624 = vrot.lane.b32.xlu0 %v45, 111
  %v2625 = vpop.permute.xlu0 %2624
  %2626 = vrot.lane.b32.xlu0 %v169, 111
  %v2627 = vpop.permute.xlu0 %2626
  %v2628 = vsel %vm1537, %v2625, %v2627
  %v2629 = vsel %vm1537, %v2623, %v2625
  %v2630 = vsel %vm1537, %v2621, %v2623
  %v2631 = vsel %vm1537, %v2627, %v2621
  %v2632 = vmul.f32 %v2630, %v1545
  %v2633 = vmul.f32 %v2629, %v1549
  %v2634 = vmul.f32 %v2628, %v1553
  %v2635 = vmul.f32 %v2631, %v1557
  %s2636 = scalar_lea.vmem %s7, 16
  %v2637 = vld [vmem:[%s2636] sm:$0x3]
  %v2638 = vpack.c.bf16 %v2632, %v2632
  %v2639 = vpack.c.bf16 %v2633, %v2633
  %v2640 = vpack.c.bf16 %v2634, %v2634
  %v2641 = vpack.c.bf16 %v2635, %v2635
  %v2643 = vsel %vm66, %v2637, 0
  %v2646 = vsel %vm70, %v2638, 0
  %v2649 = vsel %vm70, %v2639, 0
  %v2652 = vsel %vm70, %v2640, 0
  %v2655 = vsel %vm70, %v2641, 0
  %2657 = vmatprep.subr.bf16.mxu0 0
  %2658 = vmatpush1.bf16.msra.mxu0 0
  %2659 = vmatprep.subr.bf16.mxu0 0
  %2660 = vmatpush1.bf16.msra.mxu0 0
  %2661 = vmatprep.subr.bf16.mxu0 0
  %2662 = vmatpush1.bf16.msra.mxu0 0
  %2663 = vmatprep.subr.bf16.mxu0 0
  %2664 = vmatpush1.bf16.msra.mxu0 0
  %2665 = vmatprep.subr.bf16.mxu0 0
  %2666 = vmatpush1.bf16.msra.mxu0 0
  %2667 = vmatprep.subr.bf16.mxu0 0
  %2668 = vmatpush1.bf16.msra.mxu0 0
  %2669 = vmatprep.subr.bf16.mxu0 0
  %2670 = vmatpush1.bf16.msra.mxu0 0
  %2671 = vmatprep.subr.bf16.mxu0 %v2649
  %2672 = vmatpush1.bf16.msra.mxu0 %v2646
  %2673 = vmatprep.subr.bf16.mxu0 0
  %2674 = vmatpush2.bf16.msra.mxu0 0
  %2675 = vmatprep.subr.bf16.mxu0 0
  %2676 = vmatpush2.bf16.msra.mxu0 0
  %2677 = vmatprep.subr.bf16.mxu0 0
  %2678 = vmatpush2.bf16.msra.mxu0 0
  %2679 = vmatprep.subr.bf16.mxu0 0
  %2680 = vmatpush2.bf16.msra.mxu0 0
  %2681 = vmatprep.subr.bf16.mxu0 0
  %2682 = vmatpush2.bf16.msra.mxu0 0
  %2683 = vmatprep.subr.bf16.mxu0 0
  %2684 = vmatpush2.bf16.msra.mxu0 0
  %2685 = vmatprep.subr.bf16.mxu0 0
  %2686 = vmatpush2.bf16.msra.mxu0 0
  %2687 = vmatprep.subr.bf16.mxu0 0
  %2688 = vmatpush2.bf16.msra.mxu0 0
  %2689 = vmatprep.mubr.bf16.mxu0 0
  %2690 = vmatmul.mubr.bf16.gmra.mxu0 %v2643
  %v2691 = vpop.f32.mrf.mxu0
  %v2692 = vadd.f32 0.0, %v2691
  %v2693 = vpop.f32.mrf.mxu0
  %v2694 = vadd.f32 0.0, %v2693
  %v2695 = vpop.f32.mrf.mxu0
  %v2696 = vpop.f32.mrf.mxu0
  %2697 = vdwg.mxu0
  %2698 = vmatprep.subr.bf16.mxu0 0
  %2699 = vmatpush1.bf16.msra.mxu0 0
  %2700 = vmatprep.subr.bf16.mxu0 0
  %2701 = vmatpush1.bf16.msra.mxu0 0
  %2702 = vmatprep.subr.bf16.mxu0 0
  %2703 = vmatpush1.bf16.msra.mxu0 0
  %2704 = vmatprep.subr.bf16.mxu0 0
  %2705 = vmatpush1.bf16.msra.mxu0 0
  %2706 = vmatprep.subr.bf16.mxu0 0
  %2707 = vmatpush1.bf16.msra.mxu0 0
  %2708 = vmatprep.subr.bf16.mxu0 0
  %2709 = vmatpush1.bf16.msra.mxu0 0
  %2710 = vmatprep.subr.bf16.mxu0 0
  %2711 = vmatpush1.bf16.msra.mxu0 0
  %2712 = vmatprep.subr.bf16.mxu0 %v2655
  %2713 = vmatpush1.bf16.msra.mxu0 %v2652
  %2714 = vmatprep.subr.bf16.mxu0 0
  %2715 = vmatpush2.bf16.msra.mxu0 0
  %2716 = vmatprep.subr.bf16.mxu0 0
  %2717 = vmatpush2.bf16.msra.mxu0 0
  %2718 = vmatprep.subr.bf16.mxu0 0
  %2719 = vmatpush2.bf16.msra.mxu0 0
  %2720 = vmatprep.subr.bf16.mxu0 0
  %2721 = vmatpush2.bf16.msra.mxu0 0
  %2722 = vmatprep.subr.bf16.mxu0 0
  %2723 = vmatpush2.bf16.msra.mxu0 0
  %2724 = vmatprep.subr.bf16.mxu0 0
  %2725 = vmatpush2.bf16.msra.mxu0 0
  %2726 = vmatprep.subr.bf16.mxu0 0
  %2727 = vmatpush2.bf16.msra.mxu0 0
  %2728 = vmatprep.subr.bf16.mxu0 0
  %2729 = vmatpush2.bf16.msra.mxu0 0
  %2730 = vmatprep.mubr.bf16.mxu0 0
  %2731 = vmatmul.mubr.bf16.gmra.mxu0 %v2643
  %v2732 = vpop.f32.mrf.mxu0
  %v2733 = vadd.f32 0.0, %v2732
  %v2734 = vpop.f32.mrf.mxu0
  %v2735 = vadd.f32 0.0, %v2734
  %v2736 = vpop.f32.mrf.mxu0
  %v2737 = vpop.f32.mrf.mxu0
  %2738 = vdwg.mxu0
  %v2739 = vadd.f32 %v2616, %v2692
  %v2740 = vadd.f32 %v2617, %v2694
  %v2741 = vadd.f32 %v2618, %v2733
  %v2742 = vadd.f32 %v2619, %v2735
  %vm2743 = vcmask 1043456
  %v2744 = vsel %vm2743, %v2739, 0.0
  %v2745 = vsel %vm2743, %v2740, 0.0
  %v2746 = vadd.f32 %v2744, %v2745
  %v2747 = vsel %vm2743, %v2741, 0.0
  %v2748 = vadd.f32 %v2746, %v2747
  %v2749 = vsel %vm2743, %v2742, 0.0
  %v2750 = vadd.f32 %v2748, %v2749
  %2751 = vadd.xlane.f32.xlu0 %v2750
  %v2752 = vpop.xlane.xlu0 %2751
  %v2753 = vmul.f32 %v2752, 0.001953125
  %v2754 = vsub.f32 %v2739, %v2753
  %v2755 = vsub.f32 %v2740, %v2753
  %v2756 = vsub.f32 %v2741, %v2753
  %v2757 = vsub.f32 %v2742, %v2753
  %v2758 = vmul.f32 %v2754, %v2754
  %v2759 = vmul.f32 %v2755, %v2755
  %v2760 = vmul.f32 %v2756, %v2756
  %v2761 = vmul.f32 %v2757, %v2757
  %v2762 = vsel %vm2743, %v2758, 0.0
  %v2763 = vsel %vm2743, %v2759, 0.0
  %v2764 = vadd.f32 %v2762, %v2763
  %v2765 = vsel %vm2743, %v2760, 0.0
  %v2766 = vadd.f32 %v2764, %v2765
  %v2767 = vsel %vm2743, %v2761, 0.0
  %v2768 = vadd.f32 %v2766, %v2767
  %2769 = vadd.xlane.f32.xlu0 %v2768
  %v2770 = vpop.xlane.xlu0 %2769
  %v2771 = vmul.f32 %v2770, 0.001953125
  %v2772 = vadd.f32 %v2771, 1e-05
  %v2773 = vrsqrt.pop %v2772
  %v2774 = vmul.f32 %v2754, %v2773
  %v2775 = vmul.f32 %v2755, %v2773
  %v2776 = vmul.f32 %v2756, %v2773
  %v2777 = vmul.f32 %v2757, %v2773
  %v2778 = vmax.f32 %v2774, 0.0
  %v2779 = vmax.f32 %v2775, 0.0
  %v2780 = vmax.f32 %v2776, 0.0
  %v2781 = vmax.f32 %v2777, 0.0
  %v2782 = vld [vmem:[%s2] sm:$0xff]
  %v2783 = vld [vmem:[%s2 + $0x8] sm:$0xff]
  %v2786 = vcombine.high %v2782, %v2782
  %v2787 = vcombine.high %v2783, %v2783
  %v2790 = vadd.f32 %v2778, %v2782
  %v2791 = vadd.f32 %v2779, %v2786
  %v2792 = vadd.f32 %v2780, %v2783
  %v2793 = vadd.f32 %v2781, %v2787
  %2794 = vrot.lane.b32.xlu0 %v2790, 17
  %v2795 = vpop.permute.xlu0 %2794
  %2796 = vrot.lane.b32.xlu0 %v2791, 17
  %v2797 = vpop.permute.xlu0 %2796
  %2798 = vrot.lane.b32.xlu0 %v2792, 17
  %v2799 = vpop.permute.xlu0 %2798
  %2800 = vrot.lane.b32.xlu0 %v2793, 17
  %v2801 = vpop.permute.xlu0 %2800
  %v2802 = vsel %vm459, %v2799, %v2801
  %v2803 = vsel %vm459, %v2797, %v2799
  %v2804 = vsel %vm459, %v2795, %v2797
  %v2805 = vsel %vm459, %v2801, %v2795
  %v2806 = vmul.f32 %v2805, %v467
  %v2807 = vmul.f32 %v2804, %v471
  %v2808 = vmul.f32 %v2803, %v475
  %v2809 = vmul.f32 %v2802, %v479
  %v2810 = vld [vmem:[%s8] sm:$0x3]
  %v2811 = vpack.c.bf16 %v2806, %v2806
  %v2812 = vpack.c.bf16 %v2807, %v2807
  %v2813 = vpack.c.bf16 %v2808, %v2808
  %v2814 = vpack.c.bf16 %v2809, %v2809
  %2815 = vrot.lane.b32.xlu0 %v2790, 16
  %v2816 = vpop.permute.xlu0 %2815
  %2817 = vrot.lane.b32.xlu0 %v2791, 16
  %v2818 = vpop.permute.xlu0 %2817
  %2819 = vrot.lane.b32.xlu0 %v2792, 16
  %v2820 = vpop.permute.xlu0 %2819
  %2821 = vrot.lane.b32.xlu0 %v2793, 16
  %v2822 = vpop.permute.xlu0 %2821
  %v2823 = vsel %vm497, %v2820, %v2822
  %v2824 = vsel %vm497, %v2818, %v2820
  %v2825 = vsel %vm497, %v2816, %v2818
  %v2826 = vsel %vm497, %v2822, %v2816
  %v2827 = vmul.f32 %v2826, %v505
  %v2828 = vmul.f32 %v2825, %v509
  %v2829 = vmul.f32 %v2824, %v513
  %v2830 = vmul.f32 %v2823, %v517
  %s2831 = scalar_lea.vmem %s8, 2
  %v2832 = vld [vmem:[%s2831] sm:$0x3]
  %v2833 = vpack.c.bf16 %v2827, %v2827
  %v2834 = vpack.c.bf16 %v2828, %v2828
  %v2835 = vpack.c.bf16 %v2829, %v2829
  %v2836 = vpack.c.bf16 %v2830, %v2830
  %v2838 = vsel %vm66, %v2832, 0
  %v2841 = vsel %vm70, %v2833, 0
  %v2844 = vsel %vm70, %v2834, 0
  %v2847 = vsel %vm70, %v2835, 0
  %v2850 = vsel %vm70, %v2836, 0
  %2852 = vmatprep.subr.bf16.mxu0 0
  %2853 = vmatpush1.bf16.msra.mxu0 0
  %2854 = vmatprep.subr.bf16.mxu0 0
  %2855 = vmatpush1.bf16.msra.mxu0 0
  %2856 = vmatprep.subr.bf16.mxu0 0
  %2857 = vmatpush1.bf16.msra.mxu0 0
  %2858 = vmatprep.subr.bf16.mxu0 0
  %2859 = vmatpush1.bf16.msra.mxu0 0
  %2860 = vmatprep.subr.bf16.mxu0 0
  %2861 = vmatpush1.bf16.msra.mxu0 0
  %2862 = vmatprep.subr.bf16.mxu0 0
  %2863 = vmatpush1.bf16.msra.mxu0 0
  %2864 = vmatprep.subr.bf16.mxu0 0
  %2865 = vmatpush1.bf16.msra.mxu0 0
  %2866 = vmatprep.subr.bf16.mxu0 %v2844
  %2867 = vmatpush1.bf16.msra.mxu0 %v2841
  %2868 = vmatprep.subr.bf16.mxu0 0
  %2869 = vmatpush2.bf16.msra.mxu0 0
  %2870 = vmatprep.subr.bf16.mxu0 0
  %2871 = vmatpush2.bf16.msra.mxu0 0
  %2872 = vmatprep.subr.bf16.mxu0 0
  %2873 = vmatpush2.bf16.msra.mxu0 0
  %2874 = vmatprep.subr.bf16.mxu0 0
  %2875 = vmatpush2.bf16.msra.mxu0 0
  %2876 = vmatprep.subr.bf16.mxu0 0
  %2877 = vmatpush2.bf16.msra.mxu0 0
  %2878 = vmatprep.subr.bf16.mxu0 0
  %2879 = vmatpush2.bf16.msra.mxu0 0
  %2880 = vmatprep.subr.bf16.mxu0 0
  %2881 = vmatpush2.bf16.msra.mxu0 0
  %2882 = vmatprep.subr.bf16.mxu0 0
  %2883 = vmatpush2.bf16.msra.mxu0 0
  %2884 = vmatprep.mubr.bf16.mxu0 0
  %2885 = vmatmul.mubr.bf16.gmra.mxu0 %v2838
  %v2886 = vpop.f32.mrf.mxu0
  %v2887 = vadd.f32 0.0, %v2886
  %v2888 = vpop.f32.mrf.mxu0
  %v2889 = vadd.f32 0.0, %v2888
  %v2890 = vpop.f32.mrf.mxu0
  %v2891 = vpop.f32.mrf.mxu0
  %2892 = vdwg.mxu0
  %2893 = vmatprep.subr.bf16.mxu0 0
  %2894 = vmatpush1.bf16.msra.mxu0 0
  %2895 = vmatprep.subr.bf16.mxu0 0
  %2896 = vmatpush1.bf16.msra.mxu0 0
  %2897 = vmatprep.subr.bf16.mxu0 0
  %2898 = vmatpush1.bf16.msra.mxu0 0
  %2899 = vmatprep.subr.bf16.mxu0 0
  %2900 = vmatpush1.bf16.msra.mxu0 0
  %2901 = vmatprep.subr.bf16.mxu0 0
  %2902 = vmatpush1.bf16.msra.mxu0 0
  %2903 = vmatprep.subr.bf16.mxu0 0
  %2904 = vmatpush1.bf16.msra.mxu0 0
  %2905 = vmatprep.subr.bf16.mxu0 0
  %2906 = vmatpush1.bf16.msra.mxu0 0
  %2907 = vmatprep.subr.bf16.mxu0 %v2850
  %2908 = vmatpush1.bf16.msra.mxu0 %v2847
  %2909 = vmatprep.subr.bf16.mxu0 0
  %2910 = vmatpush2.bf16.msra.mxu0 0
  %2911 = vmatprep.subr.bf16.mxu0 0
  %2912 = vmatpush2.bf16.msra.mxu0 0
  %2913 = vmatprep.subr.bf16.mxu0 0
  %2914 = vmatpush2.bf16.msra.mxu0 0
  %2915 = vmatprep.subr.bf16.mxu0 0
  %2916 = vmatpush2.bf16.msra.mxu0 0
  %2917 = vmatprep.subr.bf16.mxu0 0
  %2918 = vmatpush2.bf16.msra.mxu0 0
  %2919 = vmatprep.subr.bf16.mxu0 0
  %2920 = vmatpush2.bf16.msra.mxu0 0
  %2921 = vmatprep.subr.bf16.mxu0 0
  %2922 = vmatpush2.bf16.msra.mxu0 0
  %2923 = vmatprep.subr.bf16.mxu0 0
  %2924 = vmatpush2.bf16.msra.mxu0 0
  %2925 = vmatprep.mubr.bf16.mxu0 0
  %2926 = vmatmul.mubr.bf16.gmra.mxu0 %v2838
  %v2927 = vpop.f32.mrf.mxu0
  %v2928 = vadd.f32 0.0, %v2927
  %v2929 = vpop.f32.mrf.mxu0
  %v2930 = vadd.f32 0.0, %v2929
  %v2931 = vpop.f32.mrf.mxu0
  %v2932 = vpop.f32.mrf.mxu0
  %2933 = vdwg.mxu0
  %v2935 = vsel %vm66, %v2810, 0
  %v2938 = vsel %vm70, %v2811, 0
  %v2941 = vsel %vm70, %v2812, 0
  %v2944 = vsel %vm70, %v2813, 0
  %v2947 = vsel %vm70, %v2814, 0
  %2949 = vmatprep.subr.bf16.mxu0 0
  %2950 = vmatpush1.bf16.msra.mxu0 0
  %2951 = vmatprep.subr.bf16.mxu0 0
  %2952 = vmatpush1.bf16.msra.mxu0 0
  %2953 = vmatprep.subr.bf16.mxu0 0
  %2954 = vmatpush1.bf16.msra.mxu0 0
  %2955 = vmatprep.subr.bf16.mxu0 0
  %2956 = vmatpush1.bf16.msra.mxu0 0
  %2957 = vmatprep.subr.bf16.mxu0 0
  %2958 = vmatpush1.bf16.msra.mxu0 0
  %2959 = vmatprep.subr.bf16.mxu0 0
  %2960 = vmatpush1.bf16.msra.mxu0 0
  %2961 = vmatprep.subr.bf16.mxu0 0
  %2962 = vmatpush1.bf16.msra.mxu0 0
  %2963 = vmatprep.subr.bf16.mxu0 %v2941
  %2964 = vmatpush1.bf16.msra.mxu0 %v2938
  %2965 = vmatprep.subr.bf16.mxu0 0
  %2966 = vmatpush2.bf16.msra.mxu0 0
  %2967 = vmatprep.subr.bf16.mxu0 0
  %2968 = vmatpush2.bf16.msra.mxu0 0
  %2969 = vmatprep.subr.bf16.mxu0 0
  %2970 = vmatpush2.bf16.msra.mxu0 0
  %2971 = vmatprep.subr.bf16.mxu0 0
  %2972 = vmatpush2.bf16.msra.mxu0 0
  %2973 = vmatprep.subr.bf16.mxu0 0
  %2974 = vmatpush2.bf16.msra.mxu0 0
  %2975 = vmatprep.subr.bf16.mxu0 0
  %2976 = vmatpush2.bf16.msra.mxu0 0
  %2977 = vmatprep.subr.bf16.mxu0 0
  %2978 = vmatpush2.bf16.msra.mxu0 0
  %2979 = vmatprep.subr.bf16.mxu0 0
  %2980 = vmatpush2.bf16.msra.mxu0 0
  %2981 = vmatprep.mubr.bf16.mxu0 0
  %2982 = vmatmul.mubr.bf16.gmra.mxu0 %v2935
  %v2983 = vpop.f32.mrf.mxu0
  %v2984 = vadd.f32 %v2887, %v2983
  %v2985 = vpop.f32.mrf.mxu0
  %v2986 = vadd.f32 %v2889, %v2985
  %v2987 = vpop.f32.mrf.mxu0
  %v2988 = vpop.f32.mrf.mxu0
  %2989 = vdwg.mxu0
  %2990 = vmatprep.subr.bf16.mxu0 0
  %2991 = vmatpush1.bf16.msra.mxu0 0
  %2992 = vmatprep.subr.bf16.mxu0 0
  %2993 = vmatpush1.bf16.msra.mxu0 0
  %2994 = vmatprep.subr.bf16.mxu0 0
  %2995 = vmatpush1.bf16.msra.mxu0 0
  %2996 = vmatprep.subr.bf16.mxu0 0
  %2997 = vmatpush1.bf16.msra.mxu0 0
  %2998 = vmatprep.subr.bf16.mxu0 0
  %2999 = vmatpush1.bf16.msra.mxu0 0
  %3000 = vmatprep.subr.bf16.mxu0 0
  %3001 = vmatpush1.bf16.msra.mxu0 0
  %3002 = vmatprep.subr.bf16.mxu0 0
  %3003 = vmatpush1.bf16.msra.mxu0 0
  %3004 = vmatprep.subr.bf16.mxu0 %v2947
  %3005 = vmatpush1.bf16.msra.mxu0 %v2944
  %3006 = vmatprep.subr.bf16.mxu0 0
  %3007 = vmatpush2.bf16.msra.mxu0 0
  %3008 = vmatprep.subr.bf16.mxu0 0
  %3009 = vmatpush2.bf16.msra.mxu0 0
  %3010 = vmatprep.subr.bf16.mxu0 0
  %3011 = vmatpush2.bf16.msra.mxu0 0
  %3012 = vmatprep.subr.bf16.mxu0 0
  %3013 = vmatpush2.bf16.msra.mxu0 0
  %3014 = vmatprep.subr.bf16.mxu0 0
  %3015 = vmatpush2.bf16.msra.mxu0 0
  %3016 = vmatprep.subr.bf16.mxu0 0
  %3017 = vmatpush2.bf16.msra.mxu0 0
  %3018 = vmatprep.subr.bf16.mxu0 0
  %3019 = vmatpush2.bf16.msra.mxu0 0
  %3020 = vmatprep.subr.bf16.mxu0 0
  %3021 = vmatpush2.bf16.msra.mxu0 0
  %3022 = vmatprep.mubr.bf16.mxu0 0
  %3023 = vmatmul.mubr.bf16.gmra.mxu0 %v2935
  %v3024 = vpop.f32.mrf.mxu0
  %v3025 = vadd.f32 %v2928, %v3024
  %v3026 = vpop.f32.mrf.mxu0
  %v3027 = vadd.f32 %v2930, %v3026
  %v3028 = vpop.f32.mrf.mxu0
  %v3029 = vpop.f32.mrf.mxu0
  %3030 = vdwg.mxu0
  %3031 = vrot.lane.b32.xlu0 %v2790, 15
  %v3032 = vpop.permute.xlu0 %3031
  %3033 = vrot.lane.b32.xlu0 %v2791, 15
  %v3034 = vpop.permute.xlu0 %3033
  %3035 = vrot.lane.b32.xlu0 %v2792, 15
  %v3036 = vpop.permute.xlu0 %3035
  %3037 = vrot.lane.b32.xlu0 %v2793, 15
  %v3038 = vpop.permute.xlu0 %3037
  %v3039 = vsel %vm730, %v3036, %v3038
  %v3040 = vsel %vm730, %v3034, %v3036
  %v3041 = vsel %vm730, %v3032, %v3034
  %v3042 = vsel %vm730, %v3038, %v3032
  %v3043 = vmul.f32 %v3042, %v738
  %v3044 = vmul.f32 %v3041, %v742
  %v3045 = vmul.f32 %v3040, %v746
  %v3046 = vmul.f32 %v3039, %v750
  %s3047 = scalar_lea.vmem %s8, 4
  %v3048 = vld [vmem:[%s3047] sm:$0x3]
  %v3049 = vpack.c.bf16 %v3043, %v3043
  %v3050 = vpack.c.bf16 %v3044, %v3044
  %v3051 = vpack.c.bf16 %v3045, %v3045
  %v3052 = vpack.c.bf16 %v3046, %v3046
  %v3054 = vsel %vm66, %v3048, 0
  %v3057 = vsel %vm70, %v3049, 0
  %v3060 = vsel %vm70, %v3050, 0
  %v3063 = vsel %vm70, %v3051, 0
  %v3066 = vsel %vm70, %v3052, 0
  %3068 = vmatprep.subr.bf16.mxu0 0
  %3069 = vmatpush1.bf16.msra.mxu0 0
  %3070 = vmatprep.subr.bf16.mxu0 0
  %3071 = vmatpush1.bf16.msra.mxu0 0
  %3072 = vmatprep.subr.bf16.mxu0 0
  %3073 = vmatpush1.bf16.msra.mxu0 0
  %3074 = vmatprep.subr.bf16.mxu0 0
  %3075 = vmatpush1.bf16.msra.mxu0 0
  %3076 = vmatprep.subr.bf16.mxu0 0
  %3077 = vmatpush1.bf16.msra.mxu0 0
  %3078 = vmatprep.subr.bf16.mxu0 0
  %3079 = vmatpush1.bf16.msra.mxu0 0
  %3080 = vmatprep.subr.bf16.mxu0 0
  %3081 = vmatpush1.bf16.msra.mxu0 0
  %3082 = vmatprep.subr.bf16.mxu0 %v3060
  %3083 = vmatpush1.bf16.msra.mxu0 %v3057
  %3084 = vmatprep.subr.bf16.mxu0 0
  %3085 = vmatpush2.bf16.msra.mxu0 0
  %3086 = vmatprep.subr.bf16.mxu0 0
  %3087 = vmatpush2.bf16.msra.mxu0 0
  %3088 = vmatprep.subr.bf16.mxu0 0
  %3089 = vmatpush2.bf16.msra.mxu0 0
  %3090 = vmatprep.subr.bf16.mxu0 0
  %3091 = vmatpush2.bf16.msra.mxu0 0
  %3092 = vmatprep.subr.bf16.mxu0 0
  %3093 = vmatpush2.bf16.msra.mxu0 0
  %3094 = vmatprep.subr.bf16.mxu0 0
  %3095 = vmatpush2.bf16.msra.mxu0 0
  %3096 = vmatprep.subr.bf16.mxu0 0
  %3097 = vmatpush2.bf16.msra.mxu0 0
  %3098 = vmatprep.subr.bf16.mxu0 0
  %3099 = vmatpush2.bf16.msra.mxu0 0
  %3100 = vmatprep.mubr.bf16.mxu0 0
  %3101 = vmatmul.mubr.bf16.gmra.mxu0 %v3054
  %v3102 = vpop.f32.mrf.mxu0
  %v3103 = vadd.f32 0.0, %v3102
  %v3104 = vpop.f32.mrf.mxu0
  %v3105 = vadd.f32 0.0, %v3104
  %v3106 = vpop.f32.mrf.mxu0
  %v3107 = vpop.f32.mrf.mxu0
  %3108 = vdwg.mxu0
  %3109 = vmatprep.subr.bf16.mxu0 0
  %3110 = vmatpush1.bf16.msra.mxu0 0
  %3111 = vmatprep.subr.bf16.mxu0 0
  %3112 = vmatpush1.bf16.msra.mxu0 0
  %3113 = vmatprep.subr.bf16.mxu0 0
  %3114 = vmatpush1.bf16.msra.mxu0 0
  %3115 = vmatprep.subr.bf16.mxu0 0
  %3116 = vmatpush1.bf16.msra.mxu0 0
  %3117 = vmatprep.subr.bf16.mxu0 0
  %3118 = vmatpush1.bf16.msra.mxu0 0
  %3119 = vmatprep.subr.bf16.mxu0 0
  %3120 = vmatpush1.bf16.msra.mxu0 0
  %3121 = vmatprep.subr.bf16.mxu0 0
  %3122 = vmatpush1.bf16.msra.mxu0 0
  %3123 = vmatprep.subr.bf16.mxu0 %v3066
  %3124 = vmatpush1.bf16.msra.mxu0 %v3063
  %3125 = vmatprep.subr.bf16.mxu0 0
  %3126 = vmatpush2.bf16.msra.mxu0 0
  %3127 = vmatprep.subr.bf16.mxu0 0
  %3128 = vmatpush2.bf16.msra.mxu0 0
  %3129 = vmatprep.subr.bf16.mxu0 0
  %3130 = vmatpush2.bf16.msra.mxu0 0
  %3131 = vmatprep.subr.bf16.mxu0 0
  %3132 = vmatpush2.bf16.msra.mxu0 0
  %3133 = vmatprep.subr.bf16.mxu0 0
  %3134 = vmatpush2.bf16.msra.mxu0 0
  %3135 = vmatprep.subr.bf16.mxu0 0
  %3136 = vmatpush2.bf16.msra.mxu0 0
  %3137 = vmatprep.subr.bf16.mxu0 0
  %3138 = vmatpush2.bf16.msra.mxu0 0
  %3139 = vmatprep.subr.bf16.mxu0 0
  %3140 = vmatpush2.bf16.msra.mxu0 0
  %3141 = vmatprep.mubr.bf16.mxu0 0
  %3142 = vmatmul.mubr.bf16.gmra.mxu0 %v3054
  %v3143 = vpop.f32.mrf.mxu0
  %v3144 = vadd.f32 0.0, %v3143
  %v3145 = vpop.f32.mrf.mxu0
  %v3146 = vadd.f32 0.0, %v3145
  %v3147 = vpop.f32.mrf.mxu0
  %v3148 = vpop.f32.mrf.mxu0
  %3149 = vdwg.mxu0
  %v3150 = vadd.f32 %v2984, %v3103
  %v3151 = vadd.f32 %v2986, %v3105
  %v3152 = vadd.f32 %v3025, %v3144
  %v3153 = vadd.f32 %v3027, %v3146
  %3154 = vrot.lane.b32.xlu0 %v2790, 1
  %v3155 = vpop.permute.xlu0 %3154
  %3156 = vrot.lane.b32.xlu0 %v2791, 1
  %v3157 = vpop.permute.xlu0 %3156
  %3158 = vrot.lane.b32.xlu0 %v2792, 1
  %v3159 = vpop.permute.xlu0 %3158
  %3160 = vrot.lane.b32.xlu0 %v2793, 1
  %v3161 = vpop.permute.xlu0 %3160
  %v3162 = vsel %vm870, %v3159, %v3161
  %v3163 = vsel %vm870, %v3157, %v3159
  %v3164 = vsel %vm870, %v3155, %v3157
  %v3165 = vsel %vm870, %v3161, %v3155
  %v3166 = vmul.f32 %v3165, %v878
  %v3167 = vmul.f32 %v3164, %v882
  %v3168 = vmul.f32 %v3163, %v886
  %v3169 = vmul.f32 %v3162, %v890
  %s3170 = scalar_lea.vmem %s8, 6
  %v3171 = vld [vmem:[%s3170] sm:$0x3]
  %v3172 = vpack.c.bf16 %v3166, %v3166
  %v3173 = vpack.c.bf16 %v3167, %v3167
  %v3174 = vpack.c.bf16 %v3168, %v3168
  %v3175 = vpack.c.bf16 %v3169, %v3169
  %v3177 = vsel %vm66, %v3171, 0
  %v3180 = vsel %vm70, %v3172, 0
  %v3183 = vsel %vm70, %v3173, 0
  %v3186 = vsel %vm70, %v3174, 0
  %v3189 = vsel %vm70, %v3175, 0
  %3191 = vmatprep.subr.bf16.mxu0 0
  %3192 = vmatpush1.bf16.msra.mxu0 0
  %3193 = vmatprep.subr.bf16.mxu0 0
  %3194 = vmatpush1.bf16.msra.mxu0 0
  %3195 = vmatprep.subr.bf16.mxu0 0
  %3196 = vmatpush1.bf16.msra.mxu0 0
  %3197 = vmatprep.subr.bf16.mxu0 0
  %3198 = vmatpush1.bf16.msra.mxu0 0
  %3199 = vmatprep.subr.bf16.mxu0 0
  %3200 = vmatpush1.bf16.msra.mxu0 0
  %3201 = vmatprep.subr.bf16.mxu0 0
  %3202 = vmatpush1.bf16.msra.mxu0 0
  %3203 = vmatprep.subr.bf16.mxu0 0
  %3204 = vmatpush1.bf16.msra.mxu0 0
  %3205 = vmatprep.subr.bf16.mxu0 %v3183
  %3206 = vmatpush1.bf16.msra.mxu0 %v3180
  %3207 = vmatprep.subr.bf16.mxu0 0
  %3208 = vmatpush2.bf16.msra.mxu0 0
  %3209 = vmatprep.subr.bf16.mxu0 0
  %3210 = vmatpush2.bf16.msra.mxu0 0
  %3211 = vmatprep.subr.bf16.mxu0 0
  %3212 = vmatpush2.bf16.msra.mxu0 0
  %3213 = vmatprep.subr.bf16.mxu0 0
  %3214 = vmatpush2.bf16.msra.mxu0 0
  %3215 = vmatprep.subr.bf16.mxu0 0
  %3216 = vmatpush2.bf16.msra.mxu0 0
  %3217 = vmatprep.subr.bf16.mxu0 0
  %3218 = vmatpush2.bf16.msra.mxu0 0
  %3219 = vmatprep.subr.bf16.mxu0 0
  %3220 = vmatpush2.bf16.msra.mxu0 0
  %3221 = vmatprep.subr.bf16.mxu0 0
  %3222 = vmatpush2.bf16.msra.mxu0 0
  %3223 = vmatprep.mubr.bf16.mxu0 0
  %3224 = vmatmul.mubr.bf16.gmra.mxu0 %v3177
  %v3225 = vpop.f32.mrf.mxu0
  %v3226 = vadd.f32 0.0, %v3225
  %v3227 = vpop.f32.mrf.mxu0
  %v3228 = vadd.f32 0.0, %v3227
  %v3229 = vpop.f32.mrf.mxu0
  %v3230 = vpop.f32.mrf.mxu0
  %3231 = vdwg.mxu0
  %3232 = vmatprep.subr.bf16.mxu0 0
  %3233 = vmatpush1.bf16.msra.mxu0 0
  %3234 = vmatprep.subr.bf16.mxu0 0
  %3235 = vmatpush1.bf16.msra.mxu0 0
  %3236 = vmatprep.subr.bf16.mxu0 0
  %3237 = vmatpush1.bf16.msra.mxu0 0
  %3238 = vmatprep.subr.bf16.mxu0 0
  %3239 = vmatpush1.bf16.msra.mxu0 0
  %3240 = vmatprep.subr.bf16.mxu0 0
  %3241 = vmatpush1.bf16.msra.mxu0 0
  %3242 = vmatprep.subr.bf16.mxu0 0
  %3243 = vmatpush1.bf16.msra.mxu0 0
  %3244 = vmatprep.subr.bf16.mxu0 0
  %3245 = vmatpush1.bf16.msra.mxu0 0
  %3246 = vmatprep.subr.bf16.mxu0 %v3189
  %3247 = vmatpush1.bf16.msra.mxu0 %v3186
  %3248 = vmatprep.subr.bf16.mxu0 0
  %3249 = vmatpush2.bf16.msra.mxu0 0
  %3250 = vmatprep.subr.bf16.mxu0 0
  %3251 = vmatpush2.bf16.msra.mxu0 0
  %3252 = vmatprep.subr.bf16.mxu0 0
  %3253 = vmatpush2.bf16.msra.mxu0 0
  %3254 = vmatprep.subr.bf16.mxu0 0
  %3255 = vmatpush2.bf16.msra.mxu0 0
  %3256 = vmatprep.subr.bf16.mxu0 0
  %3257 = vmatpush2.bf16.msra.mxu0 0
  %3258 = vmatprep.subr.bf16.mxu0 0
  %3259 = vmatpush2.bf16.msra.mxu0 0
  %3260 = vmatprep.subr.bf16.mxu0 0
  %3261 = vmatpush2.bf16.msra.mxu0 0
  %3262 = vmatprep.subr.bf16.mxu0 0
  %3263 = vmatpush2.bf16.msra.mxu0 0
  %3264 = vmatprep.mubr.bf16.mxu0 0
  %3265 = vmatmul.mubr.bf16.gmra.mxu0 %v3177
  %v3266 = vpop.f32.mrf.mxu0
  %v3267 = vadd.f32 0.0, %v3266
  %v3268 = vpop.f32.mrf.mxu0
  %v3269 = vadd.f32 0.0, %v3268
  %v3270 = vpop.f32.mrf.mxu0
  %v3271 = vpop.f32.mrf.mxu0
  %3272 = vdwg.mxu0
  %v3273 = vadd.f32 %v3150, %v3226
  %v3274 = vadd.f32 %v3151, %v3228
  %v3275 = vadd.f32 %v3152, %v3267
  %v3276 = vadd.f32 %v3153, %v3269
  %s3277 = scalar_lea.vmem %s8, 8
  %v3278 = vld [vmem:[%s3277] sm:$0x3]
  %v3279 = vpack.c.bf16 %v2790, %v2790
  %v3280 = vpack.c.bf16 %v2791, %v2791
  %v3281 = vpack.c.bf16 %v2792, %v2792
  %v3282 = vpack.c.bf16 %v2793, %v2793
  %v3284 = vsel %vm66, %v3278, 0
  %v3287 = vsel %vm70, %v3279, 0
  %v3290 = vsel %vm70, %v3280, 0
  %v3293 = vsel %vm70, %v3281, 0
  %v3296 = vsel %vm70, %v3282, 0
  %3298 = vmatprep.subr.bf16.mxu0 0
  %3299 = vmatpush1.bf16.msra.mxu0 0
  %3300 = vmatprep.subr.bf16.mxu0 0
  %3301 = vmatpush1.bf16.msra.mxu0 0
  %3302 = vmatprep.subr.bf16.mxu0 0
  %3303 = vmatpush1.bf16.msra.mxu0 0
  %3304 = vmatprep.subr.bf16.mxu0 0
  %3305 = vmatpush1.bf16.msra.mxu0 0
  %3306 = vmatprep.subr.bf16.mxu0 0
  %3307 = vmatpush1.bf16.msra.mxu0 0
  %3308 = vmatprep.subr.bf16.mxu0 0
  %3309 = vmatpush1.bf16.msra.mxu0 0
  %3310 = vmatprep.subr.bf16.mxu0 0
  %3311 = vmatpush1.bf16.msra.mxu0 0
  %3312 = vmatprep.subr.bf16.mxu0 %v3290
  %3313 = vmatpush1.bf16.msra.mxu0 %v3287
  %3314 = vmatprep.subr.bf16.mxu0 0
  %3315 = vmatpush2.bf16.msra.mxu0 0
  %3316 = vmatprep.subr.bf16.mxu0 0
  %3317 = vmatpush2.bf16.msra.mxu0 0
  %3318 = vmatprep.subr.bf16.mxu0 0
  %3319 = vmatpush2.bf16.msra.mxu0 0
  %3320 = vmatprep.subr.bf16.mxu0 0
  %3321 = vmatpush2.bf16.msra.mxu0 0
  %3322 = vmatprep.subr.bf16.mxu0 0
  %3323 = vmatpush2.bf16.msra.mxu0 0
  %3324 = vmatprep.subr.bf16.mxu0 0
  %3325 = vmatpush2.bf16.msra.mxu0 0
  %3326 = vmatprep.subr.bf16.mxu0 0
  %3327 = vmatpush2.bf16.msra.mxu0 0
  %3328 = vmatprep.subr.bf16.mxu0 0
  %3329 = vmatpush2.bf16.msra.mxu0 0
  %3330 = vmatprep.mubr.bf16.mxu0 0
  %3331 = vmatmul.mubr.bf16.gmra.mxu0 %v3284
  %v3332 = vpop.f32.mrf.mxu0
  %v3333 = vadd.f32 0.0, %v3332
  %v3334 = vpop.f32.mrf.mxu0
  %v3335 = vadd.f32 0.0, %v3334
  %v3336 = vpop.f32.mrf.mxu0
  %v3337 = vpop.f32.mrf.mxu0
  %3338 = vdwg.mxu0
  %3339 = vmatprep.subr.bf16.mxu0 0
  %3340 = vmatpush1.bf16.msra.mxu0 0
  %3341 = vmatprep.subr.bf16.mxu0 0
  %3342 = vmatpush1.bf16.msra.mxu0 0
  %3343 = vmatprep.subr.bf16.mxu0 0
  %3344 = vmatpush1.bf16.msra.mxu0 0
  %3345 = vmatprep.subr.bf16.mxu0 0
  %3346 = vmatpush1.bf16.msra.mxu0 0
  %3347 = vmatprep.subr.bf16.mxu0 0
  %3348 = vmatpush1.bf16.msra.mxu0 0
  %3349 = vmatprep.subr.bf16.mxu0 0
  %3350 = vmatpush1.bf16.msra.mxu0 0
  %3351 = vmatprep.subr.bf16.mxu0 0
  %3352 = vmatpush1.bf16.msra.mxu0 0
  %3353 = vmatprep.subr.bf16.mxu0 %v3296
  %3354 = vmatpush1.bf16.msra.mxu0 %v3293
  %3355 = vmatprep.subr.bf16.mxu0 0
  %3356 = vmatpush2.bf16.msra.mxu0 0
  %3357 = vmatprep.subr.bf16.mxu0 0
  %3358 = vmatpush2.bf16.msra.mxu0 0
  %3359 = vmatprep.subr.bf16.mxu0 0
  %3360 = vmatpush2.bf16.msra.mxu0 0
  %3361 = vmatprep.subr.bf16.mxu0 0
  %3362 = vmatpush2.bf16.msra.mxu0 0
  %3363 = vmatprep.subr.bf16.mxu0 0
  %3364 = vmatpush2.bf16.msra.mxu0 0
  %3365 = vmatprep.subr.bf16.mxu0 0
  %3366 = vmatpush2.bf16.msra.mxu0 0
  %3367 = vmatprep.subr.bf16.mxu0 0
  %3368 = vmatpush2.bf16.msra.mxu0 0
  %3369 = vmatprep.subr.bf16.mxu0 0
  %3370 = vmatpush2.bf16.msra.mxu0 0
  %3371 = vmatprep.mubr.bf16.mxu0 0
  %3372 = vmatmul.mubr.bf16.gmra.mxu0 %v3284
  %v3373 = vpop.f32.mrf.mxu0
  %v3374 = vadd.f32 0.0, %v3373
  %v3375 = vpop.f32.mrf.mxu0
  %v3376 = vadd.f32 0.0, %v3375
  %v3377 = vpop.f32.mrf.mxu0
  %v3378 = vpop.f32.mrf.mxu0
  %3379 = vdwg.mxu0
  %v3380 = vadd.f32 %v3273, %v3333
  %v3381 = vadd.f32 %v3274, %v3335
  %v3382 = vadd.f32 %v3275, %v3374
  %v3383 = vadd.f32 %v3276, %v3376
  %3384 = vrot.lane.b32.xlu0 %v2790, 127
  %v3385 = vpop.permute.xlu0 %3384
  %3386 = vrot.lane.b32.xlu0 %v2791, 127
  %v3387 = vpop.permute.xlu0 %3386
  %3388 = vrot.lane.b32.xlu0 %v2792, 127
  %v3389 = vpop.permute.xlu0 %3388
  %3390 = vrot.lane.b32.xlu0 %v2793, 127
  %v3391 = vpop.permute.xlu0 %3390
  %v3392 = vsel %vm1117, %v3389, %v3391
  %v3393 = vsel %vm1117, %v3387, %v3389
  %v3394 = vsel %vm1117, %v3385, %v3387
  %v3395 = vsel %vm1117, %v3391, %v3385
  %v3396 = vmul.f32 %v3394, %v1125
  %v3397 = vmul.f32 %v3393, %v1129
  %v3398 = vmul.f32 %v3392, %v1133
  %v3399 = vmul.f32 %v3395, %v1137
  %s3400 = scalar_lea.vmem %s8, 10
  %v3401 = vld [vmem:[%s3400] sm:$0x3]
  %v3402 = vpack.c.bf16 %v3396, %v3396
  %v3403 = vpack.c.bf16 %v3397, %v3397
  %v3404 = vpack.c.bf16 %v3398, %v3398
  %v3405 = vpack.c.bf16 %v3399, %v3399
  %v3407 = vsel %vm66, %v3401, 0
  %v3410 = vsel %vm70, %v3402, 0
  %v3413 = vsel %vm70, %v3403, 0
  %v3416 = vsel %vm70, %v3404, 0
  %v3419 = vsel %vm70, %v3405, 0
  %3421 = vmatprep.subr.bf16.mxu0 0
  %3422 = vmatpush1.bf16.msra.mxu0 0
  %3423 = vmatprep.subr.bf16.mxu0 0
  %3424 = vmatpush1.bf16.msra.mxu0 0
  %3425 = vmatprep.subr.bf16.mxu0 0
  %3426 = vmatpush1.bf16.msra.mxu0 0
  %3427 = vmatprep.subr.bf16.mxu0 0
  %3428 = vmatpush1.bf16.msra.mxu0 0
  %3429 = vmatprep.subr.bf16.mxu0 0
  %3430 = vmatpush1.bf16.msra.mxu0 0
  %3431 = vmatprep.subr.bf16.mxu0 0
  %3432 = vmatpush1.bf16.msra.mxu0 0
  %3433 = vmatprep.subr.bf16.mxu0 0
  %3434 = vmatpush1.bf16.msra.mxu0 0
  %3435 = vmatprep.subr.bf16.mxu0 %v3413
  %3436 = vmatpush1.bf16.msra.mxu0 %v3410
  %3437 = vmatprep.subr.bf16.mxu0 0
  %3438 = vmatpush2.bf16.msra.mxu0 0
  %3439 = vmatprep.subr.bf16.mxu0 0
  %3440 = vmatpush2.bf16.msra.mxu0 0
  %3441 = vmatprep.subr.bf16.mxu0 0
  %3442 = vmatpush2.bf16.msra.mxu0 0
  %3443 = vmatprep.subr.bf16.mxu0 0
  %3444 = vmatpush2.bf16.msra.mxu0 0
  %3445 = vmatprep.subr.bf16.mxu0 0
  %3446 = vmatpush2.bf16.msra.mxu0 0
  %3447 = vmatprep.subr.bf16.mxu0 0
  %3448 = vmatpush2.bf16.msra.mxu0 0
  %3449 = vmatprep.subr.bf16.mxu0 0
  %3450 = vmatpush2.bf16.msra.mxu0 0
  %3451 = vmatprep.subr.bf16.mxu0 0
  %3452 = vmatpush2.bf16.msra.mxu0 0
  %3453 = vmatprep.mubr.bf16.mxu0 0
  %3454 = vmatmul.mubr.bf16.gmra.mxu0 %v3407
  %v3455 = vpop.f32.mrf.mxu0
  %v3456 = vadd.f32 0.0, %v3455
  %v3457 = vpop.f32.mrf.mxu0
  %v3458 = vadd.f32 0.0, %v3457
  %v3459 = vpop.f32.mrf.mxu0
  %v3460 = vpop.f32.mrf.mxu0
  %3461 = vdwg.mxu0
  %3462 = vmatprep.subr.bf16.mxu0 0
  %3463 = vmatpush1.bf16.msra.mxu0 0
  %3464 = vmatprep.subr.bf16.mxu0 0
  %3465 = vmatpush1.bf16.msra.mxu0 0
  %3466 = vmatprep.subr.bf16.mxu0 0
  %3467 = vmatpush1.bf16.msra.mxu0 0
  %3468 = vmatprep.subr.bf16.mxu0 0
  %3469 = vmatpush1.bf16.msra.mxu0 0
  %3470 = vmatprep.subr.bf16.mxu0 0
  %3471 = vmatpush1.bf16.msra.mxu0 0
  %3472 = vmatprep.subr.bf16.mxu0 0
  %3473 = vmatpush1.bf16.msra.mxu0 0
  %3474 = vmatprep.subr.bf16.mxu0 0
  %3475 = vmatpush1.bf16.msra.mxu0 0
  %3476 = vmatprep.subr.bf16.mxu0 %v3419
  %3477 = vmatpush1.bf16.msra.mxu0 %v3416
  %3478 = vmatprep.subr.bf16.mxu0 0
  %3479 = vmatpush2.bf16.msra.mxu0 0
  %3480 = vmatprep.subr.bf16.mxu0 0
  %3481 = vmatpush2.bf16.msra.mxu0 0
  %3482 = vmatprep.subr.bf16.mxu0 0
  %3483 = vmatpush2.bf16.msra.mxu0 0
  %3484 = vmatprep.subr.bf16.mxu0 0
  %3485 = vmatpush2.bf16.msra.mxu0 0
  %3486 = vmatprep.subr.bf16.mxu0 0
  %3487 = vmatpush2.bf16.msra.mxu0 0
  %3488 = vmatprep.subr.bf16.mxu0 0
  %3489 = vmatpush2.bf16.msra.mxu0 0
  %3490 = vmatprep.subr.bf16.mxu0 0
  %3491 = vmatpush2.bf16.msra.mxu0 0
  %3492 = vmatprep.subr.bf16.mxu0 0
  %3493 = vmatpush2.bf16.msra.mxu0 0
  %3494 = vmatprep.mubr.bf16.mxu0 0
  %3495 = vmatmul.mubr.bf16.gmra.mxu0 %v3407
  %v3496 = vpop.f32.mrf.mxu0
  %v3497 = vadd.f32 0.0, %v3496
  %v3498 = vpop.f32.mrf.mxu0
  %v3499 = vadd.f32 0.0, %v3498
  %v3500 = vpop.f32.mrf.mxu0
  %v3501 = vpop.f32.mrf.mxu0
  %3502 = vdwg.mxu0
  %v3503 = vadd.f32 %v3380, %v3456
  %v3504 = vadd.f32 %v3381, %v3458
  %v3505 = vadd.f32 %v3382, %v3497
  %v3506 = vadd.f32 %v3383, %v3499
  %3507 = vrot.lane.b32.xlu0 %v2790, 113
  %v3508 = vpop.permute.xlu0 %3507
  %3509 = vrot.lane.b32.xlu0 %v2791, 113
  %v3510 = vpop.permute.xlu0 %3509
  %3511 = vrot.lane.b32.xlu0 %v2792, 113
  %v3512 = vpop.permute.xlu0 %3511
  %3513 = vrot.lane.b32.xlu0 %v2793, 113
  %v3514 = vpop.permute.xlu0 %3513
  %v3515 = vsel %vm1257, %v3512, %v3514
  %v3516 = vsel %vm1257, %v3510, %v3512
  %v3517 = vsel %vm1257, %v3508, %v3510
  %v3518 = vsel %vm1257, %v3514, %v3508
  %v3519 = vmul.f32 %v3517, %v1265
  %v3520 = vmul.f32 %v3516, %v1269
  %v3521 = vmul.f32 %v3515, %v1273
  %v3522 = vmul.f32 %v3518, %v1277
  %s3523 = scalar_lea.vmem %s8, 12
  %v3524 = vld [vmem:[%s3523] sm:$0x3]
  %v3525 = vpack.c.bf16 %v3519, %v3519
  %v3526 = vpack.c.bf16 %v3520, %v3520
  %v3527 = vpack.c.bf16 %v3521, %v3521
  %v3528 = vpack.c.bf16 %v3522, %v3522
  %v3530 = vsel %vm66, %v3524, 0
  %v3533 = vsel %vm70, %v3525, 0
  %v3536 = vsel %vm70, %v3526, 0
  %v3539 = vsel %vm70, %v3527, 0
  %v3542 = vsel %vm70, %v3528, 0
  %3544 = vmatprep.subr.bf16.mxu0 0
  %3545 = vmatpush1.bf16.msra.mxu0 0
  %3546 = vmatprep.subr.bf16.mxu0 0
  %3547 = vmatpush1.bf16.msra.mxu0 0
  %3548 = vmatprep.subr.bf16.mxu0 0
  %3549 = vmatpush1.bf16.msra.mxu0 0
  %3550 = vmatprep.subr.bf16.mxu0 0
  %3551 = vmatpush1.bf16.msra.mxu0 0
  %3552 = vmatprep.subr.bf16.mxu0 0
  %3553 = vmatpush1.bf16.msra.mxu0 0
  %3554 = vmatprep.subr.bf16.mxu0 0
  %3555 = vmatpush1.bf16.msra.mxu0 0
  %3556 = vmatprep.subr.bf16.mxu0 0
  %3557 = vmatpush1.bf16.msra.mxu0 0
  %3558 = vmatprep.subr.bf16.mxu0 %v3536
  %3559 = vmatpush1.bf16.msra.mxu0 %v3533
  %3560 = vmatprep.subr.bf16.mxu0 0
  %3561 = vmatpush2.bf16.msra.mxu0 0
  %3562 = vmatprep.subr.bf16.mxu0 0
  %3563 = vmatpush2.bf16.msra.mxu0 0
  %3564 = vmatprep.subr.bf16.mxu0 0
  %3565 = vmatpush2.bf16.msra.mxu0 0
  %3566 = vmatprep.subr.bf16.mxu0 0
  %3567 = vmatpush2.bf16.msra.mxu0 0
  %3568 = vmatprep.subr.bf16.mxu0 0
  %3569 = vmatpush2.bf16.msra.mxu0 0
  %3570 = vmatprep.subr.bf16.mxu0 0
  %3571 = vmatpush2.bf16.msra.mxu0 0
  %3572 = vmatprep.subr.bf16.mxu0 0
  %3573 = vmatpush2.bf16.msra.mxu0 0
  %3574 = vmatprep.subr.bf16.mxu0 0
  %3575 = vmatpush2.bf16.msra.mxu0 0
  %3576 = vmatprep.mubr.bf16.mxu0 0
  %3577 = vmatmul.mubr.bf16.gmra.mxu0 %v3530
  %v3578 = vpop.f32.mrf.mxu0
  %v3579 = vadd.f32 0.0, %v3578
  %v3580 = vpop.f32.mrf.mxu0
  %v3581 = vadd.f32 0.0, %v3580
  %v3582 = vpop.f32.mrf.mxu0
  %v3583 = vpop.f32.mrf.mxu0
  %3584 = vdwg.mxu0
  %3585 = vmatprep.subr.bf16.mxu0 0
  %3586 = vmatpush1.bf16.msra.mxu0 0
  %3587 = vmatprep.subr.bf16.mxu0 0
  %3588 = vmatpush1.bf16.msra.mxu0 0
  %3589 = vmatprep.subr.bf16.mxu0 0
  %3590 = vmatpush1.bf16.msra.mxu0 0
  %3591 = vmatprep.subr.bf16.mxu0 0
  %3592 = vmatpush1.bf16.msra.mxu0 0
  %3593 = vmatprep.subr.bf16.mxu0 0
  %3594 = vmatpush1.bf16.msra.mxu0 0
  %3595 = vmatprep.subr.bf16.mxu0 0
  %3596 = vmatpush1.bf16.msra.mxu0 0
  %3597 = vmatprep.subr.bf16.mxu0 0
  %3598 = vmatpush1.bf16.msra.mxu0 0
  %3599 = vmatprep.subr.bf16.mxu0 %v3542
  %3600 = vmatpush1.bf16.msra.mxu0 %v3539
  %3601 = vmatprep.subr.bf16.mxu0 0
  %3602 = vmatpush2.bf16.msra.mxu0 0
  %3603 = vmatprep.subr.bf16.mxu0 0
  %3604 = vmatpush2.bf16.msra.mxu0 0
  %3605 = vmatprep.subr.bf16.mxu0 0
  %3606 = vmatpush2.bf16.msra.mxu0 0
  %3607 = vmatprep.subr.bf16.mxu0 0
  %3608 = vmatpush2.bf16.msra.mxu0 0
  %3609 = vmatprep.subr.bf16.mxu0 0
  %3610 = vmatpush2.bf16.msra.mxu0 0
  %3611 = vmatprep.subr.bf16.mxu0 0
  %3612 = vmatpush2.bf16.msra.mxu0 0
  %3613 = vmatprep.subr.bf16.mxu0 0
  %3614 = vmatpush2.bf16.msra.mxu0 0
  %3615 = vmatprep.subr.bf16.mxu0 0
  %3616 = vmatpush2.bf16.msra.mxu0 0
  %3617 = vmatprep.mubr.bf16.mxu0 0
  %3618 = vmatmul.mubr.bf16.gmra.mxu0 %v3530
  %v3619 = vpop.f32.mrf.mxu0
  %v3620 = vadd.f32 0.0, %v3619
  %v3621 = vpop.f32.mrf.mxu0
  %v3622 = vadd.f32 0.0, %v3621
  %v3623 = vpop.f32.mrf.mxu0
  %v3624 = vpop.f32.mrf.mxu0
  %3625 = vdwg.mxu0
  %v3626 = vadd.f32 %v3503, %v3579
  %v3627 = vadd.f32 %v3504, %v3581
  %v3628 = vadd.f32 %v3505, %v3620
  %v3629 = vadd.f32 %v3506, %v3622
  %3630 = vrot.lane.b32.xlu0 %v2790, 112
  %v3631 = vpop.permute.xlu0 %3630
  %3632 = vrot.lane.b32.xlu0 %v2791, 112
  %v3633 = vpop.permute.xlu0 %3632
  %3634 = vrot.lane.b32.xlu0 %v2792, 112
  %v3635 = vpop.permute.xlu0 %3634
  %3636 = vrot.lane.b32.xlu0 %v2793, 112
  %v3637 = vpop.permute.xlu0 %3636
  %v3638 = vsel %vm1397, %v3635, %v3637
  %v3639 = vsel %vm1397, %v3633, %v3635
  %v3640 = vsel %vm1397, %v3631, %v3633
  %v3641 = vsel %vm1397, %v3637, %v3631
  %v3642 = vmul.f32 %v3640, %v1405
  %v3643 = vmul.f32 %v3639, %v1409
  %v3644 = vmul.f32 %v3638, %v1413
  %v3645 = vmul.f32 %v3641, %v1417
  %s3646 = scalar_lea.vmem %s8, 14
  %v3647 = vld [vmem:[%s3646] sm:$0x3]
  %v3648 = vpack.c.bf16 %v3642, %v3642
  %v3649 = vpack.c.bf16 %v3643, %v3643
  %v3650 = vpack.c.bf16 %v3644, %v3644
  %v3651 = vpack.c.bf16 %v3645, %v3645
  %v3653 = vsel %vm66, %v3647, 0
  %v3656 = vsel %vm70, %v3648, 0
  %v3659 = vsel %vm70, %v3649, 0
  %v3662 = vsel %vm70, %v3650, 0
  %v3665 = vsel %vm70, %v3651, 0
  %3667 = vmatprep.subr.bf16.mxu0 0
  %3668 = vmatpush1.bf16.msra.mxu0 0
  %3669 = vmatprep.subr.bf16.mxu0 0
  %3670 = vmatpush1.bf16.msra.mxu0 0
  %3671 = vmatprep.subr.bf16.mxu0 0
  %3672 = vmatpush1.bf16.msra.mxu0 0
  %3673 = vmatprep.subr.bf16.mxu0 0
  %3674 = vmatpush1.bf16.msra.mxu0 0
  %3675 = vmatprep.subr.bf16.mxu0 0
  %3676 = vmatpush1.bf16.msra.mxu0 0
  %3677 = vmatprep.subr.bf16.mxu0 0
  %3678 = vmatpush1.bf16.msra.mxu0 0
  %3679 = vmatprep.subr.bf16.mxu0 0
  %3680 = vmatpush1.bf16.msra.mxu0 0
  %3681 = vmatprep.subr.bf16.mxu0 %v3659
  %3682 = vmatpush1.bf16.msra.mxu0 %v3656
  %3683 = vmatprep.subr.bf16.mxu0 0
  %3684 = vmatpush2.bf16.msra.mxu0 0
  %3685 = vmatprep.subr.bf16.mxu0 0
  %3686 = vmatpush2.bf16.msra.mxu0 0
  %3687 = vmatprep.subr.bf16.mxu0 0
  %3688 = vmatpush2.bf16.msra.mxu0 0
  %3689 = vmatprep.subr.bf16.mxu0 0
  %3690 = vmatpush2.bf16.msra.mxu0 0
  %3691 = vmatprep.subr.bf16.mxu0 0
  %3692 = vmatpush2.bf16.msra.mxu0 0
  %3693 = vmatprep.subr.bf16.mxu0 0
  %3694 = vmatpush2.bf16.msra.mxu0 0
  %3695 = vmatprep.subr.bf16.mxu0 0
  %3696 = vmatpush2.bf16.msra.mxu0 0
  %3697 = vmatprep.subr.bf16.mxu0 0
  %3698 = vmatpush2.bf16.msra.mxu0 0
  %3699 = vmatprep.mubr.bf16.mxu0 0
  %3700 = vmatmul.mubr.bf16.gmra.mxu0 %v3653
  %v3701 = vpop.f32.mrf.mxu0
  %v3702 = vadd.f32 0.0, %v3701
  %v3703 = vpop.f32.mrf.mxu0
  %v3704 = vadd.f32 0.0, %v3703
  %v3705 = vpop.f32.mrf.mxu0
  %v3706 = vpop.f32.mrf.mxu0
  %3707 = vdwg.mxu0
  %3708 = vmatprep.subr.bf16.mxu0 0
  %3709 = vmatpush1.bf16.msra.mxu0 0
  %3710 = vmatprep.subr.bf16.mxu0 0
  %3711 = vmatpush1.bf16.msra.mxu0 0
  %3712 = vmatprep.subr.bf16.mxu0 0
  %3713 = vmatpush1.bf16.msra.mxu0 0
  %3714 = vmatprep.subr.bf16.mxu0 0
  %3715 = vmatpush1.bf16.msra.mxu0 0
  %3716 = vmatprep.subr.bf16.mxu0 0
  %3717 = vmatpush1.bf16.msra.mxu0 0
  %3718 = vmatprep.subr.bf16.mxu0 0
  %3719 = vmatpush1.bf16.msra.mxu0 0
  %3720 = vmatprep.subr.bf16.mxu0 0
  %3721 = vmatpush1.bf16.msra.mxu0 0
  %3722 = vmatprep.subr.bf16.mxu0 %v3665
  %3723 = vmatpush1.bf16.msra.mxu0 %v3662
  %3724 = vmatprep.subr.bf16.mxu0 0
  %3725 = vmatpush2.bf16.msra.mxu0 0
  %3726 = vmatprep.subr.bf16.mxu0 0
  %3727 = vmatpush2.bf16.msra.mxu0 0
  %3728 = vmatprep.subr.bf16.mxu0 0
  %3729 = vmatpush2.bf16.msra.mxu0 0
  %3730 = vmatprep.subr.bf16.mxu0 0
  %3731 = vmatpush2.bf16.msra.mxu0 0
  %3732 = vmatprep.subr.bf16.mxu0 0
  %3733 = vmatpush2.bf16.msra.mxu0 0
  %3734 = vmatprep.subr.bf16.mxu0 0
  %3735 = vmatpush2.bf16.msra.mxu0 0
  %3736 = vmatprep.subr.bf16.mxu0 0
  %3737 = vmatpush2.bf16.msra.mxu0 0
  %3738 = vmatprep.subr.bf16.mxu0 0
  %3739 = vmatpush2.bf16.msra.mxu0 0
  %3740 = vmatprep.mubr.bf16.mxu0 0
  %3741 = vmatmul.mubr.bf16.gmra.mxu0 %v3653
  %v3742 = vpop.f32.mrf.mxu0
  %v3743 = vadd.f32 0.0, %v3742
  %v3744 = vpop.f32.mrf.mxu0
  %v3745 = vadd.f32 0.0, %v3744
  %v3746 = vpop.f32.mrf.mxu0
  %v3747 = vpop.f32.mrf.mxu0
  %3748 = vdwg.mxu0
  %v3749 = vadd.f32 %v3626, %v3702
  %v3750 = vadd.f32 %v3627, %v3704
  %v3751 = vadd.f32 %v3628, %v3743
  %v3752 = vadd.f32 %v3629, %v3745
  %3753 = vrot.lane.b32.xlu0 %v2790, 111
  %v3754 = vpop.permute.xlu0 %3753
  %3755 = vrot.lane.b32.xlu0 %v2791, 111
  %v3756 = vpop.permute.xlu0 %3755
  %3757 = vrot.lane.b32.xlu0 %v2792, 111
  %v3758 = vpop.permute.xlu0 %3757
  %3759 = vrot.lane.b32.xlu0 %v2793, 111
  %v3760 = vpop.permute.xlu0 %3759
  %v3761 = vsel %vm1537, %v3758, %v3760
  %v3762 = vsel %vm1537, %v3756, %v3758
  %v3763 = vsel %vm1537, %v3754, %v3756
  %v3764 = vsel %vm1537, %v3760, %v3754
  %v3765 = vmul.f32 %v3763, %v1545
  %v3766 = vmul.f32 %v3762, %v1549
  %v3767 = vmul.f32 %v3761, %v1553
  %v3768 = vmul.f32 %v3764, %v1557
  %s3769 = scalar_lea.vmem %s8, 16
  %v3770 = vld [vmem:[%s3769] sm:$0x3]
  %v3771 = vpack.c.bf16 %v3765, %v3765
  %v3772 = vpack.c.bf16 %v3766, %v3766
  %v3773 = vpack.c.bf16 %v3767, %v3767
  %v3774 = vpack.c.bf16 %v3768, %v3768
  %v3776 = vsel %vm66, %v3770, 0
  %v3779 = vsel %vm70, %v3771, 0
  %v3782 = vsel %vm70, %v3772, 0
  %v3785 = vsel %vm70, %v3773, 0
  %v3788 = vsel %vm70, %v3774, 0
  %3790 = vmatprep.subr.bf16.mxu0 0
  %3791 = vmatpush1.bf16.msra.mxu0 0
  %3792 = vmatprep.subr.bf16.mxu0 0
  %3793 = vmatpush1.bf16.msra.mxu0 0
  %3794 = vmatprep.subr.bf16.mxu0 0
  %3795 = vmatpush1.bf16.msra.mxu0 0
  %3796 = vmatprep.subr.bf16.mxu0 0
  %3797 = vmatpush1.bf16.msra.mxu0 0
  %3798 = vmatprep.subr.bf16.mxu0 0
  %3799 = vmatpush1.bf16.msra.mxu0 0
  %3800 = vmatprep.subr.bf16.mxu0 0
  %3801 = vmatpush1.bf16.msra.mxu0 0
  %3802 = vmatprep.subr.bf16.mxu0 0
  %3803 = vmatpush1.bf16.msra.mxu0 0
  %3804 = vmatprep.subr.bf16.mxu0 %v3782
  %3805 = vmatpush1.bf16.msra.mxu0 %v3779
  %3806 = vmatprep.subr.bf16.mxu0 0
  %3807 = vmatpush2.bf16.msra.mxu0 0
  %3808 = vmatprep.subr.bf16.mxu0 0
  %3809 = vmatpush2.bf16.msra.mxu0 0
  %3810 = vmatprep.subr.bf16.mxu0 0
  %3811 = vmatpush2.bf16.msra.mxu0 0
  %3812 = vmatprep.subr.bf16.mxu0 0
  %3813 = vmatpush2.bf16.msra.mxu0 0
  %3814 = vmatprep.subr.bf16.mxu0 0
  %3815 = vmatpush2.bf16.msra.mxu0 0
  %3816 = vmatprep.subr.bf16.mxu0 0
  %3817 = vmatpush2.bf16.msra.mxu0 0
  %3818 = vmatprep.subr.bf16.mxu0 0
  %3819 = vmatpush2.bf16.msra.mxu0 0
  %3820 = vmatprep.subr.bf16.mxu0 0
  %3821 = vmatpush2.bf16.msra.mxu0 0
  %3822 = vmatprep.mubr.bf16.mxu0 0
  %3823 = vmatmul.mubr.bf16.gmra.mxu0 %v3776
  %v3824 = vpop.f32.mrf.mxu0
  %v3825 = vadd.f32 0.0, %v3824
  %v3826 = vpop.f32.mrf.mxu0
  %v3827 = vadd.f32 0.0, %v3826
  %v3828 = vpop.f32.mrf.mxu0
  %v3829 = vpop.f32.mrf.mxu0
  %3830 = vdwg.mxu0
  %3831 = vmatprep.subr.bf16.mxu0 0
  %3832 = vmatpush1.bf16.msra.mxu0 0
  %3833 = vmatprep.subr.bf16.mxu0 0
  %3834 = vmatpush1.bf16.msra.mxu0 0
  %3835 = vmatprep.subr.bf16.mxu0 0
  %3836 = vmatpush1.bf16.msra.mxu0 0
  %3837 = vmatprep.subr.bf16.mxu0 0
  %3838 = vmatpush1.bf16.msra.mxu0 0
  %3839 = vmatprep.subr.bf16.mxu0 0
  %3840 = vmatpush1.bf16.msra.mxu0 0
  %3841 = vmatprep.subr.bf16.mxu0 0
  %3842 = vmatpush1.bf16.msra.mxu0 0
  %3843 = vmatprep.subr.bf16.mxu0 0
  %3844 = vmatpush1.bf16.msra.mxu0 0
  %3845 = vmatprep.subr.bf16.mxu0 %v3788
  %3846 = vmatpush1.bf16.msra.mxu0 %v3785
  %3847 = vmatprep.subr.bf16.mxu0 0
  %3848 = vmatpush2.bf16.msra.mxu0 0
  %3849 = vmatprep.subr.bf16.mxu0 0
  %3850 = vmatpush2.bf16.msra.mxu0 0
  %3851 = vmatprep.subr.bf16.mxu0 0
  %3852 = vmatpush2.bf16.msra.mxu0 0
  %3853 = vmatprep.subr.bf16.mxu0 0
  %3854 = vmatpush2.bf16.msra.mxu0 0
  %3855 = vmatprep.subr.bf16.mxu0 0
  %3856 = vmatpush2.bf16.msra.mxu0 0
  %3857 = vmatprep.subr.bf16.mxu0 0
  %3858 = vmatpush2.bf16.msra.mxu0 0
  %3859 = vmatprep.subr.bf16.mxu0 0
  %3860 = vmatpush2.bf16.msra.mxu0 0
  %3861 = vmatprep.subr.bf16.mxu0 0
  %3862 = vmatpush2.bf16.msra.mxu0 0
  %3863 = vmatprep.mubr.bf16.mxu0 0
  %3864 = vmatmul.mubr.bf16.gmra.mxu0 %v3776
  %v3865 = vpop.f32.mrf.mxu0
  %v3866 = vadd.f32 0.0, %v3865
  %v3867 = vpop.f32.mrf.mxu0
  %v3868 = vadd.f32 0.0, %v3867
  %v3869 = vpop.f32.mrf.mxu0
  %v3870 = vpop.f32.mrf.mxu0
  %3871 = vdwg.mxu0
  %v3872 = vadd.f32 %v3749, %v3825
  %v3873 = vadd.f32 %v3750, %v3827
  %v3874 = vadd.f32 %v3751, %v3866
  %v3875 = vadd.f32 %v3752, %v3868
  %v3876 = vsel %vm2743, %v3872, 0.0
  %v3877 = vsel %vm2743, %v3873, 0.0
  %v3878 = vadd.f32 %v3876, %v3877
  %v3879 = vsel %vm2743, %v3874, 0.0
  %v3880 = vadd.f32 %v3878, %v3879
  %v3881 = vsel %vm2743, %v3875, 0.0
  %v3882 = vadd.f32 %v3880, %v3881
  %3883 = vadd.xlane.f32.xlu0 %v3882
  %v3884 = vpop.xlane.xlu0 %3883
  %v3885 = vmul.f32 %v3884, 0.001953125
  %v3886 = vsub.f32 %v3872, %v3885
  %v3887 = vsub.f32 %v3873, %v3885
  %v3888 = vsub.f32 %v3874, %v3885
  %v3889 = vsub.f32 %v3875, %v3885
  %v3890 = vmul.f32 %v3886, %v3886
  %v3891 = vmul.f32 %v3887, %v3887
  %v3892 = vmul.f32 %v3888, %v3888
  %v3893 = vmul.f32 %v3889, %v3889
  %v3894 = vsel %vm2743, %v3890, 0.0
  %v3895 = vsel %vm2743, %v3891, 0.0
  %v3896 = vadd.f32 %v3894, %v3895
  %v3897 = vsel %vm2743, %v3892, 0.0
  %v3898 = vadd.f32 %v3896, %v3897
  %v3899 = vsel %vm2743, %v3893, 0.0
  %v3900 = vadd.f32 %v3898, %v3899
  %3901 = vadd.xlane.f32.xlu0 %v3900
  %v3902 = vpop.xlane.xlu0 %3901
  %v3903 = vmul.f32 %v3902, 0.001953125
  %v3904 = vadd.f32 %v3903, 1e-05
  %v3905 = vrsqrt.pop %v3904
  %v3906 = vmul.f32 %v3886, %v3905
  %v3907 = vmul.f32 %v3887, %v3905
  %v3908 = vmul.f32 %v3888, %v3905
  %v3909 = vmul.f32 %v3889, %v3905
  %v3910 = vmax.f32 %v3906, 0.0
  %v3911 = vmax.f32 %v3907, 0.0
  %v3912 = vmax.f32 %v3908, 0.0
  %v3913 = vmax.f32 %v3909, 0.0
  %v3918 = vcombine.low %v3910, %v3911
  %v3919 = vcombine.low %v3912, %v3913
  %3922 = vst [vmem:[%s10] sm:$0xff] %v3918
  %3923 = vst [vmem:[%s10 + $0x8] sm:$0xff] %v3919
  // Predicated region
  $region42: #{_lambda_.3} parent=0 // pred_check
    _
  $region43: #{_lambda_.3} parent=0 // pred_check_branch
    %3925 = sbr.rel (0) target = $region45
  $region44: #{_lambda_.3} parent=0 // pred_region
    _
  $region45: #{_lambda_.3} parent=0 // pred_fallthru
    _
  // Predicated region
  $region46: #{_lambda_.3} parent=0 // pred_check
    _
  $region47: #{_lambda_.3} parent=0 // pred_check_branch
    %3927 = sbr.rel (0) target = $region49
  $region48: #{_lambda_.3} parent=0 // pred_region
    _
  $region49: #{_lambda_.3} parent=0 // pred_fallthru
    _

</llo_original>
